<compile_context>
chip_gen: v7x
topology: tpu7x:2x2x1
jax: 0.10.0
libtpu: 0.0.40
codegen_flags: <defaults>
</compile_context>

<pallas_src>
import jax
import jax.numpy as jnp
from jax.experimental import pallas as pl

# ---------------- model config (matches the PyTorch module) -------------------
IMAGE_SIZE = 16
PATCH_SIZE = 8
NUM_CLASSES = 10
DIM = 32
DEPTH = 2
HEADS = 4
DIM_HEAD = 8
MLP_DIM = 64
CHANNELS = 4
BATCH = 2

NUM_PATCHES = (IMAGE_SIZE // PATCH_SIZE) ** 2          # 4
PATCH_DIM = CHANNELS * PATCH_SIZE * PATCH_SIZE         # 256
SEQ = NUM_PATCHES + 1                                  # 5 (cls token)
TOKENS = BATCH * SEQ                                   # 10 rows (flattened B*S)
INNER = HEADS * DIM_HEAD                               # 32
HT = HEADS * TOKENS                                    # 40 (head-stacked rows)
HEAD_HID = 2 * NUM_CLASSES                             # 20
LN_EPS = 1e-5
ATTN_SCALE = DIM_HEAD ** (-0.5)
LANE = 128                                             # lane-dense output width
NEG = -1e30                                            # additive mask value
_INV_SQRT2 = 0.7071067811865476

# ---------------- packed-slab layout -------------------------------------------
# vector slab: (VEC_ROWS, 256) f32, one DMA
VEC_W = 256
V_PE_LN0_G, V_PE_LN0_B, V_PE_B, V_PE_LN1_G, V_PE_LN1_B, V_CLS_POS = 0, 1, 2, 3, 4, 5
V_POS_PAT = 6                                          # BATCH*NUM_PATCHES rows
V_LAYER = V_POS_PAT + BATCH * NUM_PATCHES              # 14
VL_ALN_G, VL_ALN_B, VL_BO, VL_FLN_G, VL_FLN_B, VL_B1, VL_B2 = range(7)
V_LAYER_STRIDE = 7
V_FIN_G = V_LAYER + DEPTH * V_LAYER_STRIDE             # 28
V_FIN_B = V_FIN_G + 1                                  # 29
V_HB1 = V_FIN_B + 1                                    # 30
V_HB2 = V_HB1 + 1                                      # 31
VEC_ROWS = V_HB2 + 1                                   # 32

# matrix slab: (MAT_ROWS_PAD, 128) f32, one DMA
MAT_W = 128
M_PE_W = 0                                             # (PATCH_DIM, DIM)
M_LAYER = PATCH_DIM                                    # 256
ML_QKV = 0                                             # (DIM, 3*INNER)  q-cols pre-scaled
ML_WO = ML_QKV + DIM                                   # (DIM_HEAD, HEADS*DIM)  "wide" Wout
ML_W1 = ML_WO + DIM_HEAD                               # (DIM, MLP_DIM)
ML_W2 = ML_W1 + DIM                                    # (MLP_DIM, DIM)
M_LAYER_STRIDE = ML_W2 + MLP_DIM                       # 136
M_HW1 = M_LAYER + DEPTH * M_LAYER_STRIDE               # 528  (DIM, HEAD_HID)
M_HW2 = M_HW1 + DIM                                    # 560  (HEAD_HID, LANE)
MAT_ROWS = M_HW2 + HEAD_HID                            # 580
MAT_ROWS_PAD = ((MAT_ROWS + 7) // 8) * 8               # 584


# ---------------- in-kernel math helpers ----------------------------------------
def _layernorm(x, g, b):
    # PyTorch nn.LayerNorm: biased variance, eps inside rsqrt.
    mu = jnp.mean(x, axis=-1, keepdims=True)
    var = jnp.mean(jnp.square(x - mu), axis=-1, keepdims=True)
    return (x - mu) * jax.lax.rsqrt(var + LN_EPS) * g + b


def _gelu(x):
    # Exact (erf-based) nn.GELU(); erf via Abramowitz & Stegun 7.1.26 (|err|<1.5e-7).
    # Polynomial kept (guaranteed Mosaic lowering); constants folded, exp -> EUP slot.
    y = x * _INV_SQRT2
    ay = jnp.abs(y)
    t = 1.0 / (1.0 + 0.3275911 * ay)      # exact divide keeps GELU close to torch
    poly = ((((1.061405429 * t - 1.453152027) * t + 1.421413741) * t
             - 0.284496736) * t + 0.254829592) * t
    erf_abs = 1.0 - poly * jnp.exp(-y * y)
    erf = jnp.where(y >= 0, erf_abs, -erf_abs)
    return 0.5 * x * (1.0 + erf)


# ---------------- the fused kernel -----------------------------------------------
def vit_kernel(patches_ref, vecs_ref, mats_ref, o_ref):
    def vrow(r, w):                       # one packed vector row, first w lanes
        return vecs_ref[r:r + 1, 0:w]

    # ---- patch embedding: LN(patch_dim) -> Linear(patch_dim, dim) -> LN(dim) ----
    p = patches_ref[...]                                               # (B*N, 256)
    pn = _layernorm(p, vrow(V_PE_LN0_G, PATCH_DIM), vrow(V_PE_LN0_B, PATCH_DIM))
    emb = jnp.dot(pn, mats_ref[M_PE_W:M_PE_W + PATCH_DIM, 0:DIM],
                  preferred_element_type=jnp.float32) + vrow(V_PE_B, DIM)
    emb = _layernorm(emb, vrow(V_PE_LN1_G, DIM), vrow(V_PE_LN1_B, DIM))  # (B*N, 32)

    # ---- tokens: [cls_0, cls_1, patches_0.., patches_1..], pos already arranged ----
    cls_rows = jnp.broadcast_to(vrow(V_CLS_POS, DIM), (BATCH, DIM))      # cls + pos[0]
    pos_pat = vecs_ref[V_POS_PAT:V_POS_PAT + BATCH * NUM_PATCHES, 0:DIM]  # tiled pos[1:]
    x = jnp.concatenate([cls_rows, emb + pos_pat], axis=0)               # (TOKENS, DIM)

    # ---- additive mask for the head-stacked (H*T, H*T) scores (built in-kernel) ----
    # valid (0.0) iff same head AND same image; else NEG.  Division-free (staircases).
    ri = jax.lax.broadcasted_iota(jnp.int32, (HT, HT), 0)
    ci = jax.lax.broadcasted_iota(jnp.int32, (HT, HT), 1)

    def group_id(idx):
        head = jnp.zeros_like(idx)
        for hh in range(1, HEADS):
            head = head + jnp.where(idx >= hh * TOKENS, 1, 0)
        tok = idx - head * TOKENS
        img_p = jnp.zeros_like(tok)
        for bb in range(1, BATCH):
            img_p = img_p + jnp.where(tok >= BATCH + bb * NUM_PATCHES, 1, 0)
        img = jnp.where(tok < BATCH, tok, img_p)      # cls rows 0..B-1 map to themselves
        return head * BATCH + img

    bias = jnp.where(group_id(ri) == group_id(ci), 0.0, NEG)

    # ---- transformer encoder, DEPTH unrolled ----
    for l in range(DEPTH):
        vb = V_LAYER + l * V_LAYER_STRIDE
        mb = M_LAYER + l * M_LAYER_STRIDE

        # --- pre-norm multi-head self-attention + residual ---
        xn = _layernorm(x, vrow(vb + VL_ALN_G, DIM), vrow(vb + VL_ALN_B, DIM))
        qkv = jnp.dot(xn, mats_ref[mb + ML_QKV:mb + ML_QKV + DIM, 0:3 * INNER],
                      preferred_element_type=jnp.float32)              # (T, 96); q pre-scaled
        # heads -> sublanes: (H*T, DIM_HEAD)
        q_s = jnp.concatenate(
            [qkv[:, h * DIM_HEAD:(h + 1) * DIM_HEAD] for h in range(HEADS)], axis=0)
        k_s = jnp.concatenate(
            [qkv[:, INNER + h * DIM_HEAD:INNER + (h + 1) * DIM_HEAD]
             for h in range(HEADS)], axis=0)
        v_s = jnp.concatenate(
            [qkv[:, 2 * INNER + h * DIM_HEAD:2 * INNER + (h + 1) * DIM_HEAD]
             for h in range(HEADS)], axis=0)

        dots = jnp.einsum('nd,md->nm', q_s, k_s,
                          preferred_element_type=jnp.float32) + bias   # (H*T, H*T)
        m = jnp.max(dots, axis=-1, keepdims=True)
        e = jnp.exp(dots - m)
        attn = e * pl.reciprocal(jnp.sum(e, axis=-1, keepdims=True), approx=True)
        oh_s = jnp.dot(attn, v_s, preferred_element_type=jnp.float32)  # (H*T, dh)

        # out-projection: one wide matmul + diagonal-block sum (== concat-heads @ Wout)
        proj = jnp.dot(oh_s,
                       mats_ref[mb + ML_WO:mb + ML_WO + DIM_HEAD, 0:HEADS * DIM],
                       preferred_element_type=jnp.float32)             # (H*T, H*DIM)
        att_out = proj[0:TOKENS, 0:DIM]
        for h in range(1, HEADS):
            att_out = att_out + proj[h * TOKENS:(h + 1) * TOKENS, h * DIM:(h + 1) * DIM]
        x = att_out + vrow(vb + VL_BO, DIM) + x

        # --- pre-norm MLP (Linear -> GELU -> Linear) + residual ---
        xn = _layernorm(x, vrow(vb + VL_FLN_G, DIM), vrow(vb + VL_FLN_B, DIM))
        h1 = _gelu(jnp.dot(xn, mats_ref[mb + ML_W1:mb + ML_W1 + DIM, 0:MLP_DIM],
                           preferred_element_type=jnp.float32) + vrow(vb + VL_B1, MLP_DIM))
        x = jnp.dot(h1, mats_ref[mb + ML_W2:mb + ML_W2 + MLP_DIM, 0:DIM],
                    preferred_element_type=jnp.float32) + vrow(vb + VL_B2, DIM) + x

    # ---- cls pooling (contiguous x[:B]) + final LN + MLP head, (B, 128) store ----
    xc = _layernorm(x[0:BATCH, :], vrow(V_FIN_G, DIM), vrow(V_FIN_B, DIM))
    hh = _gelu(jnp.dot(xc, mats_ref[M_HW1:M_HW1 + DIM, 0:HEAD_HID],
                       preferred_element_type=jnp.float32) + vrow(V_HB1, HEAD_HID))
    o_ref[...] = (jnp.dot(hh, mats_ref[M_HW2:M_HW2 + HEAD_HID, 0:LANE],
                          preferred_element_type=jnp.float32) + vrow(V_HB2, LANE))


# ---------------- parameters (canonical layout, matches the torch module) --------
def init_params(key):
    keys = iter(jax.random.split(key, 64))

    def nrm(shape, scale=0.02):
        return scale * jax.random.normal(next(keys), shape, jnp.float32)

    p = {
        "pe_ln0_g": jnp.ones((1, PATCH_DIM), jnp.float32),
        "pe_ln0_b": jnp.zeros((1, PATCH_DIM), jnp.float32),
        "pe_w": nrm((PATCH_DIM, DIM)),
        "pe_b": nrm((1, DIM)),
        "pe_ln1_g": jnp.ones((1, DIM), jnp.float32),
        "pe_ln1_b": jnp.zeros((1, DIM), jnp.float32),
        "pos": jax.random.uniform(next(keys), (1, NUM_PATCHES + 1, DIM), jnp.float32),
        "cls": jax.random.uniform(next(keys), (1, 1, DIM), jnp.float32),
        "final_ln_g": jnp.ones((1, DIM), jnp.float32),
        "final_ln_b": jnp.zeros((1, DIM), jnp.float32),
        "head_w1": nrm((DIM, HEAD_HID)),
        "head_b1": nrm((1, HEAD_HID)),
        "head_w2": nrm((HEAD_HID, NUM_CLASSES)),
        "head_b2": nrm((1, NUM_CLASSES)),
    }
    layers = []
    for _ in range(DEPTH):
        layers.append(dict(
            attn_ln_g=jnp.ones((1, DIM), jnp.float32),
            attn_ln_b=jnp.zeros((1, DIM), jnp.float32),
            w_qkv=nrm((DIM, 3 * INNER)),            # to_qkv (no bias), [q|k|v] columns
            w_out=nrm((INNER, DIM)),                # rows in (head, dim_head) order
            b_out=nrm((1, DIM)),
            ff_ln_g=jnp.ones((1, DIM), jnp.float32),
            ff_ln_b=jnp.zeros((1, DIM), jnp.float32),
            w1=nrm((DIM, MLP_DIM)),
            b1=nrm((1, MLP_DIM)),
            w2=nrm((MLP_DIM, DIM)),
            b2=nrm((1, DIM)),
        ))
    p["layers"] = layers
    return p


# ---------------- one-time host-side weight repacking into two slabs -------------
def prepare_inputs(params):
    L = params["layers"]

    # ----- vector slab: every 1-row gain/bias + cls/pos rows -> one (32, 256) DMA -----
    def vpad(v):
        v = jnp.asarray(v, jnp.float32).reshape(1, -1)
        return jnp.pad(v, ((0, 0), (0, VEC_W - v.shape[1])))

    rows = [vpad(params["pe_ln0_g"]), vpad(params["pe_ln0_b"]), vpad(params["pe_b"]),
            vpad(params["pe_ln1_g"]), vpad(params["pe_ln1_b"]),
            vpad(params["cls"][0, 0] + params["pos"][0, 0])]        # cls + pos[0] pre-added
    pos_pat = jnp.tile(params["pos"][0, 1:1 + NUM_PATCHES], (BATCH, 1))   # (B*N, DIM)
    rows.append(jnp.pad(pos_pat, ((0, 0), (0, VEC_W - DIM))))
    for l in L:
        rows += [vpad(l["attn_ln_g"]), vpad(l["attn_ln_b"]), vpad(l["b_out"]),
                 vpad(l["ff_ln_g"]), vpad(l["ff_ln_b"]), vpad(l["b1"]), vpad(l["b2"])]
    hb2 = jnp.zeros((1, LANE), jnp.float32).at[:, :NUM_CLASSES].set(params["head_b2"])
    rows += [vpad(params["final_ln_g"]), vpad(params["final_ln_b"]),
             vpad(params["head_b1"]), vpad(hb2)]
    vecs = jnp.concatenate(rows, axis=0)
    assert vecs.shape == (VEC_ROWS, VEC_W)

    # ----- matrix slab: every weight matrix -> one (584, 128) DMA -----
    def mpad(m):
        m = jnp.asarray(m, jnp.float32)
        return jnp.pad(m, ((0, 0), (0, MAT_W - m.shape[1])))

    blocks = [mpad(params["pe_w"])]
    for l in L:
        w_qkv = l["w_qkv"].at[:, :INNER].multiply(ATTN_SCALE)   # fold softmax scale into Wq
        w_out_wide = jnp.concatenate(                           # (DIM_HEAD, HEADS*DIM)
            [l["w_out"][h * DIM_HEAD:(h + 1) * DIM_HEAD, :] for h in range(HEADS)], axis=1)
        blocks += [mpad(w_qkv), mpad(w_out_wide), mpad(l["w1"]), mpad(l["w2"])]
    hw2 = jnp.zeros((HEAD_HID, LANE), jnp.float32).at[:, :NUM_CLASSES].set(params["head_w2"])
    blocks += [mpad(params["head_w1"]), mpad(hw2)]
    mats = jnp.concatenate(blocks, axis=0)
    assert mats.shape == (MAT_ROWS, MAT_W)
    mats = jnp.pad(mats, ((0, MAT_ROWS_PAD - MAT_ROWS), (0, 0)))
    return vecs, mats


# ---------------- forward pass -----------------------------------------------------
def vit_forward(vecs, mats, img):
    b, c, hh, ww = img.shape
    assert (b, c, hh, ww) == (BATCH, CHANNELS, IMAGE_SIZE, IMAGE_SIZE)
    gh, gw = hh // PATCH_SIZE, ww // PATCH_SIZE

    # einops 'b c (h p1) (w p2) -> (b h w) (p1 p2 c)'  (host-side, 8 KiB of data)
    xp = img.reshape(b, c, gh, PATCH_SIZE, gw, PATCH_SIZE)
    xp = jnp.transpose(xp, (0, 2, 4, 3, 5, 1))
    patches = xp.reshape(b * gh * gw, PATCH_SIZE * PATCH_SIZE * c)

    # Single fused pallas_call; grid=() -> every array is one full VMEM block.
    logits_pad = pl.pallas_call(
        vit_kernel,
        out_shape=jax.ShapeDtypeStruct((BATCH, LANE), jnp.float32),
    )(patches, vecs, mats)

    return logits_pad[:, :NUM_CLASSES]                 # (B, num_classes)


if __name__ == "__main__":
    key = jax.random.PRNGKey(0)
    pkey, xkey = jax.random.split(key)
    params = init_params(pkey)
    vecs, mats = prepare_inputs(params)
    img = jax.random.normal(xkey, (BATCH, CHANNELS, IMAGE_SIZE, IMAGE_SIZE), jnp.float32)

    logits = jax.jit(vit_forward)(vecs, mats, img)
    logits = jax.block_until_ready(logits)
    assert logits.shape == (BATCH, NUM_CLASSES)
    print("KERNEL_OK")
</pallas_src>

<mosaic_0001>
module attributes {stable_mosaic.version = 11 : i64} {
  func.func @vit_kernel(%arg0: memref<8x256xf32, #tpu.memory_space<vmem>>, %arg1: memref<32x256xf32, #tpu.memory_space<vmem>>, %arg2: memref<584x128xf32, #tpu.memory_space<vmem>>, %arg3: memref<2x128xf32, #tpu.memory_space<vmem>>) attributes {dimension_semantics = [], scalar_prefetch = 0 : i64, scratch_operands = 0 : i64, tpu.core_type = #tpu.core_type<tc>} {
    %c0 = arith.constant 0 : index
    %c0_0 = arith.constant 0 : index
    %0 = vector.load %arg0[%c0, %c0_0] : memref<8x256xf32, #tpu.memory_space<vmem>>, vector<8x256xf32>
    %c0_1 = arith.constant 0 : index
    %c0_2 = arith.constant 0 : index
    %1 = vector.load %arg1[%c0_1, %c0_2] : memref<32x256xf32, #tpu.memory_space<vmem>>, vector<1x256xf32>
    %c1 = arith.constant 1 : index
    %c0_3 = arith.constant 0 : index
    %2 = vector.load %arg1[%c1, %c0_3] : memref<32x256xf32, #tpu.memory_space<vmem>>, vector<1x256xf32>
    %cst = arith.constant dense<0.000000e+00> : vector<8xf32>
    %3 = vector.multi_reduction <add>, %0, %cst [1] : vector<8x256xf32> to vector<8xf32>
    %4 = vector.shape_cast %3 : vector<8xf32> to vector<8x1xf32>
    %cst_4 = arith.constant 2.560000e+02 : f32
    %5 = vector.broadcast %cst_4 : f32 to vector<8x1xf32>
    %6 = arith.divf %4, %5 : vector<8x1xf32>
    %7 = vector.broadcast %6 : vector<8x1xf32> to vector<8x256xf32>
    %8 = arith.subf %0, %7 : vector<8x256xf32>
    %9 = arith.mulf %8, %8 : vector<8x256xf32>
    %cst_5 = arith.constant dense<0.000000e+00> : vector<8xf32>
    %10 = vector.multi_reduction <add>, %9, %cst_5 [1] : vector<8x256xf32> to vector<8xf32>
    %11 = vector.shape_cast %10 : vector<8xf32> to vector<8x1xf32>
    %cst_6 = arith.constant 2.560000e+02 : f32
    %12 = vector.broadcast %cst_6 : f32 to vector<8x1xf32>
    %13 = arith.divf %11, %12 : vector<8x1xf32>
    %14 = vector.broadcast %6 : vector<8x1xf32> to vector<8x256xf32>
    %15 = arith.subf %0, %14 : vector<8x256xf32>
    %cst_7 = arith.constant 9.99999974E-6 : f32
    %16 = vector.broadcast %cst_7 : f32 to vector<8x1xf32>
    %17 = arith.addf %13, %16 : vector<8x1xf32>
    %18 = math.rsqrt %17 : vector<8x1xf32>
    %19 = vector.broadcast %18 : vector<8x1xf32> to vector<8x256xf32>
    %20 = arith.mulf %15, %19 : vector<8x256xf32>
    %21 = vector.broadcast %1 : vector<1x256xf32> to vector<8x256xf32>
    %22 = arith.mulf %20, %21 : vector<8x256xf32>
    %23 = vector.broadcast %2 : vector<1x256xf32> to vector<8x256xf32>
    %24 = arith.addf %22, %23 : vector<8x256xf32>
    %c0_8 = arith.constant 0 : index
    %c0_9 = arith.constant 0 : index
    %25 = vector.load %arg2[%c0_8, %c0_9] : memref<584x128xf32, #tpu.memory_space<vmem>>, vector<256x32xf32>
    %cst_10 = arith.constant dense<0.000000e+00> : vector<8x32xf32>
    %26 = tpu.matmul %24, %25, %cst_10 {dimension_numbers = #tpu.dot_dimension_numbers<[1], [0], [0], [1], [0, 0, 1, 1], [], []>} : vector<8x256xf32>, vector<256x32xf32>, vector<8x32xf32> -> vector<8x32xf32>
    %c2 = arith.constant 2 : index
    %c0_11 = arith.constant 0 : index
    %27 = vector.load %arg1[%c2, %c0_11] : memref<32x256xf32, #tpu.memory_space<vmem>>, vector<1x32xf32>
    %28 = vector.broadcast %27 : vector<1x32xf32> to vector<8x32xf32>
    %29 = arith.addf %26, %28 : vector<8x32xf32>
    %c3 = arith.constant 3 : index
    %c0_12 = arith.constant 0 : index
    %30 = vector.load %arg1[%c3, %c0_12] : memref<32x256xf32, #tpu.memory_space<vmem>>, vector<1x32xf32>
    %c4 = arith.constant 4 : index
    %c0_13 = arith.constant 0 : index
    %31 = vector.load %arg1[%c4, %c0_13] : memref<32x256xf32, #tpu.memory_space<vmem>>, vector<1x32xf32>
    %cst_14 = arith.constant dense<0.000000e+00> : vector<8xf32>
    %32 = vector.multi_reduction <add>, %29, %cst_14 [1] : vector<8x32xf32> to vector<8xf32>
    %33 = vector.shape_cast %32 : vector<8xf32> to vector<8x1xf32>
    %cst_15 = arith.constant 3.200000e+01 : f32
    %34 = vector.broadcast %cst_15 : f32 to vector<8x1xf32>
    %35 = arith.divf %33, %34 : vector<8x1xf32>
    %36 = vector.broadcast %35 : vector<8x1xf32> to vector<8x32xf32>
    %37 = arith.subf %29, %36 : vector<8x32xf32>
    %38 = arith.mulf %37, %37 : vector<8x32xf32>
    %cst_16 = arith.constant dense<0.000000e+00> : vector<8xf32>
    %39 = vector.multi_reduction <add>, %38, %cst_16 [1] : vector<8x32xf32> to vector<8xf32>
    %40 = vector.shape_cast %39 : vector<8xf32> to vector<8x1xf32>
    %cst_17 = arith.constant 3.200000e+01 : f32
    %41 = vector.broadcast %cst_17 : f32 to vector<8x1xf32>
    %42 = arith.divf %40, %41 : vector<8x1xf32>
    %43 = vector.broadcast %35 : vector<8x1xf32> to vector<8x32xf32>
    %44 = arith.subf %29, %43 : vector<8x32xf32>
    %cst_18 = arith.constant 9.99999974E-6 : f32
    %45 = vector.broadcast %cst_18 : f32 to vector<8x1xf32>
    %46 = arith.addf %42, %45 : vector<8x1xf32>
    %47 = math.rsqrt %46 : vector<8x1xf32>
    %48 = vector.broadcast %47 : vector<8x1xf32> to vector<8x32xf32>
    %49 = arith.mulf %44, %48 : vector<8x32xf32>
    %50 = vector.broadcast %30 : vector<1x32xf32> to vector<8x32xf32>
    %51 = arith.mulf %49, %50 : vector<8x32xf32>
    %52 = vector.broadcast %31 : vector<1x32xf32> to vector<8x32xf32>
    %53 = arith.addf %51, %52 : vector<8x32xf32>
    %c5 = arith.constant 5 : index
    %c0_19 = arith.constant 0 : index
    %54 = vector.load %arg1[%c5, %c0_19] : memref<32x256xf32, #tpu.memory_space<vmem>>, vector<1x32xf32>
    %55 = vector.shape_cast %54 : vector<1x32xf32> to vector<1x32xf32>
    %56 = vector.broadcast %55 : vector<1x32xf32> to vector<2x32xf32>
    %c6 = arith.constant 6 : index
    %c0_20 = arith.constant 0 : index
    %57 = vector.load %arg1[%c6, %c0_20] : memref<32x256xf32, #tpu.memory_space<vmem>>, vector<8x32xf32>
    %58 = arith.addf %53, %57 : vector<8x32xf32>
    %59 = tpu.concatenate %56, %58 in 0 : vector<2x32xf32>, vector<8x32xf32> -> vector<10x32xf32>
    %60 = tpu.iota {dimensions = array<i32: 0>} : vector<40x40xi32>
    %61 = tpu.iota {dimensions = array<i32: 1>} : vector<40x40xi32>
    %c0_i32 = arith.constant 0 : i32
    %62 = vector.broadcast %c0_i32 : i32 to vector<40x40xi32>
    %c10_i32 = arith.constant 10 : i32
    %63 = vector.broadcast %c10_i32 : i32 to vector<40x40xi32>
    %64 = arith.cmpi sge, %60, %63 : vector<40x40xi32>
    %c1_i32 = arith.constant 1 : i32
    %c0_i32_21 = arith.constant 0 : i32
    %65 = vector.broadcast %c1_i32 : i32 to vector<40x40xi32>
    %66 = vector.broadcast %c0_i32_21 : i32 to vector<40x40xi32>
    %67 = arith.select %64, %65, %66 : vector<40x40xi1>, vector<40x40xi32>
    %68 = arith.addi %62, %67 : vector<40x40xi32>
    %c20_i32 = arith.constant 20 : i32
    %69 = vector.broadcast %c20_i32 : i32 to vector<40x40xi32>
    %70 = arith.cmpi sge, %60, %69 : vector<40x40xi32>
    %c1_i32_22 = arith.constant 1 : i32
    %c0_i32_23 = arith.constant 0 : i32
    %71 = vector.broadcast %c1_i32_22 : i32 to vector<40x40xi32>
    %72 = vector.broadcast %c0_i32_23 : i32 to vector<40x40xi32>
    %73 = arith.select %70, %71, %72 : vector<40x40xi1>, vector<40x40xi32>
    %74 = arith.addi %68, %73 : vector<40x40xi32>
    %c30_i32 = arith.constant 30 : i32
    %75 = vector.broadcast %c30_i32 : i32 to vector<40x40xi32>
    %76 = arith.cmpi sge, %60, %75 : vector<40x40xi32>
    %c1_i32_24 = arith.constant 1 : i32
    %c0_i32_25 = arith.constant 0 : i32
    %77 = vector.broadcast %c1_i32_24 : i32 to vector<40x40xi32>
    %78 = vector.broadcast %c0_i32_25 : i32 to vector<40x40xi32>
    %79 = arith.select %76, %77, %78 : vector<40x40xi1>, vector<40x40xi32>
    %80 = arith.addi %74, %79 : vector<40x40xi32>
    %c10_i32_26 = arith.constant 10 : i32
    %81 = vector.broadcast %c10_i32_26 : i32 to vector<40x40xi32>
    %82 = arith.muli %80, %81 : vector<40x40xi32>
    %83 = arith.subi %60, %82 : vector<40x40xi32>
    %c0_i32_27 = arith.constant 0 : i32
    %84 = vector.broadcast %c0_i32_27 : i32 to vector<40x40xi32>
    %c6_i32 = arith.constant 6 : i32
    %85 = vector.broadcast %c6_i32 : i32 to vector<40x40xi32>
    %86 = arith.cmpi sge, %83, %85 : vector<40x40xi32>
    %c1_i32_28 = arith.constant 1 : i32
    %c0_i32_29 = arith.constant 0 : i32
    %87 = vector.broadcast %c1_i32_28 : i32 to vector<40x40xi32>
    %88 = vector.broadcast %c0_i32_29 : i32 to vector<40x40xi32>
    %89 = arith.select %86, %87, %88 : vector<40x40xi1>, vector<40x40xi32>
    %90 = arith.addi %84, %89 : vector<40x40xi32>
    %c2_i32 = arith.constant 2 : i32
    %91 = vector.broadcast %c2_i32 : i32 to vector<40x40xi32>
    %92 = arith.cmpi slt, %83, %91 : vector<40x40xi32>
    %93 = arith.select %92, %83, %90 : vector<40x40xi1>, vector<40x40xi32>
    %c2_i32_30 = arith.constant 2 : i32
    %94 = vector.broadcast %c2_i32_30 : i32 to vector<40x40xi32>
    %95 = arith.muli %80, %94 : vector<40x40xi32>
    %96 = arith.addi %95, %93 : vector<40x40xi32>
    %c0_i32_31 = arith.constant 0 : i32
    %97 = vector.broadcast %c0_i32_31 : i32 to vector<40x40xi32>
    %c10_i32_32 = arith.constant 10 : i32
    %98 = vector.broadcast %c10_i32_32 : i32 to vector<40x40xi32>
    %99 = arith.cmpi sge, %61, %98 : vector<40x40xi32>
    %c1_i32_33 = arith.constant 1 : i32
    %c0_i32_34 = arith.constant 0 : i32
    %100 = vector.broadcast %c1_i32_33 : i32 to vector<40x40xi32>
    %101 = vector.broadcast %c0_i32_34 : i32 to vector<40x40xi32>
    %102 = arith.select %99, %100, %101 : vector<40x40xi1>, vector<40x40xi32>
    %103 = arith.addi %97, %102 : vector<40x40xi32>
    %c20_i32_35 = arith.constant 20 : i32
    %104 = vector.broadcast %c20_i32_35 : i32 to vector<40x40xi32>
    %105 = arith.cmpi sge, %61, %104 : vector<40x40xi32>
    %c1_i32_36 = arith.constant 1 : i32
    %c0_i32_37 = arith.constant 0 : i32
    %106 = vector.broadcast %c1_i32_36 : i32 to vector<40x40xi32>
    %107 = vector.broadcast %c0_i32_37 : i32 to vector<40x40xi32>
    %108 = arith.select %105, %106, %107 : vector<40x40xi1>, vector<40x40xi32>
    %109 = arith.addi %103, %108 : vector<40x40xi32>
    %c30_i32_38 = arith.constant 30 : i32
    %110 = vector.broadcast %c30_i32_38 : i32 to vector<40x40xi32>
    %111 = arith.cmpi sge, %61, %110 : vector<40x40xi32>
    %c1_i32_39 = arith.constant 1 : i32
    %c0_i32_40 = arith.constant 0 : i32
    %112 = vector.broadcast %c1_i32_39 : i32 to vector<40x40xi32>
    %113 = vector.broadcast %c0_i32_40 : i32 to vector<40x40xi32>
    %114 = arith.select %111, %112, %113 : vector<40x40xi1>, vector<40x40xi32>
    %115 = arith.addi %109, %114 : vector<40x40xi32>
    %c10_i32_41 = arith.constant 10 : i32
    %116 = vector.broadcast %c10_i32_41 : i32 to vector<40x40xi32>
    %117 = arith.muli %115, %116 : vector<40x40xi32>
    %118 = arith.subi %61, %117 : vector<40x40xi32>
    %c0_i32_42 = arith.constant 0 : i32
    %119 = vector.broadcast %c0_i32_42 : i32 to vector<40x40xi32>
    %c6_i32_43 = arith.constant 6 : i32
    %120 = vector.broadcast %c6_i32_43 : i32 to vector<40x40xi32>
    %121 = arith.cmpi sge, %118, %120 : vector<40x40xi32>
    %c1_i32_44 = arith.constant 1 : i32
    %c0_i32_45 = arith.constant 0 : i32
    %122 = vector.broadcast %c1_i32_44 : i32 to vector<40x40xi32>
    %123 = vector.broadcast %c0_i32_45 : i32 to vector<40x40xi32>
    %124 = arith.select %121, %122, %123 : vector<40x40xi1>, vector<40x40xi32>
    %125 = arith.addi %119, %124 : vector<40x40xi32>
    %c2_i32_46 = arith.constant 2 : i32
    %126 = vector.broadcast %c2_i32_46 : i32 to vector<40x40xi32>
    %127 = arith.cmpi slt, %118, %126 : vector<40x40xi32>
    %128 = arith.select %127, %118, %125 : vector<40x40xi1>, vector<40x40xi32>
    %c2_i32_47 = arith.constant 2 : i32
    %129 = vector.broadcast %c2_i32_47 : i32 to vector<40x40xi32>
    %130 = arith.muli %115, %129 : vector<40x40xi32>
    %131 = arith.addi %130, %128 : vector<40x40xi32>
    %132 = arith.cmpi eq, %96, %131 : vector<40x40xi32>
    %cst_48 = arith.constant 0.000000e+00 : f32
    %cst_49 = arith.constant -1.000000e+30 : f32
    %133 = vector.broadcast %cst_48 : f32 to vector<40x40xf32>
    %134 = vector.broadcast %cst_49 : f32 to vector<40x40xf32>
    %135 = arith.select %132, %133, %134 : vector<40x40xi1>, vector<40x40xf32>
    %c14 = arith.constant 14 : index
    %c0_50 = arith.constant 0 : index
    %136 = vector.load %arg1[%c14, %c0_50] : memref<32x256xf32, #tpu.memory_space<vmem>>, vector<1x32xf32>
    %c15 = arith.constant 15 : index
    %c0_51 = arith.constant 0 : index
    %137 = vector.load %arg1[%c15, %c0_51] : memref<32x256xf32, #tpu.memory_space<vmem>>, vector<1x32xf32>
    %cst_52 = arith.constant dense<0.000000e+00> : vector<10xf32>
    %138 = vector.multi_reduction <add>, %59, %cst_52 [1] : vector<10x32xf32> to vector<10xf32>
    %139 = vector.shape_cast %138 : vector<10xf32> to vector<10x1xf32>
    %cst_53 = arith.constant 3.200000e+01 : f32
    %140 = vector.broadcast %cst_53 : f32 to vector<10x1xf32>
    %141 = arith.divf %139, %140 : vector<10x1xf32>
    %142 = vector.broadcast %141 : vector<10x1xf32> to vector<10x32xf32>
    %143 = arith.subf %59, %142 : vector<10x32xf32>
    %144 = arith.mulf %143, %143 : vector<10x32xf32>
    %cst_54 = arith.constant dense<0.000000e+00> : vector<10xf32>
    %145 = vector.multi_reduction <add>, %144, %cst_54 [1] : vector<10x32xf32> to vector<10xf32>
    %146 = vector.shape_cast %145 : vector<10xf32> to vector<10x1xf32>
    %cst_55 = arith.constant 3.200000e+01 : f32
    %147 = vector.broadcast %cst_55 : f32 to vector<10x1xf32>
    %148 = arith.divf %146, %147 : vector<10x1xf32>
    %149 = vector.broadcast %141 : vector<10x1xf32> to vector<10x32xf32>
    %150 = arith.subf %59, %149 : vector<10x32xf32>
    %cst_56 = arith.constant 9.99999974E-6 : f32
    %151 = vector.broadcast %cst_56 : f32 to vector<10x1xf32>
    %152 = arith.addf %148, %151 : vector<10x1xf32>
    %153 = math.rsqrt %152 : vector<10x1xf32>
    %154 = vector.broadcast %153 : vector<10x1xf32> to vector<10x32xf32>
    %155 = arith.mulf %150, %154 : vector<10x32xf32>
    %156 = vector.broadcast %136 : vector<1x32xf32> to vector<10x32xf32>
    %157 = arith.mulf %155, %156 : vector<10x32xf32>
    %158 = vector.broadcast %137 : vector<1x32xf32> to vector<10x32xf32>
    %159 = arith.addf %157, %158 : vector<10x32xf32>
    %c256 = arith.constant 256 : index
    %c0_57 = arith.constant 0 : index
    %160 = vector.load %arg2[%c256, %c0_57] : memref<584x128xf32, #tpu.memory_space<vmem>>, vector<32x96xf32>
    %cst_58 = arith.constant dense<0.000000e+00> : vector<10x96xf32>
    %161 = tpu.matmul %159, %160, %cst_58 {dimension_numbers = #tpu.dot_dimension_numbers<[1], [0], [0], [1], [0, 0, 1, 1], [], []>} : vector<10x32xf32>, vector<32x96xf32>, vector<10x96xf32> -> vector<10x96xf32>
    %162 = vector.extract_strided_slice %161 {offsets = [0, 0], sizes = [10, 8], strides = [1, 1]} : vector<10x96xf32> to vector<10x8xf32>
    %163 = vector.extract_strided_slice %161 {offsets = [0, 8], sizes = [10, 8], strides = [1, 1]} : vector<10x96xf32> to vector<10x8xf32>
    %164 = vector.extract_strided_slice %161 {offsets = [0, 16], sizes = [10, 8], strides = [1, 1]} : vector<10x96xf32> to vector<10x8xf32>
    %165 = vector.extract_strided_slice %161 {offsets = [0, 24], sizes = [10, 8], strides = [1, 1]} : vector<10x96xf32> to vector<10x8xf32>
    %166 = tpu.concatenate %162, %163, %164, %165 in 0 : vector<10x8xf32>, vector<10x8xf32>, vector<10x8xf32>, vector<10x8xf32> -> vector<40x8xf32>
    %167 = vector.extract_strided_slice %161 {offsets = [0, 32], sizes = [10, 8], strides = [1, 1]} : vector<10x96xf32> to vector<10x8xf32>
    %168 = vector.extract_strided_slice %161 {offsets = [0, 40], sizes = [10, 8], strides = [1, 1]} : vector<10x96xf32> to vector<10x8xf32>
    %169 = vector.extract_strided_slice %161 {offsets = [0, 48], sizes = [10, 8], strides = [1, 1]} : vector<10x96xf32> to vector<10x8xf32>
    %170 = vector.extract_strided_slice %161 {offsets = [0, 56], sizes = [10, 8], strides = [1, 1]} : vector<10x96xf32> to vector<10x8xf32>
    %171 = tpu.concatenate %167, %168, %169, %170 in 0 : vector<10x8xf32>, vector<10x8xf32>, vector<10x8xf32>, vector<10x8xf32> -> vector<40x8xf32>
    %172 = vector.extract_strided_slice %161 {offsets = [0, 64], sizes = [10, 8], strides = [1, 1]} : vector<10x96xf32> to vector<10x8xf32>
    %173 = vector.extract_strided_slice %161 {offsets = [0, 72], sizes = [10, 8], strides = [1, 1]} : vector<10x96xf32> to vector<10x8xf32>
    %174 = vector.extract_strided_slice %161 {offsets = [0, 80], sizes = [10, 8], strides = [1, 1]} : vector<10x96xf32> to vector<10x8xf32>
    %175 = vector.extract_strided_slice %161 {offsets = [0, 88], sizes = [10, 8], strides = [1, 1]} : vector<10x96xf32> to vector<10x8xf32>
    %176 = tpu.concatenate %172, %173, %174, %175 in 0 : vector<10x8xf32>, vector<10x8xf32>, vector<10x8xf32>, vector<10x8xf32> -> vector<40x8xf32>
    "tpu.trace_start"() <{level = 10 : i32, message = "nd,md->nm"}> : () -> ()
    %cst_59 = arith.constant dense<0.000000e+00> : vector<40x40xf32>
    %177 = tpu.matmul %166, %171, %cst_59 {dimension_numbers = #tpu.dot_dimension_numbers<[1], [1], [0], [0], [0, 0, 1, 0], [], []>} : vector<40x8xf32>, vector<40x8xf32>, vector<40x40xf32> -> vector<40x40xf32>
    "tpu.trace_stop"() : () -> ()
    %178 = arith.addf %177, %135 : vector<40x40xf32>
    %cst_60 = arith.constant dense<0xFF800000> : vector<40xf32>
    %179 = vector.multi_reduction <maximumf>, %178, %cst_60 [1] : vector<40x40xf32> to vector<40xf32>
    %180 = vector.shape_cast %179 : vector<40xf32> to vector<40x1xf32>
    %181 = vector.broadcast %180 : vector<40x1xf32> to vector<40x40xf32>
    %182 = arith.subf %178, %181 : vector<40x40xf32>
    %183 = math.exp %182 : vector<40x40xf32>
    %cst_61 = arith.constant dense<0.000000e+00> : vector<40xf32>
    %184 = vector.multi_reduction <add>, %183, %cst_61 [1] : vector<40x40xf32> to vector<40xf32>
    %185 = vector.shape_cast %184 : vector<40xf32> to vector<40x1xf32>
    %186 = tpu.reciprocal %185 {approx = true} : vector<40x1xf32> -> vector<40x1xf32>
    %187 = vector.broadcast %186 : vector<40x1xf32> to vector<40x40xf32>
    %188 = arith.mulf %183, %187 : vector<40x40xf32>
    %cst_62 = arith.constant dense<0.000000e+00> : vector<40x8xf32>
    %189 = tpu.matmul %188, %176, %cst_62 {dimension_numbers = #tpu.dot_dimension_numbers<[1], [0], [0], [1], [0, 0, 1, 1], [], []>} : vector<40x40xf32>, vector<40x8xf32>, vector<40x8xf32> -> vector<40x8xf32>
    %c288 = arith.constant 288 : index
    %c0_63 = arith.constant 0 : index
    %190 = vector.load %arg2[%c288, %c0_63] : memref<584x128xf32, #tpu.memory_space<vmem>>, vector<8x128xf32>
    %cst_64 = arith.constant dense<0.000000e+00> : vector<40x128xf32>
    %191 = tpu.matmul %189, %190, %cst_64 {dimension_numbers = #tpu.dot_dimension_numbers<[1], [0], [0], [1], [0, 0, 1, 1], [], []>} : vector<40x8xf32>, vector<8x128xf32>, vector<40x128xf32> -> vector<40x128xf32>
    %192 = vector.extract_strided_slice %191 {offsets = [0, 0], sizes = [10, 32], strides = [1, 1]} : vector<40x128xf32> to vector<10x32xf32>
    %193 = vector.extract_strided_slice %191 {offsets = [10, 32], sizes = [10, 32], strides = [1, 1]} : vector<40x128xf32> to vector<10x32xf32>
    %194 = arith.addf %192, %193 : vector<10x32xf32>
    %195 = vector.extract_strided_slice %191 {offsets = [20, 64], sizes = [10, 32], strides = [1, 1]} : vector<40x128xf32> to vector<10x32xf32>
    %196 = arith.addf %194, %195 : vector<10x32xf32>
    %197 = vector.extract_strided_slice %191 {offsets = [30, 96], sizes = [10, 32], strides = [1, 1]} : vector<40x128xf32> to vector<10x32xf32>
    %198 = arith.addf %196, %197 : vector<10x32xf32>
    %c16 = arith.constant 16 : index
    %c0_65 = arith.constant 0 : index
    %199 = vector.load %arg1[%c16, %c0_65] : memref<32x256xf32, #tpu.memory_space<vmem>>, vector<1x32xf32>
    %200 = vector.broadcast %199 : vector<1x32xf32> to vector<10x32xf32>
    %201 = arith.addf %198, %200 : vector<10x32xf32>
    %202 = arith.addf %201, %59 : vector<10x32xf32>
    %c17 = arith.constant 17 : index
    %c0_66 = arith.constant 0 : index
    %203 = vector.load %arg1[%c17, %c0_66] : memref<32x256xf32, #tpu.memory_space<vmem>>, vector<1x32xf32>
    %c18 = arith.constant 18 : index
    %c0_67 = arith.constant 0 : index
    %204 = vector.load %arg1[%c18, %c0_67] : memref<32x256xf32, #tpu.memory_space<vmem>>, vector<1x32xf32>
    %cst_68 = arith.constant dense<0.000000e+00> : vector<10xf32>
    %205 = vector.multi_reduction <add>, %202, %cst_68 [1] : vector<10x32xf32> to vector<10xf32>
    %206 = vector.shape_cast %205 : vector<10xf32> to vector<10x1xf32>
    %cst_69 = arith.constant 3.200000e+01 : f32
    %207 = vector.broadcast %cst_69 : f32 to vector<10x1xf32>
    %208 = arith.divf %206, %207 : vector<10x1xf32>
    %209 = vector.broadcast %208 : vector<10x1xf32> to vector<10x32xf32>
    %210 = arith.subf %202, %209 : vector<10x32xf32>
    %211 = arith.mulf %210, %210 : vector<10x32xf32>
    %cst_70 = arith.constant dense<0.000000e+00> : vector<10xf32>
    %212 = vector.multi_reduction <add>, %211, %cst_70 [1] : vector<10x32xf32> to vector<10xf32>
    %213 = vector.shape_cast %212 : vector<10xf32> to vector<10x1xf32>
    %cst_71 = arith.constant 3.200000e+01 : f32
    %214 = vector.broadcast %cst_71 : f32 to vector<10x1xf32>
    %215 = arith.divf %213, %214 : vector<10x1xf32>
    %216 = vector.broadcast %208 : vector<10x1xf32> to vector<10x32xf32>
    %217 = arith.subf %202, %216 : vector<10x32xf32>
    %cst_72 = arith.constant 9.99999974E-6 : f32
    %218 = vector.broadcast %cst_72 : f32 to vector<10x1xf32>
    %219 = arith.addf %215, %218 : vector<10x1xf32>
    %220 = math.rsqrt %219 : vector<10x1xf32>
    %221 = vector.broadcast %220 : vector<10x1xf32> to vector<10x32xf32>
    %222 = arith.mulf %217, %221 : vector<10x32xf32>
    %223 = vector.broadcast %203 : vector<1x32xf32> to vector<10x32xf32>
    %224 = arith.mulf %222, %223 : vector<10x32xf32>
    %225 = vector.broadcast %204 : vector<1x32xf32> to vector<10x32xf32>
    %226 = arith.addf %224, %225 : vector<10x32xf32>
    %c296 = arith.constant 296 : index
    %c0_73 = arith.constant 0 : index
    %227 = vector.load %arg2[%c296, %c0_73] : memref<584x128xf32, #tpu.memory_space<vmem>>, vector<32x64xf32>
    %cst_74 = arith.constant dense<0.000000e+00> : vector<10x64xf32>
    %228 = tpu.matmul %226, %227, %cst_74 {dimension_numbers = #tpu.dot_dimension_numbers<[1], [0], [0], [1], [0, 0, 1, 1], [], []>} : vector<10x32xf32>, vector<32x64xf32>, vector<10x64xf32> -> vector<10x64xf32>
    %c19 = arith.constant 19 : index
    %c0_75 = arith.constant 0 : index
    %229 = vector.load %arg1[%c19, %c0_75] : memref<32x256xf32, #tpu.memory_space<vmem>>, vector<1x64xf32>
    %230 = vector.broadcast %229 : vector<1x64xf32> to vector<10x64xf32>
    %231 = arith.addf %228, %230 : vector<10x64xf32>
    %cst_76 = arith.constant 0.707106769 : f32
    %232 = vector.broadcast %cst_76 : f32 to vector<10x64xf32>
    %233 = arith.mulf %231, %232 : vector<10x64xf32>
    %234 = math.absf %233 : vector<10x64xf32>
    %cst_77 = arith.constant 0.327591091 : f32
    %235 = vector.broadcast %cst_77 : f32 to vector<10x64xf32>
    %236 = arith.mulf %235, %234 : vector<10x64xf32>
    %cst_78 = arith.constant 1.000000e+00 : f32
    %237 = vector.broadcast %cst_78 : f32 to vector<10x64xf32>
    %238 = arith.addf %237, %236 : vector<10x64xf32>
    %cst_79 = arith.constant 1.000000e+00 : f32
    %239 = vector.broadcast %cst_79 : f32 to vector<10x64xf32>
    %240 = arith.divf %239, %238 : vector<10x64xf32>
    %cst_80 = arith.constant 1.06140542 : f32
    %241 = vector.broadcast %cst_80 : f32 to vector<10x64xf32>
    %242 = arith.mulf %241, %240 : vector<10x64xf32>
    %cst_81 = arith.constant 1.45315206 : f32
    %243 = vector.broadcast %cst_81 : f32 to vector<10x64xf32>
    %244 = arith.subf %242, %243 : vector<10x64xf32>
    %245 = arith.mulf %244, %240 : vector<10x64xf32>
    %cst_82 = arith.constant 1.42141378 : f32
    %246 = vector.broadcast %cst_82 : f32 to vector<10x64xf32>
    %247 = arith.addf %245, %246 : vector<10x64xf32>
    %248 = arith.mulf %247, %240 : vector<10x64xf32>
    %cst_83 = arith.constant 0.284496725 : f32
    %249 = vector.broadcast %cst_83 : f32 to vector<10x64xf32>
    %250 = arith.subf %248, %249 : vector<10x64xf32>
    %251 = arith.mulf %250, %240 : vector<10x64xf32>
    %cst_84 = arith.constant 0.254829586 : f32
    %252 = vector.broadcast %cst_84 : f32 to vector<10x64xf32>
    %253 = arith.addf %251, %252 : vector<10x64xf32>
    %254 = arith.mulf %253, %240 : vector<10x64xf32>
    %cst_85 = arith.constant 0.000000e+00 : f32
    %255 = vector.broadcast %cst_85 : f32 to vector<10x64xf32>
    %256 = arith.subf %255, %233 : vector<10x64xf32>
    %257 = arith.mulf %256, %233 : vector<10x64xf32>
    %258 = math.exp %257 : vector<10x64xf32>
    %259 = arith.mulf %254, %258 : vector<10x64xf32>
    %cst_86 = arith.constant 1.000000e+00 : f32
    %260 = vector.broadcast %cst_86 : f32 to vector<10x64xf32>
    %261 = arith.subf %260, %259 : vector<10x64xf32>
    %cst_87 = arith.constant 0.000000e+00 : f32
    %262 = vector.broadcast %cst_87 : f32 to vector<10x64xf32>
    %263 = arith.cmpf oge, %233, %262 : vector<10x64xf32>
    %cst_88 = arith.constant 0.000000e+00 : f32
    %264 = vector.broadcast %cst_88 : f32 to vector<10x64xf32>
    %265 = arith.subf %264, %261 : vector<10x64xf32>
    %266 = arith.select %263, %261, %265 : vector<10x64xi1>, vector<10x64xf32>
    %cst_89 = arith.constant 5.000000e-01 : f32
    %267 = vector.broadcast %cst_89 : f32 to vector<10x64xf32>
    %268 = arith.mulf %267, %231 : vector<10x64xf32>
    %cst_90 = arith.constant 1.000000e+00 : f32
    %269 = vector.broadcast %cst_90 : f32 to vector<10x64xf32>
    %270 = arith.addf %269, %266 : vector<10x64xf32>
    %271 = arith.mulf %268, %270 : vector<10x64xf32>
    %c328 = arith.constant 328 : index
    %c0_91 = arith.constant 0 : index
    %272 = vector.load %arg2[%c328, %c0_91] : memref<584x128xf32, #tpu.memory_space<vmem>>, vector<64x32xf32>
    %cst_92 = arith.constant dense<0.000000e+00> : vector<10x32xf32>
    %273 = tpu.matmul %271, %272, %cst_92 {dimension_numbers = #tpu.dot_dimension_numbers<[1], [0], [0], [1], [0, 0, 1, 1], [], []>} : vector<10x64xf32>, vector<64x32xf32>, vector<10x32xf32> -> vector<10x32xf32>
    %c20 = arith.constant 20 : index
    %c0_93 = arith.constant 0 : index
    %274 = vector.load %arg1[%c20, %c0_93] : memref<32x256xf32, #tpu.memory_space<vmem>>, vector<1x32xf32>
    %275 = vector.broadcast %274 : vector<1x32xf32> to vector<10x32xf32>
    %276 = arith.addf %273, %275 : vector<10x32xf32>
    %277 = arith.addf %276, %202 : vector<10x32xf32>
    %c21 = arith.constant 21 : index
    %c0_94 = arith.constant 0 : index
    %278 = vector.load %arg1[%c21, %c0_94] : memref<32x256xf32, #tpu.memory_space<vmem>>, vector<1x32xf32>
    %c22 = arith.constant 22 : index
    %c0_95 = arith.constant 0 : index
    %279 = vector.load %arg1[%c22, %c0_95] : memref<32x256xf32, #tpu.memory_space<vmem>>, vector<1x32xf32>
    %cst_96 = arith.constant dense<0.000000e+00> : vector<10xf32>
    %280 = vector.multi_reduction <add>, %277, %cst_96 [1] : vector<10x32xf32> to vector<10xf32>
    %281 = vector.shape_cast %280 : vector<10xf32> to vector<10x1xf32>
    %cst_97 = arith.constant 3.200000e+01 : f32
    %282 = vector.broadcast %cst_97 : f32 to vector<10x1xf32>
    %283 = arith.divf %281, %282 : vector<10x1xf32>
    %284 = vector.broadcast %283 : vector<10x1xf32> to vector<10x32xf32>
    %285 = arith.subf %277, %284 : vector<10x32xf32>
    %286 = arith.mulf %285, %285 : vector<10x32xf32>
    %cst_98 = arith.constant dense<0.000000e+00> : vector<10xf32>
    %287 = vector.multi_reduction <add>, %286, %cst_98 [1] : vector<10x32xf32> to vector<10xf32>
    %288 = vector.shape_cast %287 : vector<10xf32> to vector<10x1xf32>
    %cst_99 = arith.constant 3.200000e+01 : f32
    %289 = vector.broadcast %cst_99 : f32 to vector<10x1xf32>
    %290 = arith.divf %288, %289 : vector<10x1xf32>
    %291 = vector.broadcast %283 : vector<10x1xf32> to vector<10x32xf32>
    %292 = arith.subf %277, %291 : vector<10x32xf32>
    %cst_100 = arith.constant 9.99999974E-6 : f32
    %293 = vector.broadcast %cst_100 : f32 to vector<10x1xf32>
    %294 = arith.addf %290, %293 : vector<10x1xf32>
    %295 = math.rsqrt %294 : vector<10x1xf32>
    %296 = vector.broadcast %295 : vector<10x1xf32> to vector<10x32xf32>
    %297 = arith.mulf %292, %296 : vector<10x32xf32>
    %298 = vector.broadcast %278 : vector<1x32xf32> to vector<10x32xf32>
    %299 = arith.mulf %297, %298 : vector<10x32xf32>
    %300 = vector.broadcast %279 : vector<1x32xf32> to vector<10x32xf32>
    %301 = arith.addf %299, %300 : vector<10x32xf32>
    %c392 = arith.constant 392 : index
    %c0_101 = arith.constant 0 : index
    %302 = vector.load %arg2[%c392, %c0_101] : memref<584x128xf32, #tpu.memory_space<vmem>>, vector<32x96xf32>
    %cst_102 = arith.constant dense<0.000000e+00> : vector<10x96xf32>
    %303 = tpu.matmul %301, %302, %cst_102 {dimension_numbers = #tpu.dot_dimension_numbers<[1], [0], [0], [1], [0, 0, 1, 1], [], []>} : vector<10x32xf32>, vector<32x96xf32>, vector<10x96xf32> -> vector<10x96xf32>
    %304 = vector.extract_strided_slice %303 {offsets = [0, 0], sizes = [10, 8], strides = [1, 1]} : vector<10x96xf32> to vector<10x8xf32>
    %305 = vector.extract_strided_slice %303 {offsets = [0, 8], sizes = [10, 8], strides = [1, 1]} : vector<10x96xf32> to vector<10x8xf32>
    %306 = vector.extract_strided_slice %303 {offsets = [0, 16], sizes = [10, 8], strides = [1, 1]} : vector<10x96xf32> to vector<10x8xf32>
    %307 = vector.extract_strided_slice %303 {offsets = [0, 24], sizes = [10, 8], strides = [1, 1]} : vector<10x96xf32> to vector<10x8xf32>
    %308 = tpu.concatenate %304, %305, %306, %307 in 0 : vector<10x8xf32>, vector<10x8xf32>, vector<10x8xf32>, vector<10x8xf32> -> vector<40x8xf32>
    %309 = vector.extract_strided_slice %303 {offsets = [0, 32], sizes = [10, 8], strides = [1, 1]} : vector<10x96xf32> to vector<10x8xf32>
    %310 = vector.extract_strided_slice %303 {offsets = [0, 40], sizes = [10, 8], strides = [1, 1]} : vector<10x96xf32> to vector<10x8xf32>
    %311 = vector.extract_strided_slice %303 {offsets = [0, 48], sizes = [10, 8], strides = [1, 1]} : vector<10x96xf32> to vector<10x8xf32>
    %312 = vector.extract_strided_slice %303 {offsets = [0, 56], sizes = [10, 8], strides = [1, 1]} : vector<10x96xf32> to vector<10x8xf32>
    %313 = tpu.concatenate %309, %310, %311, %312 in 0 : vector<10x8xf32>, vector<10x8xf32>, vector<10x8xf32>, vector<10x8xf32> -> vector<40x8xf32>
    %314 = vector.extract_strided_slice %303 {offsets = [0, 64], sizes = [10, 8], strides = [1, 1]} : vector<10x96xf32> to vector<10x8xf32>
    %315 = vector.extract_strided_slice %303 {offsets = [0, 72], sizes = [10, 8], strides = [1, 1]} : vector<10x96xf32> to vector<10x8xf32>
    %316 = vector.extract_strided_slice %303 {offsets = [0, 80], sizes = [10, 8], strides = [1, 1]} : vector<10x96xf32> to vector<10x8xf32>
    %317 = vector.extract_strided_slice %303 {offsets = [0, 88], sizes = [10, 8], strides = [1, 1]} : vector<10x96xf32> to vector<10x8xf32>
    %318 = tpu.concatenate %314, %315, %316, %317 in 0 : vector<10x8xf32>, vector<10x8xf32>, vector<10x8xf32>, vector<10x8xf32> -> vector<40x8xf32>
    "tpu.trace_start"() <{level = 10 : i32, message = "nd,md->nm"}> : () -> ()
    %cst_103 = arith.constant dense<0.000000e+00> : vector<40x40xf32>
    %319 = tpu.matmul %308, %313, %cst_103 {dimension_numbers = #tpu.dot_dimension_numbers<[1], [1], [0], [0], [0, 0, 1, 0], [], []>} : vector<40x8xf32>, vector<40x8xf32>, vector<40x40xf32> -> vector<40x40xf32>
    "tpu.trace_stop"() : () -> ()
    %320 = arith.addf %319, %135 : vector<40x40xf32>
    %cst_104 = arith.constant dense<0xFF800000> : vector<40xf32>
    %321 = vector.multi_reduction <maximumf>, %320, %cst_104 [1] : vector<40x40xf32> to vector<40xf32>
    %322 = vector.shape_cast %321 : vector<40xf32> to vector<40x1xf32>
    %323 = vector.broadcast %322 : vector<40x1xf32> to vector<40x40xf32>
    %324 = arith.subf %320, %323 : vector<40x40xf32>
    %325 = math.exp %324 : vector<40x40xf32>
    %cst_105 = arith.constant dense<0.000000e+00> : vector<40xf32>
    %326 = vector.multi_reduction <add>, %325, %cst_105 [1] : vector<40x40xf32> to vector<40xf32>
    %327 = vector.shape_cast %326 : vector<40xf32> to vector<40x1xf32>
    %328 = tpu.reciprocal %327 {approx = true} : vector<40x1xf32> -> vector<40x1xf32>
    %329 = vector.broadcast %328 : vector<40x1xf32> to vector<40x40xf32>
    %330 = arith.mulf %325, %329 : vector<40x40xf32>
    %cst_106 = arith.constant dense<0.000000e+00> : vector<40x8xf32>
    %331 = tpu.matmul %330, %318, %cst_106 {dimension_numbers = #tpu.dot_dimension_numbers<[1], [0], [0], [1], [0, 0, 1, 1], [], []>} : vector<40x40xf32>, vector<40x8xf32>, vector<40x8xf32> -> vector<40x8xf32>
    %c424 = arith.constant 424 : index
    %c0_107 = arith.constant 0 : index
    %332 = vector.load %arg2[%c424, %c0_107] : memref<584x128xf32, #tpu.memory_space<vmem>>, vector<8x128xf32>
    %cst_108 = arith.constant dense<0.000000e+00> : vector<40x128xf32>
    %333 = tpu.matmul %331, %332, %cst_108 {dimension_numbers = #tpu.dot_dimension_numbers<[1], [0], [0], [1], [0, 0, 1, 1], [], []>} : vector<40x8xf32>, vector<8x128xf32>, vector<40x128xf32> -> vector<40x128xf32>
    %334 = vector.extract_strided_slice %333 {offsets = [0, 0], sizes = [10, 32], strides = [1, 1]} : vector<40x128xf32> to vector<10x32xf32>
    %335 = vector.extract_strided_slice %333 {offsets = [10, 32], sizes = [10, 32], strides = [1, 1]} : vector<40x128xf32> to vector<10x32xf32>
    %336 = arith.addf %334, %335 : vector<10x32xf32>
    %337 = vector.extract_strided_slice %333 {offsets = [20, 64], sizes = [10, 32], strides = [1, 1]} : vector<40x128xf32> to vector<10x32xf32>
    %338 = arith.addf %336, %337 : vector<10x32xf32>
    %339 = vector.extract_strided_slice %333 {offsets = [30, 96], sizes = [10, 32], strides = [1, 1]} : vector<40x128xf32> to vector<10x32xf32>
    %340 = arith.addf %338, %339 : vector<10x32xf32>
    %c23 = arith.constant 23 : index
    %c0_109 = arith.constant 0 : index
    %341 = vector.load %arg1[%c23, %c0_109] : memref<32x256xf32, #tpu.memory_space<vmem>>, vector<1x32xf32>
    %342 = vector.broadcast %341 : vector<1x32xf32> to vector<10x32xf32>
    %343 = arith.addf %340, %342 : vector<10x32xf32>
    %344 = arith.addf %343, %277 : vector<10x32xf32>
    %c24 = arith.constant 24 : index
    %c0_110 = arith.constant 0 : index
    %345 = vector.load %arg1[%c24, %c0_110] : memref<32x256xf32, #tpu.memory_space<vmem>>, vector<1x32xf32>
    %c25 = arith.constant 25 : index
    %c0_111 = arith.constant 0 : index
    %346 = vector.load %arg1[%c25, %c0_111] : memref<32x256xf32, #tpu.memory_space<vmem>>, vector<1x32xf32>
    %cst_112 = arith.constant dense<0.000000e+00> : vector<10xf32>
    %347 = vector.multi_reduction <add>, %344, %cst_112 [1] : vector<10x32xf32> to vector<10xf32>
    %348 = vector.shape_cast %347 : vector<10xf32> to vector<10x1xf32>
    %cst_113 = arith.constant 3.200000e+01 : f32
    %349 = vector.broadcast %cst_113 : f32 to vector<10x1xf32>
    %350 = arith.divf %348, %349 : vector<10x1xf32>
    %351 = vector.broadcast %350 : vector<10x1xf32> to vector<10x32xf32>
    %352 = arith.subf %344, %351 : vector<10x32xf32>
    %353 = arith.mulf %352, %352 : vector<10x32xf32>
    %cst_114 = arith.constant dense<0.000000e+00> : vector<10xf32>
    %354 = vector.multi_reduction <add>, %353, %cst_114 [1] : vector<10x32xf32> to vector<10xf32>
    %355 = vector.shape_cast %354 : vector<10xf32> to vector<10x1xf32>
    %cst_115 = arith.constant 3.200000e+01 : f32
    %356 = vector.broadcast %cst_115 : f32 to vector<10x1xf32>
    %357 = arith.divf %355, %356 : vector<10x1xf32>
    %358 = vector.broadcast %350 : vector<10x1xf32> to vector<10x32xf32>
    %359 = arith.subf %344, %358 : vector<10x32xf32>
    %cst_116 = arith.constant 9.99999974E-6 : f32
    %360 = vector.broadcast %cst_116 : f32 to vector<10x1xf32>
    %361 = arith.addf %357, %360 : vector<10x1xf32>
    %362 = math.rsqrt %361 : vector<10x1xf32>
    %363 = vector.broadcast %362 : vector<10x1xf32> to vector<10x32xf32>
    %364 = arith.mulf %359, %363 : vector<10x32xf32>
    %365 = vector.broadcast %345 : vector<1x32xf32> to vector<10x32xf32>
    %366 = arith.mulf %364, %365 : vector<10x32xf32>
    %367 = vector.broadcast %346 : vector<1x32xf32> to vector<10x32xf32>
    %368 = arith.addf %366, %367 : vector<10x32xf32>
    %c432 = arith.constant 432 : index
    %c0_117 = arith.constant 0 : index
    %369 = vector.load %arg2[%c432, %c0_117] : memref<584x128xf32, #tpu.memory_space<vmem>>, vector<32x64xf32>
    %cst_118 = arith.constant dense<0.000000e+00> : vector<10x64xf32>
    %370 = tpu.matmul %368, %369, %cst_118 {dimension_numbers = #tpu.dot_dimension_numbers<[1], [0], [0], [1], [0, 0, 1, 1], [], []>} : vector<10x32xf32>, vector<32x64xf32>, vector<10x64xf32> -> vector<10x64xf32>
    %c26 = arith.constant 26 : index
    %c0_119 = arith.constant 0 : index
    %371 = vector.load %arg1[%c26, %c0_119] : memref<32x256xf32, #tpu.memory_space<vmem>>, vector<1x64xf32>
    %372 = vector.broadcast %371 : vector<1x64xf32> to vector<10x64xf32>
    %373 = arith.addf %370, %372 : vector<10x64xf32>
    %cst_120 = arith.constant 0.707106769 : f32
    %374 = vector.broadcast %cst_120 : f32 to vector<10x64xf32>
    %375 = arith.mulf %373, %374 : vector<10x64xf32>
    %376 = math.absf %375 : vector<10x64xf32>
    %cst_121 = arith.constant 0.327591091 : f32
    %377 = vector.broadcast %cst_121 : f32 to vector<10x64xf32>
    %378 = arith.mulf %377, %376 : vector<10x64xf32>
    %cst_122 = arith.constant 1.000000e+00 : f32
    %379 = vector.broadcast %cst_122 : f32 to vector<10x64xf32>
    %380 = arith.addf %379, %378 : vector<10x64xf32>
    %cst_123 = arith.constant 1.000000e+00 : f32
    %381 = vector.broadcast %cst_123 : f32 to vector<10x64xf32>
    %382 = arith.divf %381, %380 : vector<10x64xf32>
    %cst_124 = arith.constant 1.06140542 : f32
    %383 = vector.broadcast %cst_124 : f32 to vector<10x64xf32>
    %384 = arith.mulf %383, %382 : vector<10x64xf32>
    %cst_125 = arith.constant 1.45315206 : f32
    %385 = vector.broadcast %cst_125 : f32 to vector<10x64xf32>
    %386 = arith.subf %384, %385 : vector<10x64xf32>
    %387 = arith.mulf %386, %382 : vector<10x64xf32>
    %cst_126 = arith.constant 1.42141378 : f32
    %388 = vector.broadcast %cst_126 : f32 to vector<10x64xf32>
    %389 = arith.addf %387, %388 : vector<10x64xf32>
    %390 = arith.mulf %389, %382 : vector<10x64xf32>
    %cst_127 = arith.constant 0.284496725 : f32
    %391 = vector.broadcast %cst_127 : f32 to vector<10x64xf32>
    %392 = arith.subf %390, %391 : vector<10x64xf32>
    %393 = arith.mulf %392, %382 : vector<10x64xf32>
    %cst_128 = arith.constant 0.254829586 : f32
    %394 = vector.broadcast %cst_128 : f32 to vector<10x64xf32>
    %395 = arith.addf %393, %394 : vector<10x64xf32>
    %396 = arith.mulf %395, %382 : vector<10x64xf32>
    %cst_129 = arith.constant 0.000000e+00 : f32
    %397 = vector.broadcast %cst_129 : f32 to vector<10x64xf32>
    %398 = arith.subf %397, %375 : vector<10x64xf32>
    %399 = arith.mulf %398, %375 : vector<10x64xf32>
    %400 = math.exp %399 : vector<10x64xf32>
    %401 = arith.mulf %396, %400 : vector<10x64xf32>
    %cst_130 = arith.constant 1.000000e+00 : f32
    %402 = vector.broadcast %cst_130 : f32 to vector<10x64xf32>
    %403 = arith.subf %402, %401 : vector<10x64xf32>
    %cst_131 = arith.constant 0.000000e+00 : f32
    %404 = vector.broadcast %cst_131 : f32 to vector<10x64xf32>
    %405 = arith.cmpf oge, %375, %404 : vector<10x64xf32>
    %cst_132 = arith.constant 0.000000e+00 : f32
    %406 = vector.broadcast %cst_132 : f32 to vector<10x64xf32>
    %407 = arith.subf %406, %403 : vector<10x64xf32>
    %408 = arith.select %405, %403, %407 : vector<10x64xi1>, vector<10x64xf32>
    %cst_133 = arith.constant 5.000000e-01 : f32
    %409 = vector.broadcast %cst_133 : f32 to vector<10x64xf32>
    %410 = arith.mulf %409, %373 : vector<10x64xf32>
    %cst_134 = arith.constant 1.000000e+00 : f32
    %411 = vector.broadcast %cst_134 : f32 to vector<10x64xf32>
    %412 = arith.addf %411, %408 : vector<10x64xf32>
    %413 = arith.mulf %410, %412 : vector<10x64xf32>
    %c464 = arith.constant 464 : index
    %c0_135 = arith.constant 0 : index
    %414 = vector.load %arg2[%c464, %c0_135] : memref<584x128xf32, #tpu.memory_space<vmem>>, vector<64x32xf32>
    %cst_136 = arith.constant dense<0.000000e+00> : vector<10x32xf32>
    %415 = tpu.matmul %413, %414, %cst_136 {dimension_numbers = #tpu.dot_dimension_numbers<[1], [0], [0], [1], [0, 0, 1, 1], [], []>} : vector<10x64xf32>, vector<64x32xf32>, vector<10x32xf32> -> vector<10x32xf32>
    %c27 = arith.constant 27 : index
    %c0_137 = arith.constant 0 : index
    %416 = vector.load %arg1[%c27, %c0_137] : memref<32x256xf32, #tpu.memory_space<vmem>>, vector<1x32xf32>
    %417 = vector.broadcast %416 : vector<1x32xf32> to vector<10x32xf32>
    %418 = arith.addf %415, %417 : vector<10x32xf32>
    %419 = arith.addf %418, %344 : vector<10x32xf32>
    %420 = vector.extract_strided_slice %419 {offsets = [0, 0], sizes = [2, 32], strides = [1, 1]} : vector<10x32xf32> to vector<2x32xf32>
    %c28 = arith.constant 28 : index
    %c0_138 = arith.constant 0 : index
    %421 = vector.load %arg1[%c28, %c0_138] : memref<32x256xf32, #tpu.memory_space<vmem>>, vector<1x32xf32>
    %c29 = arith.constant 29 : index
    %c0_139 = arith.constant 0 : index
    %422 = vector.load %arg1[%c29, %c0_139] : memref<32x256xf32, #tpu.memory_space<vmem>>, vector<1x32xf32>
    %cst_140 = arith.constant dense<0.000000e+00> : vector<2xf32>
    %423 = vector.multi_reduction <add>, %420, %cst_140 [1] : vector<2x32xf32> to vector<2xf32>
    %424 = vector.shape_cast %423 : vector<2xf32> to vector<2x1xf32>
    %cst_141 = arith.constant 3.200000e+01 : f32
    %425 = vector.broadcast %cst_141 : f32 to vector<2x1xf32>
    %426 = arith.divf %424, %425 : vector<2x1xf32>
    %427 = vector.broadcast %426 : vector<2x1xf32> to vector<2x32xf32>
    %428 = arith.subf %420, %427 : vector<2x32xf32>
    %429 = arith.mulf %428, %428 : vector<2x32xf32>
    %cst_142 = arith.constant dense<0.000000e+00> : vector<2xf32>
    %430 = vector.multi_reduction <add>, %429, %cst_142 [1] : vector<2x32xf32> to vector<2xf32>
    %431 = vector.shape_cast %430 : vector<2xf32> to vector<2x1xf32>
    %cst_143 = arith.constant 3.200000e+01 : f32
    %432 = vector.broadcast %cst_143 : f32 to vector<2x1xf32>
    %433 = arith.divf %431, %432 : vector<2x1xf32>
    %434 = vector.broadcast %426 : vector<2x1xf32> to vector<2x32xf32>
    %435 = arith.subf %420, %434 : vector<2x32xf32>
    %cst_144 = arith.constant 9.99999974E-6 : f32
    %436 = vector.broadcast %cst_144 : f32 to vector<2x1xf32>
    %437 = arith.addf %433, %436 : vector<2x1xf32>
    %438 = math.rsqrt %437 : vector<2x1xf32>
    %439 = vector.broadcast %438 : vector<2x1xf32> to vector<2x32xf32>
    %440 = arith.mulf %435, %439 : vector<2x32xf32>
    %441 = vector.broadcast %421 : vector<1x32xf32> to vector<2x32xf32>
    %442 = arith.mulf %440, %441 : vector<2x32xf32>
    %443 = vector.broadcast %422 : vector<1x32xf32> to vector<2x32xf32>
    %444 = arith.addf %442, %443 : vector<2x32xf32>
    %c528 = arith.constant 528 : index
    %c0_145 = arith.constant 0 : index
    %445 = vector.load %arg2[%c528, %c0_145] : memref<584x128xf32, #tpu.memory_space<vmem>>, vector<32x20xf32>
    %cst_146 = arith.constant dense<0.000000e+00> : vector<2x20xf32>
    %446 = tpu.matmul %444, %445, %cst_146 {dimension_numbers = #tpu.dot_dimension_numbers<[1], [0], [0], [1], [0, 0, 1, 1], [], []>} : vector<2x32xf32>, vector<32x20xf32>, vector<2x20xf32> -> vector<2x20xf32>
    %c30 = arith.constant 30 : index
    %c0_147 = arith.constant 0 : index
    %447 = vector.load %arg1[%c30, %c0_147] : memref<32x256xf32, #tpu.memory_space<vmem>>, vector<1x20xf32>
    %448 = vector.broadcast %447 : vector<1x20xf32> to vector<2x20xf32>
    %449 = arith.addf %446, %448 : vector<2x20xf32>
    %cst_148 = arith.constant 0.707106769 : f32
    %450 = vector.broadcast %cst_148 : f32 to vector<2x20xf32>
    %451 = arith.mulf %449, %450 : vector<2x20xf32>
    %452 = math.absf %451 : vector<2x20xf32>
    %cst_149 = arith.constant 0.327591091 : f32
    %453 = vector.broadcast %cst_149 : f32 to vector<2x20xf32>
    %454 = arith.mulf %453, %452 : vector<2x20xf32>
    %cst_150 = arith.constant 1.000000e+00 : f32
    %455 = vector.broadcast %cst_150 : f32 to vector<2x20xf32>
    %456 = arith.addf %455, %454 : vector<2x20xf32>
    %cst_151 = arith.constant 1.000000e+00 : f32
    %457 = vector.broadcast %cst_151 : f32 to vector<2x20xf32>
    %458 = arith.divf %457, %456 : vector<2x20xf32>
    %cst_152 = arith.constant 1.06140542 : f32
    %459 = vector.broadcast %cst_152 : f32 to vector<2x20xf32>
    %460 = arith.mulf %459, %458 : vector<2x20xf32>
    %cst_153 = arith.constant 1.45315206 : f32
    %461 = vector.broadcast %cst_153 : f32 to vector<2x20xf32>
    %462 = arith.subf %460, %461 : vector<2x20xf32>
    %463 = arith.mulf %462, %458 : vector<2x20xf32>
    %cst_154 = arith.constant 1.42141378 : f32
    %464 = vector.broadcast %cst_154 : f32 to vector<2x20xf32>
    %465 = arith.addf %463, %464 : vector<2x20xf32>
    %466 = arith.mulf %465, %458 : vector<2x20xf32>
    %cst_155 = arith.constant 0.284496725 : f32
    %467 = vector.broadcast %cst_155 : f32 to vector<2x20xf32>
    %468 = arith.subf %466, %467 : vector<2x20xf32>
    %469 = arith.mulf %468, %458 : vector<2x20xf32>
    %cst_156 = arith.constant 0.254829586 : f32
    %470 = vector.broadcast %cst_156 : f32 to vector<2x20xf32>
    %471 = arith.addf %469, %470 : vector<2x20xf32>
    %472 = arith.mulf %471, %458 : vector<2x20xf32>
    %cst_157 = arith.constant 0.000000e+00 : f32
    %473 = vector.broadcast %cst_157 : f32 to vector<2x20xf32>
    %474 = arith.subf %473, %451 : vector<2x20xf32>
    %475 = arith.mulf %474, %451 : vector<2x20xf32>
    %476 = math.exp %475 : vector<2x20xf32>
    %477 = arith.mulf %472, %476 : vector<2x20xf32>
    %cst_158 = arith.constant 1.000000e+00 : f32
    %478 = vector.broadcast %cst_158 : f32 to vector<2x20xf32>
    %479 = arith.subf %478, %477 : vector<2x20xf32>
    %cst_159 = arith.constant 0.000000e+00 : f32
    %480 = vector.broadcast %cst_159 : f32 to vector<2x20xf32>
    %481 = arith.cmpf oge, %451, %480 : vector<2x20xf32>
    %cst_160 = arith.constant 0.000000e+00 : f32
    %482 = vector.broadcast %cst_160 : f32 to vector<2x20xf32>
    %483 = arith.subf %482, %479 : vector<2x20xf32>
    %484 = arith.select %481, %479, %483 : vector<2x20xi1>, vector<2x20xf32>
    %cst_161 = arith.constant 5.000000e-01 : f32
    %485 = vector.broadcast %cst_161 : f32 to vector<2x20xf32>
    %486 = arith.mulf %485, %449 : vector<2x20xf32>
    %cst_162 = arith.constant 1.000000e+00 : f32
    %487 = vector.broadcast %cst_162 : f32 to vector<2x20xf32>
    %488 = arith.addf %487, %484 : vector<2x20xf32>
    %489 = arith.mulf %486, %488 : vector<2x20xf32>
    %c560 = arith.constant 560 : index
    %c0_163 = arith.constant 0 : index
    %490 = vector.load %arg2[%c560, %c0_163] : memref<584x128xf32, #tpu.memory_space<vmem>>, vector<20x128xf32>
    %cst_164 = arith.constant dense<0.000000e+00> : vector<2x128xf32>
    %491 = tpu.matmul %489, %490, %cst_164 {dimension_numbers = #tpu.dot_dimension_numbers<[1], [0], [0], [1], [0, 0, 1, 1], [], []>} : vector<2x20xf32>, vector<20x128xf32>, vector<2x128xf32> -> vector<2x128xf32>
    %c31 = arith.constant 31 : index
    %c0_165 = arith.constant 0 : index
    %492 = vector.load %arg1[%c31, %c0_165] : memref<32x256xf32, #tpu.memory_space<vmem>>, vector<1x128xf32>
    %493 = vector.broadcast %492 : vector<1x128xf32> to vector<2x128xf32>
    %494 = arith.addf %491, %493 : vector<2x128xf32>
    %c0_166 = arith.constant 0 : index
    %c0_167 = arith.constant 0 : index
    %495 = vector.load %arg3[%c0_166, %c0_167] : memref<2x128xf32, #tpu.memory_space<vmem>>, vector<2x128xf32>
    tpu.vector_store %arg3[%c0_166, %c0_167], %494 {strides = array<i32>} : memref<2x128xf32, #tpu.memory_space<vmem>>, vector<2x128xf32>,
    return
  }
}

</mosaic_0001>

<llo_original>
// kernel: vit_forward.1
$region0: #{vit_forward.1}
  #allocation0 [shape = 'u32[]', space=smem, size = 0x4, offset = 0x4, fixed_abs, tag = 'smem constant byte address 0x4 - core index']
  #allocation1 [shape = 'u32[144,128]{1,0:T(1,128)}', space=vmem, size = 0x12000, scoped, tag = 'internal scratch']
  %s0 = inlined_call_operand.vmem [shape: f32[8,256], index: 0, kind: input, shape index: {}]
  %s1 = inlined_call_operand.vmem [shape: f32[32,256], index: 1, kind: input, shape index: {}]
  %s2 = inlined_call_operand.vmem [shape: f32[584,128], index: 2, kind: input, shape index: {}]
  %s3 = inlined_call_operand.hbm [shape: f32[2,128], index: 3, kind: output, shape index: {}]
  %s4 = sld [smem:[#allocation0]]
  $region22: #{vit_forward.1} parent=0
    _
  %s6 = ssub.s32 1, %s4
  %s7 = scalar_select 0, %s6, %s4
  $region1: #{vit_forward.1} parent=0
    #allocation2 [shape = 'u8[1024]{0}', space=vmem, size = 0x400, scoped, tag = 'output window, operand 0, single buffered']
    #allocation3 [shape = 's32[1]{0}', space=sflag, size = 0x4, scoped, tag = 'scoped memory for vit_forward.1']
    %8 = vsyncpa [#allocation3], 0
    // Predicated region
    $region2: #{vit_forward.1} parent=1 // pred_check
      _
    $region3: #{vit_forward.1} parent=1 // pred_check_branch
      %10 = sbr.rel (0) target = $region5
    $region4: #{vit_forward.1} parent=1 // pred_region
      _
    $region5: #{vit_forward.1} parent=1 // pred_fallthru
      _
    // Predicated region
    $region6: #{vit_forward.1} parent=1 // pred_check
      _
    $region7: #{vit_forward.1} parent=1 // pred_check_branch
      %12 = sbr.rel (0) target = $region9
    $region8: #{vit_forward.1} parent=1 // pred_region
      _
    $region9: #{vit_forward.1} parent=1 // pred_fallthru
      _
    // Predicated region
    $region10: #{vit_forward.1} parent=1 // pred_check
      _
    $region11: #{vit_forward.1} parent=1 // pred_check_branch
      %14 = sbr.rel (0) target = $region13
    $region12: #{vit_forward.1} parent=1 // pred_region
      _
    $region13: #{vit_forward.1} parent=1 // pred_fallthru
      _
    %v15 = vld [vmem:[%s0] sm:$0xff]
    %v16 = vld [vmem:[%s0 + $0x8] sm:$0xff]
    %v17 = vld [vmem:[%s1] ss:$8 sm:$0x3]
    %s18 = scalar_lea.vmem %s1, 1
    %v19 = vld [vmem:[%s18] ss:$8 sm:$0x3]
    %v20 = vadd.f32 %v15, %v16
    %21 = vadd.xlane.f32.xlu0 %v20
    %v22 = vpop.xlane.xlu0 %21
    %v23 = vrcp.pop 256.0
    %v24 = vmul.f32 %v22, %v23
    %v25 = vsub.f32 %v15, %v24
    %v26 = vsub.f32 %v16, %v24
    %v27 = vmul.f32 %v25, %v25
    %v28 = vmul.f32 %v26, %v26
    %v29 = vadd.f32 %v27, %v28
    %30 = vadd.xlane.f32.xlu0 %v29
    %v31 = vpop.xlane.xlu0 %30
    %v32 = vmul.f32 %v31, %v23
    %v33 = vadd.f32 %v32, 1e-05
    %v34 = vrsqrt.pop %v33
    %v35 = vmul.f32 %v25, %v34
    %v36 = vmul.f32 %v26, %v34
    %v38 = vlaneseq
    %v39 = vshrl.u32 %v38, 7
    %v40 = vsub.s32 0, %v39
    %v41 = vrot.slane %v17, %v40
    %v42 = vlaneseq
    %v43 = vshrl.u32 %v42, 7
    %v44 = vsub.s32 1, %v43
    %v45 = vrot.slane %v17, %v44
    %v48 = vmul.f32 %v35, %v41
    %v49 = vmul.f32 %v36, %v45
    %v51 = vlaneseq
    %v52 = vshrl.u32 %v51, 7
    %v53 = vsub.s32 0, %v52
    %v54 = vrot.slane %v19, %v53
    %v55 = vlaneseq
    %v56 = vshrl.u32 %v55, 7
    %v57 = vsub.s32 1, %v56
    %v58 = vrot.slane %v19, %v57
    %v61 = vadd.f32 %v48, %v54
    %v62 = vadd.f32 %v49, %v58
    %v63 = vld [vmem:[%s2] sm:$0xff]
    %v64 = vld [vmem:[%s2 + $0x8] sm:$0xff]
    %v65 = vld [vmem:[%s2 + $0x10] sm:$0xff]
    %v66 = vld [vmem:[%s2 + $0x18] sm:$0xff]
    %v67 = vld [vmem:[%s2 + $0x20] sm:$0xff]
    %v68 = vld [vmem:[%s2 + $0x28] sm:$0xff]
    %v69 = vld [vmem:[%s2 + $0x30] sm:$0xff]
    %v70 = vld [vmem:[%s2 + $0x38] sm:$0xff]
    %v71 = vld [vmem:[%s2 + $0x40] sm:$0xff]
    %v72 = vld [vmem:[%s2 + $0x48] sm:$0xff]
    %v73 = vld [vmem:[%s2 + $0x50] sm:$0xff]
    %v74 = vld [vmem:[%s2 + $0x58] sm:$0xff]
    %v75 = vld [vmem:[%s2 + $0x60] sm:$0xff]
    %v76 = vld [vmem:[%s2 + $0x68] sm:$0xff]
    %v77 = vld [vmem:[%s2 + $0x70] sm:$0xff]
    %v78 = vld [vmem:[%s2 + $0x78] sm:$0xff]
    %v79 = vld [vmem:[%s2 + $0x80] sm:$0xff]
    %v80 = vld [vmem:[%s2 + $0x88] sm:$0xff]
    %v81 = vld [vmem:[%s2 + $0x90] sm:$0xff]
    %v82 = vld [vmem:[%s2 + $0x98] sm:$0xff]
    %v83 = vld [vmem:[%s2 + $0xa0] sm:$0xff]
    %v84 = vld [vmem:[%s2 + $0xa8] sm:$0xff]
    %v85 = vld [vmem:[%s2 + $0xb0] sm:$0xff]
    %v86 = vld [vmem:[%s2 + $0xb8] sm:$0xff]
    %v87 = vld [vmem:[%s2 + $0xc0] sm:$0xff]
    %v88 = vld [vmem:[%s2 + $0xc8] sm:$0xff]
    %v89 = vld [vmem:[%s2 + $0xd0] sm:$0xff]
    %v90 = vld [vmem:[%s2 + $0xd8] sm:$0xff]
    %v91 = vld [vmem:[%s2 + $0xe0] sm:$0xff]
    %v92 = vld [vmem:[%s2 + $0xe8] sm:$0xff]
    %v93 = vld [vmem:[%s2 + $0xf0] sm:$0xff]
    %v94 = vld [vmem:[%s2 + $0xf8] sm:$0xff]
    %v95 = vld [vmem:[%s1 + $0x2] ss:$0 sm:$0xff]
    %96 = vmatprep.subr.mxu0 0.0
    %97 = vmatpush1.msra.mxu0 %v63
    %98 = vmatprep.subr.mxu0 0.0
    %99 = vmatpush1.msra.mxu0 %v64
    %100 = vmatprep.subr.mxu0 0.0
    %101 = vmatpush1.msra.mxu0 %v65
    %102 = vmatprep.subr.mxu0 0.0
    %103 = vmatpush1.msra.mxu0 %v66
    %104 = vmatprep.subr.mxu0 0.0
    %105 = vmatpush1.msra.mxu0 %v67
    %106 = vmatprep.subr.mxu0 0.0
    %107 = vmatpush1.msra.mxu0 %v68
    %108 = vmatprep.subr.mxu0 0.0
    %109 = vmatpush1.msra.mxu0 %v69
    %110 = vmatprep.subr.mxu0 0.0
    %111 = vmatpush1.msra.mxu0 %v70
    %112 = vmatprep.subr.mxu0 0.0
    %113 = vmatpush1.msra.mxu0 %v71
    %114 = vmatprep.subr.mxu0 0.0
    %115 = vmatpush1.msra.mxu0 %v72
    %116 = vmatprep.subr.mxu0 0.0
    %117 = vmatpush1.msra.mxu0 %v73
    %118 = vmatprep.subr.mxu0 0.0
    %119 = vmatpush1.msra.mxu0 %v74
    %120 = vmatprep.subr.mxu0 0.0
    %121 = vmatpush1.msra.mxu0 %v75
    %122 = vmatprep.subr.mxu0 0.0
    %123 = vmatpush1.msra.mxu0 %v76
    %124 = vmatprep.subr.mxu0 0.0
    %125 = vmatpush1.msra.mxu0 %v77
    %126 = vmatprep.subr.mxu0 0.0
    %127 = vmatpush1.msra.mxu0 %v78
    %128 = vmatprep.subr.mxu0 0.0
    %129 = vmatpush1.msra.mxu0 %v79
    %130 = vmatprep.subr.mxu0 0.0
    %131 = vmatpush1.msra.mxu0 %v80
    %132 = vmatprep.subr.mxu0 0.0
    %133 = vmatpush1.msra.mxu0 %v81
    %134 = vmatprep.subr.mxu0 0.0
    %135 = vmatpush1.msra.mxu0 %v82
    %136 = vmatprep.subr.mxu0 0.0
    %137 = vmatpush1.msra.mxu0 %v83
    %138 = vmatprep.subr.mxu0 0.0
    %139 = vmatpush1.msra.mxu0 %v84
    %140 = vmatprep.subr.mxu0 0.0
    %141 = vmatpush1.msra.mxu0 %v85
    %142 = vmatprep.subr.mxu0 0.0
    %143 = vmatpush1.msra.mxu0 %v86
    %144 = vmatprep.subr.mxu0 0.0
    %145 = vmatpush1.msra.mxu0 %v87
    %146 = vmatprep.subr.mxu0 0.0
    %147 = vmatpush1.msra.mxu0 %v88
    %148 = vmatprep.subr.mxu0 0.0
    %149 = vmatpush1.msra.mxu0 %v89
    %150 = vmatprep.subr.mxu0 0.0
    %151 = vmatpush1.msra.mxu0 %v90
    %152 = vmatprep.subr.mxu0 0.0
    %153 = vmatpush1.msra.mxu0 %v91
    %154 = vmatprep.subr.mxu0 0.0
    %155 = vmatpush1.msra.mxu0 %v92
    %156 = vmatprep.subr.mxu0 0.0
    %157 = vmatpush1.msra.mxu0 %v93
    %158 = vmatprep.subr.mxu0 0.0
    %159 = vmatpush1.msra.mxu0 %v94
    %160 = vmatprep.mubr.f32.mxu0 %v62
    %161 = vmatmul.mubr.f32.gmra.mrb[0].mxu0 %v61
    %v162 = vpop.f32.mrb[0].mxu0
    %v163 = vadd.f32 %v95, %v162
    %v164 = vpop.f32.mrb[0].mxu0
    %165 = vdwg.mxu0
    %v166 = vld [vmem:[%s1 + $0x3] ss:$0 sm:$0xff]
    %v167 = vld [vmem:[%s1 + $0x4] ss:$0 sm:$0xff]
    %vm168 = vcmask 261120
    %v169 = vsel %vm168, %v163, 0.0
    %170 = vadd.xlane.f32.xlu0 %v169
    %v171 = vpop.xlane.xlu0 %170
    %v172 = vrcp.pop 32.0
    %v173 = vmul.f32 %v171, %v172
    %v174 = vsub.f32 %v163, %v173
    %v175 = vmul.f32 %v174, %v174
    %v176 = vsel %vm168, %v175, 0.0
    %177 = vadd.xlane.f32.xlu0 %v176
    %v178 = vpop.xlane.xlu0 %177
    %v179 = vmul.f32 %v178, %v172
    %v180 = vadd.f32 %v179, 1e-05
    %v181 = vrsqrt.pop %v180
    %v182 = vmul.f32 %v174, %v181
    %v183 = vmul.f32 %v182, %v166
    %v184 = vadd.f32 %v183, %v167
    %v185 = vld [vmem:[%s1 + $0x5] ss:$0 sm:$0xff]
    %v186 = vld [vmem:[%s1] sm:$0xc0]
    %v187 = vld [vmem:[%s1 + $0x10] sm:$0x3f]
    %vm190 = vcmask 1041408
    %v191 = vrot.slane %v186, 6
    %v192 = vrot.slane %v187, 6
    %v193 = vsel %vm190, %v191, %v192
    %v195 = vadd.f32 %v184, %v193
    %v197 = vrot.slane %v195, 6
    %v199 = vsel %vm190, %v185, %v197
    %v200 = vlaneseq
    %v201 = vshrl.u32 %v200, 7
    %v202 = vadd.s32 %v201, 8
    %v203 = vadd.s32 %v201, 16
    %v204 = vadd.s32 %v201, 24
    %v205 = vadd.s32 %v201, 32
    %v206 = vlaneseq
    %v207 = vand.u32 %v206, 127
    %vm208 = vcmp.ge.s32.totalorder %v201, 10
    %vm209 = vcmp.ge.s32.totalorder %v202, 10
    %vm210 = vcmp.ge.s32.totalorder %v203, 10
    %vm211 = vcmp.ge.s32.totalorder %v204, 10
    %vm212 = vcmp.ge.s32.totalorder %v205, 10
    %v213 = vsel %vm208, 1, 0
    %v214 = vsel %vm209, 1, 0
    %v215 = vsel %vm210, 1, 0
    %v216 = vsel %vm211, 1, 0
    %v217 = vsel %vm212, 1, 0
    %vm218 = vcmp.ge.s32.totalorder %v201, 20
    %vm219 = vcmp.ge.s32.totalorder %v202, 20
    %vm220 = vcmp.ge.s32.totalorder %v203, 20
    %vm221 = vcmp.ge.s32.totalorder %v204, 20
    %vm222 = vcmp.ge.s32.totalorder %v205, 20
    %v223 = vsel %vm218, 1, 0
    %v224 = vsel %vm219, 1, 0
    %v225 = vsel %vm220, 1, 0
    %v226 = vsel %vm221, 1, 0
    %v227 = vsel %vm222, 1, 0
    %v228 = vadd.s32 %v213, %v223
    %v229 = vadd.s32 %v214, %v224
    %v230 = vadd.s32 %v215, %v225
    %v231 = vadd.s32 %v216, %v226
    %v232 = vadd.s32 %v217, %v227
    %vm233 = vcmp.ge.s32.totalorder %v201, 30
    %vm234 = vcmp.ge.s32.totalorder %v202, 30
    %vm235 = vcmp.ge.s32.totalorder %v203, 30
    %vm236 = vcmp.ge.s32.totalorder %v204, 30
    %vm237 = vcmp.ge.s32.totalorder %v205, 30
    %v238 = vsel %vm233, 1, 0
    %v239 = vsel %vm234, 1, 0
    %v240 = vsel %vm235, 1, 0
    %v241 = vsel %vm236, 1, 0
    %v242 = vsel %vm237, 1, 0
    %v243 = vadd.s32 %v228, %v238
    %v244 = vadd.s32 %v229, %v239
    %v245 = vadd.s32 %v230, %v240
    %v246 = vadd.s32 %v231, %v241
    %v247 = vadd.s32 %v232, %v242
    %v248 = vmul.u32 %v243, 10
    %v249 = vmul.u32 %v244, 10
    %v250 = vmul.u32 %v245, 10
    %v251 = vmul.u32 %v246, 10
    %v252 = vmul.u32 %v247, 10
    %v253 = vsub.s32 %v201, %v248
    %v254 = vsub.s32 %v202, %v249
    %v255 = vsub.s32 %v203, %v250
    %v256 = vsub.s32 %v204, %v251
    %v257 = vsub.s32 %v205, %v252
    %vm258 = vcmp.ge.s32.totalorder %v253, 6
    %vm259 = vcmp.ge.s32.totalorder %v254, 6
    %vm260 = vcmp.ge.s32.totalorder %v255, 6
    %vm261 = vcmp.ge.s32.totalorder %v256, 6
    %vm262 = vcmp.ge.s32.totalorder %v257, 6
    %v263 = vsel %vm258, 1, 0
    %v264 = vsel %vm259, 1, 0
    %v265 = vsel %vm260, 1, 0
    %v266 = vsel %vm261, 1, 0
    %v267 = vsel %vm262, 1, 0
    %vm268 = vcmp.lt.s32.totalorder %v253, 2
    %vm269 = vcmp.lt.s32.totalorder %v254, 2
    %vm270 = vcmp.lt.s32.totalorder %v255, 2
    %vm271 = vcmp.lt.s32.totalorder %v256, 2
    %vm272 = vcmp.lt.s32.totalorder %v257, 2
    %v273 = vsel %vm268, %v253, %v263
    %v274 = vsel %vm269, %v254, %v264
    %v275 = vsel %vm270, %v255, %v265
    %v276 = vsel %vm271, %v256, %v266
    %v277 = vsel %vm272, %v257, %v267
    %v278 = vmul.u32 %v243, 2
    %v279 = vmul.u32 %v244, 2
    %v280 = vmul.u32 %v245, 2
    %v281 = vmul.u32 %v246, 2
    %v282 = vmul.u32 %v247, 2
    %v283 = vadd.s32 %v278, %v273
    %v284 = vadd.s32 %v279, %v274
    %v285 = vadd.s32 %v280, %v275
    %v286 = vadd.s32 %v281, %v276
    %v287 = vadd.s32 %v282, %v277
    %vm288 = vcmp.ge.s32.totalorder %v207, 10
    %v289 = vsel %vm288, 1, 0
    %vm290 = vcmp.ge.s32.totalorder %v207, 20
    %v291 = vsel %vm290, 1, 0
    %v292 = vadd.s32 %v289, %v291
    %vm293 = vcmp.ge.s32.totalorder %v207, 30
    %v294 = vsel %vm293, 1, 0
    %v295 = vadd.s32 %v292, %v294
    %v296 = vmul.u32 %v295, 10
    %v297 = vsub.s32 %v207, %v296
    %vm298 = vcmp.ge.s32.totalorder %v297, 6
    %v299 = vsel %vm298, 1, 0
    %vm300 = vcmp.lt.s32.totalorder %v297, 2
    %v301 = vsel %vm300, %v297, %v299
    %v302 = vmul.u32 %v295, 2
    %v303 = vadd.s32 %v302, %v301
    %vm304 = vcmp.eq.s32.totalorder %v283, %v303
    %vm305 = vcmp.eq.s32.totalorder %v284, %v303
    %vm306 = vcmp.eq.s32.totalorder %v285, %v303
    %vm307 = vcmp.eq.s32.totalorder %v286, %v303
    %vm308 = vcmp.eq.s32.totalorder %v287, %v303
    %v309 = vsel %vm304, 0.0, -1e+30
    %v310 = vsel %vm305, 0.0, -1e+30
    %v311 = vsel %vm306, 0.0, -1e+30
    %v312 = vsel %vm307, 0.0, -1e+30
    %v313 = vsel %vm308, 0.0, -1e+30
    %v314 = vld [vmem:[%s1 + $0x16] ss:$0 sm:$0xff]
    %v315 = vld [vmem:[%s1 + $0x17] ss:$0 sm:$0xff]
    %v316 = vsel %vm168, %v199, 0.0
    %317 = vadd.xlane.f32.xlu0 %v316
    %v318 = vpop.xlane.xlu0 %317
    %vm319 = vcmask 254976
    %v320 = vsel %vm319, %v197, 0.0
    %321 = vadd.xlane.f32.xlu0 %v320
    %v322 = vpop.xlane.xlu0 %321
    %v323 = vmul.f32 %v318, %v172
    %v324 = vmul.f32 %v322, %v172
    %v325 = vsub.f32 %v199, %v323
    %v326 = vsub.f32 %v197, %v324
    %v327 = vmul.f32 %v325, %v325
    %v328 = vmul.f32 %v326, %v326
    %v329 = vsel %vm168, %v327, 0.0
    %330 = vadd.xlane.f32.xlu0 %v329
    %v331 = vpop.xlane.xlu0 %330
    %v332 = vsel %vm319, %v328, 0.0
    %333 = vadd.xlane.f32.xlu0 %v332
    %v334 = vpop.xlane.xlu0 %333
    %v335 = vmul.f32 %v331, %v172
    %v336 = vmul.f32 %v334, %v172
    %v337 = vadd.f32 %v335, 1e-05
    %v338 = vadd.f32 %v336, 1e-05
    %v339 = vrsqrt.pop %v337
    %v340 = vrsqrt.pop %v338
    %v341 = vmul.f32 %v325, %v339
    %v342 = vmul.f32 %v326, %v340
    %v343 = vmul.f32 %v341, %v314
    %v344 = vmul.f32 %v342, %v314
    %v345 = vadd.f32 %v343, %v315
    %v346 = vadd.f32 %v344, %v315
    %v347 = vld [vmem:[%s2 + $0x100] sm:$0xff]
    %v348 = vld [vmem:[%s2 + $0x108] sm:$0xff]
    %v349 = vld [vmem:[%s2 + $0x110] sm:$0xff]
    %v350 = vld [vmem:[%s2 + $0x118] sm:$0xff]
    %v352 = vsel %vm168, %v345, 0
    %v355 = vsel %vm168, %v346, 0
    %357 = vmatprep.subr.mxu0 0.0
    %358 = vmatpush1.msra.mxu0 %v347
    %359 = vmatprep.subr.mxu0 0.0
    %360 = vmatpush1.msra.mxu0 %v348
    %361 = vmatprep.subr.mxu0 0.0
    %362 = vmatpush1.msra.mxu0 %v349
    %363 = vmatprep.subr.mxu0 0.0
    %364 = vmatpush1.msra.mxu0 %v350
    %365 = vmatprep.subr.mxu0 0.0
    %366 = vmatpush1.msra.mxu0 0.0
    %367 = vmatprep.subr.mxu0 0.0
    %368 = vmatpush1.msra.mxu0 0.0
    %369 = vmatprep.subr.mxu0 0.0
    %370 = vmatpush1.msra.mxu0 0.0
    %371 = vmatprep.subr.mxu0 0.0
    %372 = vmatpush1.msra.mxu0 0.0
    %373 = vmatprep.subr.mxu0 0.0
    %374 = vmatpush1.msra.mxu0 0.0
    %375 = vmatprep.subr.mxu0 0.0
    %376 = vmatpush1.msra.mxu0 0.0
    %377 = vmatprep.subr.mxu0 0.0
    %378 = vmatpush1.msra.mxu0 0.0
    %379 = vmatprep.subr.mxu0 0.0
    %380 = vmatpush1.msra.mxu0 0.0
    %381 = vmatprep.subr.mxu0 0.0
    %382 = vmatpush1.msra.mxu0 0.0
    %383 = vmatprep.subr.mxu0 0.0
    %384 = vmatpush1.msra.mxu0 0.0
    %385 = vmatprep.subr.mxu0 0.0
    %386 = vmatpush1.msra.mxu0 0.0
    %387 = vmatprep.subr.mxu0 0.0
    %388 = vmatpush1.msra.mxu0 0.0
    %389 = vmatprep.subr.mxu0 0.0
    %390 = vmatpush1.msra.mxu0 0.0
    %391 = vmatprep.subr.mxu0 0.0
    %392 = vmatpush1.msra.mxu0 0.0
    %393 = vmatprep.subr.mxu0 0.0
    %394 = vmatpush1.msra.mxu0 0.0
    %395 = vmatprep.subr.mxu0 0.0
    %396 = vmatpush1.msra.mxu0 0.0
    %397 = vmatprep.subr.mxu0 0.0
    %398 = vmatpush1.msra.mxu0 0.0
    %399 = vmatprep.subr.mxu0 0.0
    %400 = vmatpush1.msra.mxu0 0.0
    %401 = vmatprep.subr.mxu0 0.0
    %402 = vmatpush1.msra.mxu0 0.0
    %403 = vmatprep.subr.mxu0 0.0
    %404 = vmatpush1.msra.mxu0 0.0
    %405 = vmatprep.subr.mxu0 0.0
    %406 = vmatpush1.msra.mxu0 0.0
    %407 = vmatprep.subr.mxu0 0.0
    %408 = vmatpush1.msra.mxu0 0.0
    %409 = vmatprep.subr.mxu0 0.0
    %410 = vmatpush1.msra.mxu0 0.0
    %411 = vmatprep.subr.mxu0 0.0
    %412 = vmatpush1.msra.mxu0 0.0
    %413 = vmatprep.subr.mxu0 0.0
    %414 = vmatpush1.msra.mxu0 0.0
    %415 = vmatprep.subr.mxu0 0.0
    %416 = vmatpush1.msra.mxu0 0.0
    %417 = vmatprep.subr.mxu0 0.0
    %418 = vmatpush1.msra.mxu0 0.0
    %419 = vmatprep.subr.mxu0 0.0
    %420 = vmatpush1.msra.mxu0 0.0
    %421 = vmatprep.mubr.f32.mxu0 0.0
    %422 = vmatmul.mubr.f32.gmra.mrb[0].mxu0 %v352
    %v423 = vpop.f32.mrb[0].mxu0
    %v424 = vadd.f32 0.0, %v423
    %v425 = vpop.f32.mrb[0].mxu0
    %426 = vmatprep.mubr.f32.mxu0 0.0
    %427 = vmatmul.mubr.f32.gmra.mrb[0].mxu0 %v355
    %v428 = vpop.f32.mrb[0].mxu0
    %v429 = vadd.f32 0.0, %v428
    %v430 = vpop.f32.mrb[0].mxu0
    %431 = vdwg.mxu0
    %v434 = vrot.slane %v424, 6
    %v435 = vrot.slane %v429, 6
    %v436 = vsel %vm190, %v434, %v435
    %437 = vrot.lane.b32.xlu0 %v434, 120
    %v438 = vpop.permute.xlu0 %437
    %439 = vrot.lane.b32.xlu0 %v436, 120
    %v440 = vpop.permute.xlu0 %439
    %vm443 = vcmask 1043456
    %v444 = vrot.slane %v424, 4
    %v445 = vrot.slane %v429, 4
    %v446 = vsel %vm443, %v444, %v445
    %447 = vrot.lane.b32.xlu0 %v444, 112
    %v448 = vpop.permute.xlu0 %447
    %449 = vrot.lane.b32.xlu0 %v446, 112
    %v450 = vpop.permute.xlu0 %449
    %vm453 = vcmask 1045504
    %v454 = vrot.slane %v424, 2
    %v455 = vrot.slane %v429, 2
    %v456 = vsel %vm453, %v454, %v455
    %457 = vrot.lane.b32.xlu0 %v454, 104
    %v458 = vpop.permute.xlu0 %457
    %459 = vrot.lane.b32.xlu0 %v456, 104
    %v460 = vpop.permute.xlu0 %459
    %v462 = vsel %vm190, %v429, %v438
    %v463 = vsel %vm443, %v440, %v448
    %v464 = vsel %vm453, %v450, %v458
    %468 = vrot.lane.b32.xlu0 %v424, 96
    %v469 = vpop.permute.xlu0 %468
    %470 = vrot.lane.b32.xlu0 %v462, 96
    %v471 = vpop.permute.xlu0 %470
    %472 = vrot.lane.b32.xlu0 %v463, 96
    %v473 = vpop.permute.xlu0 %472
    %474 = vrot.lane.b32.xlu0 %v464, 96
    %v475 = vpop.permute.xlu0 %474
    %476 = vrot.lane.b32.xlu0 %v460, 96
    %v477 = vpop.permute.xlu0 %476
    %vm478 = vcmask 64512
    %v479 = vsel %vm478, %v424, 0
    %v481 = vsel %vm478, %v462, 0
    %v483 = vsel %vm478, %v463, 0
    %v485 = vsel %vm478, %v464, 0
    %v487 = vsel %vm478, %v460, 0
    %v489 = vsel %vm478, %v469, 0
    %v491 = vsel %vm478, %v471, 0
    %v493 = vsel %vm478, %v473, 0
    %v495 = vsel %vm478, %v475, 0
    %v497 = vsel %vm478, %v477, 0
    %499 = vmatprep.subr.mxu0 0.0
    %500 = vmatpush1.xpose.msra.mxu0 %v489
    %501 = vmatprep.subr.mxu0 0.0
    %502 = vmatpush1.xpose.msra.mxu0 %v491
    %503 = vmatprep.subr.mxu0 0.0
    %504 = vmatpush1.xpose.msra.mxu0 %v493
    %505 = vmatprep.subr.mxu0 0.0
    %506 = vmatpush1.xpose.msra.mxu0 %v495
    %507 = vmatprep.subr.mxu0 0.0
    %508 = vmatpush1.xpose.msra.mxu0 %v497
    %509 = vmatprep.subr.mxu0 0.0
    %510 = vmatpush1.xpose.msra.mxu0 0.0
    %511 = vmatprep.subr.mxu0 0.0
    %512 = vmatpush1.xpose.msra.mxu0 0.0
    %513 = vmatprep.subr.mxu0 0.0
    %514 = vmatpush1.xpose.msra.mxu0 0.0
    %515 = vmatprep.subr.mxu0 0.0
    %516 = vmatpush1.xpose.msra.mxu0 0.0
    %517 = vmatprep.subr.mxu0 0.0
    %518 = vmatpush1.xpose.msra.mxu0 0.0
    %519 = vmatprep.subr.mxu0 0.0
    %520 = vmatpush1.xpose.msra.mxu0 0.0
    %521 = vmatprep.subr.mxu0 0.0
    %522 = vmatpush1.xpose.msra.mxu0 0.0
    %523 = vmatprep.subr.mxu0 0.0
    %524 = vmatpush1.xpose.msra.mxu0 0.0
    %525 = vmatprep.subr.mxu0 0.0
    %526 = vmatpush1.xpose.msra.mxu0 0.0
    %527 = vmatprep.subr.mxu0 0.0
    %528 = vmatpush1.xpose.msra.mxu0 0.0
    %529 = vmatprep.subr.mxu0 0.0
    %530 = vmatpush1.xpose.msra.mxu0 0.0
    %531 = vmatprep.subr.mxu0 0.0
    %532 = vmatpush1.xpose.msra.mxu0 0.0
    %533 = vmatprep.subr.mxu0 0.0
    %534 = vmatpush1.xpose.msra.mxu0 0.0
    %535 = vmatprep.subr.mxu0 0.0
    %536 = vmatpush1.xpose.msra.mxu0 0.0
    %537 = vmatprep.subr.mxu0 0.0
    %538 = vmatpush1.xpose.msra.mxu0 0.0
    %539 = vmatprep.subr.mxu0 0.0
    %540 = vmatpush1.xpose.msra.mxu0 0.0
    %541 = vmatprep.subr.mxu0 0.0
    %542 = vmatpush1.xpose.msra.mxu0 0.0
    %543 = vmatprep.subr.mxu0 0.0
    %544 = vmatpush1.xpose.msra.mxu0 0.0
    %545 = vmatprep.subr.mxu0 0.0
    %546 = vmatpush1.xpose.msra.mxu0 0.0
    %547 = vmatprep.subr.mxu0 0.0
    %548 = vmatpush1.xpose.msra.mxu0 0.0
    %549 = vmatprep.subr.mxu0 0.0
    %550 = vmatpush1.xpose.msra.mxu0 0.0
    %551 = vmatprep.subr.mxu0 0.0
    %552 = vmatpush1.xpose.msra.mxu0 0.0
    %553 = vmatprep.subr.mxu0 0.0
    %554 = vmatpush1.xpose.msra.mxu0 0.0
    %555 = vmatprep.subr.mxu0 0.0
    %556 = vmatpush1.xpose.msra.mxu0 0.0
    %557 = vmatprep.subr.mxu0 0.0
    %558 = vmatpush1.xpose.msra.mxu0 0.0
    %559 = vmatprep.subr.mxu0 0.0
    %560 = vmatpush1.xpose.msra.mxu0 0.0
    %561 = vmatprep.subr.mxu0 0.0
    %562 = vmatpush1.xpose.msra.mxu0 0.0
    %563 = vmatprep.mubr.f32.mxu0 0.0
    %564 = vmatmul.mubr.f32.gmra.mrb[0].mxu0 %v479
    %v565 = vpop.f32.mrb[0].mxu0
    %v566 = vadd.f32 %v309, %v565
    %v567 = vpop.f32.mrb[0].mxu0
    %568 = vmatprep.mubr.f32.mxu0 0.0
    %569 = vmatmul.mubr.f32.gmra.mrb[0].mxu0 %v481
    %v570 = vpop.f32.mrb[0].mxu0
    %v571 = vadd.f32 %v310, %v570
    %v572 = vpop.f32.mrb[0].mxu0
    %573 = vmatprep.mubr.f32.mxu0 0.0
    %574 = vmatmul.mubr.f32.gmra.mrb[0].mxu0 %v483
    %v575 = vpop.f32.mrb[0].mxu0
    %v576 = vadd.f32 %v311, %v575
    %v577 = vpop.f32.mrb[0].mxu0
    %578 = vmatprep.mubr.f32.mxu0 0.0
    %579 = vmatmul.mubr.f32.gmra.mrb[0].mxu0 %v485
    %v580 = vpop.f32.mrb[0].mxu0
    %v581 = vadd.f32 %v312, %v580
    %v582 = vpop.f32.mrb[0].mxu0
    %583 = vmatprep.mubr.f32.mxu0 0.0
    %584 = vmatmul.mubr.f32.gmra.mrb[0].mxu0 %v487
    %v585 = vpop.f32.mrb[0].mxu0
    %v586 = vadd.f32 %v313, %v585
    %v587 = vpop.f32.mrb[0].mxu0
    %588 = vdwg.mxu0
    %vm589 = vcmask 326656
    %v590 = vsel %vm589, %v566, -inf
    %591 = vmax.xlane.f32.xlu0 %v590
    %v592 = vpop.xlane.xlu0 %591
    %v593 = vsel %vm589, %v571, -inf
    %594 = vmax.xlane.f32.xlu0 %v593
    %v595 = vpop.xlane.xlu0 %594
    %v596 = vsel %vm589, %v576, -inf
    %597 = vmax.xlane.f32.xlu0 %v596
    %v598 = vpop.xlane.xlu0 %597
    %v599 = vsel %vm589, %v581, -inf
    %600 = vmax.xlane.f32.xlu0 %v599
    %v601 = vpop.xlane.xlu0 %600
    %v602 = vsel %vm589, %v586, -inf
    %603 = vmax.xlane.f32.xlu0 %v602
    %v604 = vpop.xlane.xlu0 %603
    %v605 = vsub.f32 %v566, %v592
    %v606 = vsub.f32 %v571, %v595
    %v607 = vsub.f32 %v576, %v598
    %v608 = vsub.f32 %v581, %v601
    %v609 = vsub.f32 %v586, %v604
    %v610 = vmul.f32 %v605, 1.442695
    %v611 = vpow.pop %v610
    %v612 = vmul.f32 %v606, 1.442695
    %v613 = vpow.pop %v612
    %v614 = vmul.f32 %v607, 1.442695
    %v615 = vpow.pop %v614
    %v616 = vmul.f32 %v608, 1.442695
    %v617 = vpow.pop %v616
    %v618 = vmul.f32 %v609, 1.442695
    %v619 = vpow.pop %v618
    %v620 = vsel %vm589, %v611, 0.0
    %621 = vadd.xlane.f32.xlu0 %v620
    %v622 = vpop.xlane.xlu0 %621
    %v623 = vsel %vm589, %v613, 0.0
    %624 = vadd.xlane.f32.xlu0 %v623
    %v625 = vpop.xlane.xlu0 %624
    %v626 = vsel %vm589, %v615, 0.0
    %627 = vadd.xlane.f32.xlu0 %v626
    %v628 = vpop.xlane.xlu0 %627
    %v629 = vsel %vm589, %v617, 0.0
    %630 = vadd.xlane.f32.xlu0 %v629
    %v631 = vpop.xlane.xlu0 %630
    %v632 = vsel %vm589, %v619, 0.0
    %633 = vadd.xlane.f32.xlu0 %v632
    %v634 = vpop.xlane.xlu0 %633
    %v635 = vrcp.pop %v622
    %v636 = vrcp.pop %v625
    %v637 = vrcp.pop %v628
    %v638 = vrcp.pop %v631
    %v639 = vrcp.pop %v634
    %v640 = vmul.f32 %v611, %v635
    %v641 = vmul.f32 %v613, %v636
    %v642 = vmul.f32 %v615, %v637
    %v643 = vmul.f32 %v617, %v638
    %v644 = vmul.f32 %v619, %v639
    %645 = vrot.lane.b32.xlu0 %v424, 64
    %v646 = vpop.permute.xlu0 %645
    %647 = vrot.lane.b32.xlu0 %v462, 64
    %v648 = vpop.permute.xlu0 %647
    %649 = vrot.lane.b32.xlu0 %v463, 64
    %v650 = vpop.permute.xlu0 %649
    %651 = vrot.lane.b32.xlu0 %v464, 64
    %v652 = vpop.permute.xlu0 %651
    %653 = vrot.lane.b32.xlu0 %v460, 64
    %v654 = vpop.permute.xlu0 %653
    %v661 = vsel %vm589, %v640, 0
    %v664 = vsel %vm589, %v641, 0
    %v667 = vsel %vm589, %v642, 0
    %v670 = vsel %vm589, %v643, 0
    %v673 = vsel %vm589, %v644, 0
    %675 = vmatprep.subr.mxu0 0.0
    %676 = vmatpush1.msra.mxu0 %v646
    %677 = vmatprep.subr.mxu0 0.0
    %678 = vmatpush1.msra.mxu0 %v648
    %679 = vmatprep.subr.mxu0 0.0
    %680 = vmatpush1.msra.mxu0 %v650
    %681 = vmatprep.subr.mxu0 0.0
    %682 = vmatpush1.msra.mxu0 %v652
    %683 = vmatprep.subr.mxu0 0.0
    %684 = vmatpush1.msra.mxu0 %v654
    %685 = vmatprep.subr.mxu0 0.0
    %686 = vmatpush1.msra.mxu0 0.0
    %687 = vmatprep.subr.mxu0 0.0
    %688 = vmatpush1.msra.mxu0 0.0
    %689 = vmatprep.subr.mxu0 0.0
    %690 = vmatpush1.msra.mxu0 0.0
    %691 = vmatprep.subr.mxu0 0.0
    %692 = vmatpush1.msra.mxu0 0.0
    %693 = vmatprep.subr.mxu0 0.0
    %694 = vmatpush1.msra.mxu0 0.0
    %695 = vmatprep.subr.mxu0 0.0
    %696 = vmatpush1.msra.mxu0 0.0
    %697 = vmatprep.subr.mxu0 0.0
    %698 = vmatpush1.msra.mxu0 0.0
    %699 = vmatprep.subr.mxu0 0.0
    %700 = vmatpush1.msra.mxu0 0.0
    %701 = vmatprep.subr.mxu0 0.0
    %702 = vmatpush1.msra.mxu0 0.0
    %703 = vmatprep.subr.mxu0 0.0
    %704 = vmatpush1.msra.mxu0 0.0
    %705 = vmatprep.subr.mxu0 0.0
    %706 = vmatpush1.msra.mxu0 0.0
    %707 = vmatprep.subr.mxu0 0.0
    %708 = vmatpush1.msra.mxu0 0.0
    %709 = vmatprep.subr.mxu0 0.0
    %710 = vmatpush1.msra.mxu0 0.0
    %711 = vmatprep.subr.mxu0 0.0
    %712 = vmatpush1.msra.mxu0 0.0
    %713 = vmatprep.subr.mxu0 0.0
    %714 = vmatpush1.msra.mxu0 0.0
    %715 = vmatprep.subr.mxu0 0.0
    %716 = vmatpush1.msra.mxu0 0.0
    %717 = vmatprep.subr.mxu0 0.0
    %718 = vmatpush1.msra.mxu0 0.0
    %719 = vmatprep.subr.mxu0 0.0
    %720 = vmatpush1.msra.mxu0 0.0
    %721 = vmatprep.subr.mxu0 0.0
    %722 = vmatpush1.msra.mxu0 0.0
    %723 = vmatprep.subr.mxu0 0.0
    %724 = vmatpush1.msra.mxu0 0.0
    %725 = vmatprep.subr.mxu0 0.0
    %726 = vmatpush1.msra.mxu0 0.0
    %727 = vmatprep.subr.mxu0 0.0
    %728 = vmatpush1.msra.mxu0 0.0
    %729 = vmatprep.subr.mxu0 0.0
    %730 = vmatpush1.msra.mxu0 0.0
    %731 = vmatprep.subr.mxu0 0.0
    %732 = vmatpush1.msra.mxu0 0.0
    %733 = vmatprep.subr.mxu0 0.0
    %734 = vmatpush1.msra.mxu0 0.0
    %735 = vmatprep.subr.mxu0 0.0
    %736 = vmatpush1.msra.mxu0 0.0
    %737 = vmatprep.subr.mxu0 0.0
    %738 = vmatpush1.msra.mxu0 0.0
    %739 = vmatprep.mubr.f32.mxu0 0.0
    %740 = vmatmul.mubr.f32.gmra.mrb[0].mxu0 %v661
    %v741 = vpop.f32.mrb[0].mxu0
    %v742 = vadd.f32 0.0, %v741
    %v743 = vpop.f32.mrb[0].mxu0
    %744 = vmatprep.mubr.f32.mxu0 0.0
    %745 = vmatmul.mubr.f32.gmra.mrb[0].mxu0 %v664
    %v746 = vpop.f32.mrb[0].mxu0
    %v747 = vadd.f32 0.0, %v746
    %v748 = vpop.f32.mrb[0].mxu0
    %749 = vmatprep.mubr.f32.mxu0 0.0
    %750 = vmatmul.mubr.f32.gmra.mrb[0].mxu0 %v667
    %v751 = vpop.f32.mrb[0].mxu0
    %v752 = vadd.f32 0.0, %v751
    %v753 = vpop.f32.mrb[0].mxu0
    %754 = vmatprep.mubr.f32.mxu0 0.0
    %755 = vmatmul.mubr.f32.gmra.mrb[0].mxu0 %v670
    %v756 = vpop.f32.mrb[0].mxu0
    %v757 = vadd.f32 0.0, %v756
    %v758 = vpop.f32.mrb[0].mxu0
    %759 = vmatprep.mubr.f32.mxu0 0.0
    %760 = vmatmul.mubr.f32.gmra.mrb[0].mxu0 %v673
    %v761 = vpop.f32.mrb[0].mxu0
    %v762 = vadd.f32 0.0, %v761
    %v763 = vpop.f32.mrb[0].mxu0
    %764 = vdwg.mxu0
    %v765 = vld [vmem:[%s2 + $0x120] sm:$0xff]
    %v767 = vsel %vm478, %v742, 0
    %v770 = vsel %vm478, %v747, 0
    %v773 = vsel %vm478, %v752, 0
    %v776 = vsel %vm478, %v757, 0
    %v779 = vsel %vm478, %v762, 0
    %781 = vmatprep.subr.mxu0 0.0
    %782 = vmatpush1.msra.mxu0 %v765
    %783 = vmatprep.subr.mxu0 0.0
    %784 = vmatpush1.msra.mxu0 0.0
    %785 = vmatprep.subr.mxu0 0.0
    %786 = vmatpush1.msra.mxu0 0.0
    %787 = vmatprep.subr.mxu0 0.0
    %788 = vmatpush1.msra.mxu0 0.0
    %789 = vmatprep.subr.mxu0 0.0
    %790 = vmatpush1.msra.mxu0 0.0
    %791 = vmatprep.subr.mxu0 0.0
    %792 = vmatpush1.msra.mxu0 0.0
    %793 = vmatprep.subr.mxu0 0.0
    %794 = vmatpush1.msra.mxu0 0.0
    %795 = vmatprep.subr.mxu0 0.0
    %796 = vmatpush1.msra.mxu0 0.0
    %797 = vmatprep.subr.mxu0 0.0
    %798 = vmatpush1.msra.mxu0 0.0
    %799 = vmatprep.subr.mxu0 0.0
    %800 = vmatpush1.msra.mxu0 0.0
    %801 = vmatprep.subr.mxu0 0.0
    %802 = vmatpush1.msra.mxu0 0.0
    %803 = vmatprep.subr.mxu0 0.0
    %804 = vmatpush1.msra.mxu0 0.0
    %805 = vmatprep.subr.mxu0 0.0
    %806 = vmatpush1.msra.mxu0 0.0
    %807 = vmatprep.subr.mxu0 0.0
    %808 = vmatpush1.msra.mxu0 0.0
    %809 = vmatprep.subr.mxu0 0.0
    %810 = vmatpush1.msra.mxu0 0.0
    %811 = vmatprep.subr.mxu0 0.0
    %812 = vmatpush1.msra.mxu0 0.0
    %813 = vmatprep.subr.mxu0 0.0
    %814 = vmatpush1.msra.mxu0 0.0
    %815 = vmatprep.subr.mxu0 0.0
    %816 = vmatpush1.msra.mxu0 0.0
    %817 = vmatprep.subr.mxu0 0.0
    %818 = vmatpush1.msra.mxu0 0.0
    %819 = vmatprep.subr.mxu0 0.0
    %820 = vmatpush1.msra.mxu0 0.0
    %821 = vmatprep.subr.mxu0 0.0
    %822 = vmatpush1.msra.mxu0 0.0
    %823 = vmatprep.subr.mxu0 0.0
    %824 = vmatpush1.msra.mxu0 0.0
    %825 = vmatprep.subr.mxu0 0.0
    %826 = vmatpush1.msra.mxu0 0.0
    %827 = vmatprep.subr.mxu0 0.0
    %828 = vmatpush1.msra.mxu0 0.0
    %829 = vmatprep.subr.mxu0 0.0
    %830 = vmatpush1.msra.mxu0 0.0
    %831 = vmatprep.subr.mxu0 0.0
    %832 = vmatpush1.msra.mxu0 0.0
    %833 = vmatprep.subr.mxu0 0.0
    %834 = vmatpush1.msra.mxu0 0.0
    %835 = vmatprep.subr.mxu0 0.0
    %836 = vmatpush1.msra.mxu0 0.0
    %837 = vmatprep.subr.mxu0 0.0
    %838 = vmatpush1.msra.mxu0 0.0
    %839 = vmatprep.subr.mxu0 0.0
    %840 = vmatpush1.msra.mxu0 0.0
    %841 = vmatprep.subr.mxu0 0.0
    %842 = vmatpush1.msra.mxu0 0.0
    %843 = vmatprep.subr.mxu0 0.0
    %844 = vmatpush1.msra.mxu0 0.0
    %845 = vmatprep.mubr.f32.mxu0 0.0
    %846 = vmatmul.mubr.f32.gmra.mrb[0].mxu0 %v767
    %v847 = vpop.f32.mrb[0].mxu0
    %v848 = vadd.f32 0.0, %v847
    %v849 = vpop.f32.mrb[0].mxu0
    %850 = vmatprep.mubr.f32.mxu0 0.0
    %851 = vmatmul.mubr.f32.gmra.mrb[0].mxu0 %v770
    %v852 = vpop.f32.mrb[0].mxu0
    %v853 = vadd.f32 0.0, %v852
    %v854 = vpop.f32.mrb[0].mxu0
    %855 = vmatprep.mubr.f32.mxu0 0.0
    %856 = vmatmul.mubr.f32.gmra.mrb[0].mxu0 %v773
    %v857 = vpop.f32.mrb[0].mxu0
    %v858 = vadd.f32 0.0, %v857
    %v859 = vpop.f32.mrb[0].mxu0
    %860 = vmatprep.mubr.f32.mxu0 0.0
    %861 = vmatmul.mubr.f32.gmra.mrb[0].mxu0 %v776
    %v862 = vpop.f32.mrb[0].mxu0
    %v863 = vadd.f32 0.0, %v862
    %v864 = vpop.f32.mrb[0].mxu0
    %865 = vmatprep.mubr.f32.mxu0 0.0
    %866 = vmatmul.mubr.f32.gmra.mrb[0].mxu0 %v779
    %v867 = vpop.f32.mrb[0].mxu0
    %v868 = vadd.f32 0.0, %v867
    %v869 = vpop.f32.mrb[0].mxu0
    %870 = vdwg.mxu0
    %v873 = vrot.slane %v853, 2
    %v874 = vrot.slane %v858, 2
    %v875 = vsel %vm453, %v873, %v874
    %876 = vrot.lane.b32.xlu0 %v875, 96
    %v877 = vpop.permute.xlu0 %876
    %878 = vrot.lane.b32.xlu0 %v874, 96
    %v879 = vpop.permute.xlu0 %878
    %v882 = vadd.f32 %v848, %v877
    %v883 = vadd.f32 %v853, %v879
    %v885 = vrot.slane %v858, 4
    %v886 = vrot.slane %v863, 4
    %v887 = vsel %vm443, %v885, %v886
    %888 = vrot.lane.b32.xlu0 %v887, 64
    %v889 = vpop.permute.xlu0 %888
    %890 = vrot.lane.b32.xlu0 %v886, 64
    %v891 = vpop.permute.xlu0 %890
    %v894 = vadd.f32 %v882, %v889
    %v895 = vadd.f32 %v883, %v891
    %v897 = vrot.slane %v863, 6
    %v898 = vrot.slane %v868, 6
    %v899 = vsel %vm190, %v897, %v898
    %900 = vrot.lane.b32.xlu0 %v899, 32
    %v901 = vpop.permute.xlu0 %900
    %902 = vrot.lane.b32.xlu0 %v898, 32
    %v903 = vpop.permute.xlu0 %902
    %v906 = vadd.f32 %v894, %v901
    %v907 = vadd.f32 %v895, %v903
    %v908 = vld [vmem:[%s1 + $0x20] ss:$0 sm:$0xff]
    %v909 = vadd.f32 %v906, %v908
    %v910 = vadd.f32 %v907, %v908
    %v911 = vadd.f32 %v909, %v199
    %v912 = vadd.f32 %v910, %v197
    %v913 = vld [vmem:[%s1 + $0x21] ss:$0 sm:$0xff]
    %v914 = vld [vmem:[%s1 + $0x22] ss:$0 sm:$0xff]
    %v915 = vsel %vm168, %v911, 0.0
    %916 = vadd.xlane.f32.xlu0 %v915
    %v917 = vpop.xlane.xlu0 %916
    %v918 = vsel %vm319, %v912, 0.0
    %919 = vadd.xlane.f32.xlu0 %v918
    %v920 = vpop.xlane.xlu0 %919
    %v921 = vmul.f32 %v917, %v172
    %v922 = vmul.f32 %v920, %v172
    %v923 = vsub.f32 %v911, %v921
    %v924 = vsub.f32 %v912, %v922
    %v925 = vmul.f32 %v923, %v923
    %v926 = vmul.f32 %v924, %v924
    %v927 = vsel %vm168, %v925, 0.0
    %928 = vadd.xlane.f32.xlu0 %v927
    %v929 = vpop.xlane.xlu0 %928
    %v930 = vsel %vm319, %v926, 0.0
    %931 = vadd.xlane.f32.xlu0 %v930
    %v932 = vpop.xlane.xlu0 %931
    %v933 = vmul.f32 %v929, %v172
    %v934 = vmul.f32 %v932, %v172
    %v935 = vadd.f32 %v933, 1e-05
    %v936 = vadd.f32 %v934, 1e-05
    %v937 = vrsqrt.pop %v935
    %v938 = vrsqrt.pop %v936
    %v939 = vmul.f32 %v923, %v937
    %v940 = vmul.f32 %v924, %v938
    %v941 = vmul.f32 %v939, %v913
    %v942 = vmul.f32 %v940, %v913
    %v943 = vadd.f32 %v941, %v914
    %v944 = vadd.f32 %v942, %v914
    %v945 = vld [vmem:[%s2 + $0x128] sm:$0xff]
    %v946 = vld [vmem:[%s2 + $0x130] sm:$0xff]
    %v947 = vld [vmem:[%s2 + $0x138] sm:$0xff]
    %v948 = vld [vmem:[%s2 + $0x140] sm:$0xff]
    %v949 = vld [vmem:[%s1 + $0x23] ss:$0 sm:$0xff]
    %v951 = vsel %vm168, %v943, 0
    %v954 = vsel %vm168, %v944, 0
    %956 = vmatprep.subr.mxu0 0.0
    %957 = vmatpush1.msra.mxu0 %v945
    %958 = vmatprep.subr.mxu0 0.0
    %959 = vmatpush1.msra.mxu0 %v946
    %960 = vmatprep.subr.mxu0 0.0
    %961 = vmatpush1.msra.mxu0 %v947
    %962 = vmatprep.subr.mxu0 0.0
    %963 = vmatpush1.msra.mxu0 %v948
    %964 = vmatprep.subr.mxu0 0.0
    %965 = vmatpush1.msra.mxu0 0.0
    %966 = vmatprep.subr.mxu0 0.0
    %967 = vmatpush1.msra.mxu0 0.0
    %968 = vmatprep.subr.mxu0 0.0
    %969 = vmatpush1.msra.mxu0 0.0
    %970 = vmatprep.subr.mxu0 0.0
    %971 = vmatpush1.msra.mxu0 0.0
    %972 = vmatprep.subr.mxu0 0.0
    %973 = vmatpush1.msra.mxu0 0.0
    %974 = vmatprep.subr.mxu0 0.0
    %975 = vmatpush1.msra.mxu0 0.0
    %976 = vmatprep.subr.mxu0 0.0
    %977 = vmatpush1.msra.mxu0 0.0
    %978 = vmatprep.subr.mxu0 0.0
    %979 = vmatpush1.msra.mxu0 0.0
    %980 = vmatprep.subr.mxu0 0.0
    %981 = vmatpush1.msra.mxu0 0.0
    %982 = vmatprep.subr.mxu0 0.0
    %983 = vmatpush1.msra.mxu0 0.0
    %984 = vmatprep.subr.mxu0 0.0
    %985 = vmatpush1.msra.mxu0 0.0
    %986 = vmatprep.subr.mxu0 0.0
    %987 = vmatpush1.msra.mxu0 0.0
    %988 = vmatprep.subr.mxu0 0.0
    %989 = vmatpush1.msra.mxu0 0.0
    %990 = vmatprep.subr.mxu0 0.0
    %991 = vmatpush1.msra.mxu0 0.0
    %992 = vmatprep.subr.mxu0 0.0
    %993 = vmatpush1.msra.mxu0 0.0
    %994 = vmatprep.subr.mxu0 0.0
    %995 = vmatpush1.msra.mxu0 0.0
    %996 = vmatprep.subr.mxu0 0.0
    %997 = vmatpush1.msra.mxu0 0.0
    %998 = vmatprep.subr.mxu0 0.0
    %999 = vmatpush1.msra.mxu0 0.0
    %1000 = vmatprep.subr.mxu0 0.0
    %1001 = vmatpush1.msra.mxu0 0.0
    %1002 = vmatprep.subr.mxu0 0.0
    %1003 = vmatpush1.msra.mxu0 0.0
    %1004 = vmatprep.subr.mxu0 0.0
    %1005 = vmatpush1.msra.mxu0 0.0
    %1006 = vmatprep.subr.mxu0 0.0
    %1007 = vmatpush1.msra.mxu0 0.0
    %1008 = vmatprep.subr.mxu0 0.0
    %1009 = vmatpush1.msra.mxu0 0.0
    %1010 = vmatprep.subr.mxu0 0.0
    %1011 = vmatpush1.msra.mxu0 0.0
    %1012 = vmatprep.subr.mxu0 0.0
    %1013 = vmatpush1.msra.mxu0 0.0
    %1014 = vmatprep.subr.mxu0 0.0
    %1015 = vmatpush1.msra.mxu0 0.0
    %1016 = vmatprep.subr.mxu0 0.0
    %1017 = vmatpush1.msra.mxu0 0.0
    %1018 = vmatprep.subr.mxu0 0.0
    %1019 = vmatpush1.msra.mxu0 0.0
    %1020 = vmatprep.mubr.f32.mxu0 0.0
    %1021 = vmatmul.mubr.f32.gmra.mrb[0].mxu0 %v951
    %v1022 = vpop.f32.mrb[0].mxu0
    %v1023 = vadd.f32 %v949, %v1022
    %v1024 = vpop.f32.mrb[0].mxu0
    %1025 = vmatprep.mubr.f32.mxu0 0.0
    %1026 = vmatmul.mubr.f32.gmra.mrb[0].mxu0 %v954
    %v1027 = vpop.f32.mrb[0].mxu0
    %v1028 = vadd.f32 %v949, %v1027
    %v1029 = vpop.f32.mrb[0].mxu0
    %1030 = vdwg.mxu0
    %v1031 = vmul.f32 %v1023, 0.70710677
    %v1032 = vmul.f32 %v1028, 0.70710677
    %v1033 = vand.u32 2147483647, %v1031
    %v1034 = vand.u32 2147483647, %v1032
    %v1035 = vmul.f32 %v1033, 0.3275911
    %v1036 = vmul.f32 %v1034, 0.3275911
    %v1037 = vadd.f32 %v1035, 1.0
    %v1038 = vadd.f32 %v1036, 1.0
    %v1039 = vrcp.pop %v1037
    %v1040 = vmul.f32 1.0, %v1039
    %v1041 = vrcp.pop %v1038
    %v1042 = vmul.f32 1.0, %v1041
    %v1043 = vmul.f32 %v1040, 1.0614054
    %v1044 = vmul.f32 %v1042, 1.0614054
    %v1045 = vsub.f32 %v1043, 1.4531521
    %v1046 = vsub.f32 %v1044, 1.4531521
    %v1047 = vmul.f32 %v1045, %v1040
    %v1048 = vmul.f32 %v1046, %v1042
    %v1049 = vadd.f32 %v1047, 1.4214138
    %v1050 = vadd.f32 %v1048, 1.4214138
    %v1051 = vmul.f32 %v1049, %v1040
    %v1052 = vmul.f32 %v1050, %v1042
    %v1053 = vsub.f32 %v1051, 0.28449672
    %v1054 = vsub.f32 %v1052, 0.28449672
    %v1055 = vmul.f32 %v1053, %v1040
    %v1056 = vmul.f32 %v1054, %v1042
    %v1057 = vadd.f32 %v1055, 0.2548296
    %v1058 = vadd.f32 %v1056, 0.2548296
    %v1059 = vmul.f32 %v1057, %v1040
    %v1060 = vmul.f32 %v1058, %v1042
    %v1061 = vsub.f32 0.0, %v1031
    %v1062 = vsub.f32 0.0, %v1032
    %v1063 = vmul.f32 %v1061, %v1031
    %v1064 = vmul.f32 %v1062, %v1032
    %v1065 = vmul.f32 %v1063, 1.442695
    %v1066 = vpow.pop %v1065
    %v1067 = vmul.f32 %v1064, 1.442695
    %v1068 = vpow.pop %v1067
    %v1069 = vmul.f32 %v1059, %v1066
    %v1070 = vmul.f32 %v1060, %v1068
    %v1071 = vsub.f32 1.0, %v1069
    %v1072 = vsub.f32 1.0, %v1070
    %vm1073 = vcmp.ge.f32.partialorder %v1031, 0.0
    %vm1074 = vcmp.ge.f32.partialorder %v1032, 0.0
    %v1075 = vsub.f32 0.0, %v1071
    %v1076 = vsub.f32 0.0, %v1072
    %v1077 = vsel %vm1073, %v1071, %v1075
    %v1078 = vsel %vm1074, %v1072, %v1076
    %v1079 = vmul.f32 %v1023, 0.5
    %v1080 = vmul.f32 %v1028, 0.5
    %v1081 = vadd.f32 %v1077, 1.0
    %v1082 = vadd.f32 %v1078, 1.0
    %v1083 = vmul.f32 %v1079, %v1081
    %v1084 = vmul.f32 %v1080, %v1082
    %v1085 = vld [vmem:[%s2 + $0x148] sm:$0xff]
    %v1086 = vld [vmem:[%s2 + $0x150] sm:$0xff]
    %v1087 = vld [vmem:[%s2 + $0x158] sm:$0xff]
    %v1088 = vld [vmem:[%s2 + $0x160] sm:$0xff]
    %v1089 = vld [vmem:[%s2 + $0x168] sm:$0xff]
    %v1090 = vld [vmem:[%s2 + $0x170] sm:$0xff]
    %v1091 = vld [vmem:[%s2 + $0x178] sm:$0xff]
    %v1092 = vld [vmem:[%s2 + $0x180] sm:$0xff]
    %v1093 = vld [vmem:[%s1 + $0x24] ss:$0 sm:$0xff]
    %vm1094 = vcmask 523264
    %v1096 = vsel %vm1094, %v1083, 0
    %v1099 = vsel %vm1094, %v1084, 0
    %1101 = vmatprep.subr.mxu0 0.0
    %1102 = vmatpush1.msra.mxu0 %v1085
    %1103 = vmatprep.subr.mxu0 0.0
    %1104 = vmatpush1.msra.mxu0 %v1086
    %1105 = vmatprep.subr.mxu0 0.0
    %1106 = vmatpush1.msra.mxu0 %v1087
    %1107 = vmatprep.subr.mxu0 0.0
    %1108 = vmatpush1.msra.mxu0 %v1088
    %1109 = vmatprep.subr.mxu0 0.0
    %1110 = vmatpush1.msra.mxu0 %v1089
    %1111 = vmatprep.subr.mxu0 0.0
    %1112 = vmatpush1.msra.mxu0 %v1090
    %1113 = vmatprep.subr.mxu0 0.0
    %1114 = vmatpush1.msra.mxu0 %v1091
    %1115 = vmatprep.subr.mxu0 0.0
    %1116 = vmatpush1.msra.mxu0 %v1092
    %1117 = vmatprep.subr.mxu0 0.0
    %1118 = vmatpush1.msra.mxu0 0.0
    %1119 = vmatprep.subr.mxu0 0.0
    %1120 = vmatpush1.msra.mxu0 0.0
    %1121 = vmatprep.subr.mxu0 0.0
    %1122 = vmatpush1.msra.mxu0 0.0
    %1123 = vmatprep.subr.mxu0 0.0
    %1124 = vmatpush1.msra.mxu0 0.0
    %1125 = vmatprep.subr.mxu0 0.0
    %1126 = vmatpush1.msra.mxu0 0.0
    %1127 = vmatprep.subr.mxu0 0.0
    %1128 = vmatpush1.msra.mxu0 0.0
    %1129 = vmatprep.subr.mxu0 0.0
    %1130 = vmatpush1.msra.mxu0 0.0
    %1131 = vmatprep.subr.mxu0 0.0
    %1132 = vmatpush1.msra.mxu0 0.0
    %1133 = vmatprep.subr.mxu0 0.0
    %1134 = vmatpush1.msra.mxu0 0.0
    %1135 = vmatprep.subr.mxu0 0.0
    %1136 = vmatpush1.msra.mxu0 0.0
    %1137 = vmatprep.subr.mxu0 0.0
    %1138 = vmatpush1.msra.mxu0 0.0
    %1139 = vmatprep.subr.mxu0 0.0
    %1140 = vmatpush1.msra.mxu0 0.0
    %1141 = vmatprep.subr.mxu0 0.0
    %1142 = vmatpush1.msra.mxu0 0.0
    %1143 = vmatprep.subr.mxu0 0.0
    %1144 = vmatpush1.msra.mxu0 0.0
    %1145 = vmatprep.subr.mxu0 0.0
    %1146 = vmatpush1.msra.mxu0 0.0
    %1147 = vmatprep.subr.mxu0 0.0
    %1148 = vmatpush1.msra.mxu0 0.0
    %1149 = vmatprep.subr.mxu0 0.0
    %1150 = vmatpush1.msra.mxu0 0.0
    %1151 = vmatprep.subr.mxu0 0.0
    %1152 = vmatpush1.msra.mxu0 0.0
    %1153 = vmatprep.subr.mxu0 0.0
    %1154 = vmatpush1.msra.mxu0 0.0
    %1155 = vmatprep.subr.mxu0 0.0
    %1156 = vmatpush1.msra.mxu0 0.0
    %1157 = vmatprep.subr.mxu0 0.0
    %1158 = vmatpush1.msra.mxu0 0.0
    %1159 = vmatprep.subr.mxu0 0.0
    %1160 = vmatpush1.msra.mxu0 0.0
    %1161 = vmatprep.subr.mxu0 0.0
    %1162 = vmatpush1.msra.mxu0 0.0
    %1163 = vmatprep.subr.mxu0 0.0
    %1164 = vmatpush1.msra.mxu0 0.0
    %1165 = vmatprep.mubr.f32.mxu0 0.0
    %1166 = vmatmul.mubr.f32.gmra.mrb[0].mxu0 %v1096
    %v1167 = vpop.f32.mrb[0].mxu0
    %v1168 = vadd.f32 %v1093, %v1167
    %v1169 = vpop.f32.mrb[0].mxu0
    %1170 = vmatprep.mubr.f32.mxu0 0.0
    %1171 = vmatmul.mubr.f32.gmra.mrb[0].mxu0 %v1099
    %v1172 = vpop.f32.mrb[0].mxu0
    %v1173 = vadd.f32 %v1093, %v1172
    %v1174 = vpop.f32.mrb[0].mxu0
    %1175 = vdwg.mxu0
    %v1176 = vadd.f32 %v1168, %v911
    %v1177 = vadd.f32 %v1173, %v912
    %v1178 = vld [vmem:[%s1 + $0x25] ss:$0 sm:$0xff]
    %v1179 = vld [vmem:[%s1 + $0x26] ss:$0 sm:$0xff]
    %v1180 = vsel %vm168, %v1176, 0.0
    %1181 = vadd.xlane.f32.xlu0 %v1180
    %v1182 = vpop.xlane.xlu0 %1181
    %v1183 = vsel %vm319, %v1177, 0.0
    %1184 = vadd.xlane.f32.xlu0 %v1183
    %v1185 = vpop.xlane.xlu0 %1184
    %v1186 = vmul.f32 %v1182, %v172
    %v1187 = vmul.f32 %v1185, %v172
    %v1188 = vsub.f32 %v1176, %v1186
    %v1189 = vsub.f32 %v1177, %v1187
    %v1190 = vmul.f32 %v1188, %v1188
    %v1191 = vmul.f32 %v1189, %v1189
    %v1192 = vsel %vm168, %v1190, 0.0
    %1193 = vadd.xlane.f32.xlu0 %v1192
    %v1194 = vpop.xlane.xlu0 %1193
    %v1195 = vsel %vm319, %v1191, 0.0
    %1196 = vadd.xlane.f32.xlu0 %v1195
    %v1197 = vpop.xlane.xlu0 %1196
    %v1198 = vmul.f32 %v1194, %v172
    %v1199 = vmul.f32 %v1197, %v172
    %v1200 = vadd.f32 %v1198, 1e-05
    %v1201 = vadd.f32 %v1199, 1e-05
    %v1202 = vrsqrt.pop %v1200
    %v1203 = vrsqrt.pop %v1201
    %v1204 = vmul.f32 %v1188, %v1202
    %v1205 = vmul.f32 %v1189, %v1203
    %v1206 = vmul.f32 %v1204, %v1178
    %v1207 = vmul.f32 %v1205, %v1178
    %v1208 = vadd.f32 %v1206, %v1179
    %v1209 = vadd.f32 %v1207, %v1179
    %v1210 = vld [vmem:[%s2 + $0x188] sm:$0xff]
    %v1211 = vld [vmem:[%s2 + $0x190] sm:$0xff]
    %v1212 = vld [vmem:[%s2 + $0x198] sm:$0xff]
    %v1213 = vld [vmem:[%s2 + $0x1a0] sm:$0xff]
    %v1215 = vsel %vm168, %v1208, 0
    %v1218 = vsel %vm168, %v1209, 0
    %1220 = vmatprep.subr.mxu0 0.0
    %1221 = vmatpush1.msra.mxu0 %v1210
    %1222 = vmatprep.subr.mxu0 0.0
    %1223 = vmatpush1.msra.mxu0 %v1211
    %1224 = vmatprep.subr.mxu0 0.0
    %1225 = vmatpush1.msra.mxu0 %v1212
    %1226 = vmatprep.subr.mxu0 0.0
    %1227 = vmatpush1.msra.mxu0 %v1213
    %1228 = vmatprep.subr.mxu0 0.0
    %1229 = vmatpush1.msra.mxu0 0.0
    %1230 = vmatprep.subr.mxu0 0.0
    %1231 = vmatpush1.msra.mxu0 0.0
    %1232 = vmatprep.subr.mxu0 0.0
    %1233 = vmatpush1.msra.mxu0 0.0
    %1234 = vmatprep.subr.mxu0 0.0
    %1235 = vmatpush1.msra.mxu0 0.0
    %1236 = vmatprep.subr.mxu0 0.0
    %1237 = vmatpush1.msra.mxu0 0.0
    %1238 = vmatprep.subr.mxu0 0.0
    %1239 = vmatpush1.msra.mxu0 0.0
    %1240 = vmatprep.subr.mxu0 0.0
    %1241 = vmatpush1.msra.mxu0 0.0
    %1242 = vmatprep.subr.mxu0 0.0
    %1243 = vmatpush1.msra.mxu0 0.0
    %1244 = vmatprep.subr.mxu0 0.0
    %1245 = vmatpush1.msra.mxu0 0.0
    %1246 = vmatprep.subr.mxu0 0.0
    %1247 = vmatpush1.msra.mxu0 0.0
    %1248 = vmatprep.subr.mxu0 0.0
    %1249 = vmatpush1.msra.mxu0 0.0
    %1250 = vmatprep.subr.mxu0 0.0
    %1251 = vmatpush1.msra.mxu0 0.0
    %1252 = vmatprep.subr.mxu0 0.0
    %1253 = vmatpush1.msra.mxu0 0.0
    %1254 = vmatprep.subr.mxu0 0.0
    %1255 = vmatpush1.msra.mxu0 0.0
    %1256 = vmatprep.subr.mxu0 0.0
    %1257 = vmatpush1.msra.mxu0 0.0
    %1258 = vmatprep.subr.mxu0 0.0
    %1259 = vmatpush1.msra.mxu0 0.0
    %1260 = vmatprep.subr.mxu0 0.0
    %1261 = vmatpush1.msra.mxu0 0.0
    %1262 = vmatprep.subr.mxu0 0.0
    %1263 = vmatpush1.msra.mxu0 0.0
    %1264 = vmatprep.subr.mxu0 0.0
    %1265 = vmatpush1.msra.mxu0 0.0
    %1266 = vmatprep.subr.mxu0 0.0
    %1267 = vmatpush1.msra.mxu0 0.0
    %1268 = vmatprep.subr.mxu0 0.0
    %1269 = vmatpush1.msra.mxu0 0.0
    %1270 = vmatprep.subr.mxu0 0.0
    %1271 = vmatpush1.msra.mxu0 0.0
    %1272 = vmatprep.subr.mxu0 0.0
    %1273 = vmatpush1.msra.mxu0 0.0
    %1274 = vmatprep.subr.mxu0 0.0
    %1275 = vmatpush1.msra.mxu0 0.0
    %1276 = vmatprep.subr.mxu0 0.0
    %1277 = vmatpush1.msra.mxu0 0.0
    %1278 = vmatprep.subr.mxu0 0.0
    %1279 = vmatpush1.msra.mxu0 0.0
    %1280 = vmatprep.subr.mxu0 0.0
    %1281 = vmatpush1.msra.mxu0 0.0
    %1282 = vmatprep.subr.mxu0 0.0
    %1283 = vmatpush1.msra.mxu0 0.0
    %1284 = vmatprep.mubr.f32.mxu0 0.0
    %1285 = vmatmul.mubr.f32.gmra.mrb[0].mxu0 %v1215
    %v1286 = vpop.f32.mrb[0].mxu0
    %v1287 = vadd.f32 0.0, %v1286
    %v1288 = vpop.f32.mrb[0].mxu0
    %1289 = vmatprep.mubr.f32.mxu0 0.0
    %1290 = vmatmul.mubr.f32.gmra.mrb[0].mxu0 %v1218
    %v1291 = vpop.f32.mrb[0].mxu0
    %v1292 = vadd.f32 0.0, %v1291
    %v1293 = vpop.f32.mrb[0].mxu0
    %1294 = vdwg.mxu0
    %v1297 = vrot.slane %v1287, 6
    %v1298 = vrot.slane %v1292, 6
    %v1299 = vsel %vm190, %v1297, %v1298
    %1300 = vrot.lane.b32.xlu0 %v1297, 120
    %v1301 = vpop.permute.xlu0 %1300
    %1302 = vrot.lane.b32.xlu0 %v1299, 120
    %v1303 = vpop.permute.xlu0 %1302
    %v1306 = vrot.slane %v1287, 4
    %v1307 = vrot.slane %v1292, 4
    %v1308 = vsel %vm443, %v1306, %v1307
    %1309 = vrot.lane.b32.xlu0 %v1306, 112
    %v1310 = vpop.permute.xlu0 %1309
    %1311 = vrot.lane.b32.xlu0 %v1308, 112
    %v1312 = vpop.permute.xlu0 %1311
    %v1315 = vrot.slane %v1287, 2
    %v1316 = vrot.slane %v1292, 2
    %v1317 = vsel %vm453, %v1315, %v1316
    %1318 = vrot.lane.b32.xlu0 %v1315, 104
    %v1319 = vpop.permute.xlu0 %1318
    %1320 = vrot.lane.b32.xlu0 %v1317, 104
    %v1321 = vpop.permute.xlu0 %1320
    %v1323 = vsel %vm190, %v1292, %v1301
    %v1324 = vsel %vm443, %v1303, %v1310
    %v1325 = vsel %vm453, %v1312, %v1319
    %1329 = vrot.lane.b32.xlu0 %v1287, 96
    %v1330 = vpop.permute.xlu0 %1329
    %1331 = vrot.lane.b32.xlu0 %v1323, 96
    %v1332 = vpop.permute.xlu0 %1331
    %1333 = vrot.lane.b32.xlu0 %v1324, 96
    %v1334 = vpop.permute.xlu0 %1333
    %1335 = vrot.lane.b32.xlu0 %v1325, 96
    %v1336 = vpop.permute.xlu0 %1335
    %1337 = vrot.lane.b32.xlu0 %v1321, 96
    %v1338 = vpop.permute.xlu0 %1337
    %v1339 = vsel %vm478, %v1287, 0
    %v1341 = vsel %vm478, %v1323, 0
    %v1343 = vsel %vm478, %v1324, 0
    %v1345 = vsel %vm478, %v1325, 0
    %v1347 = vsel %vm478, %v1321, 0
    %v1349 = vsel %vm478, %v1330, 0
    %v1351 = vsel %vm478, %v1332, 0
    %v1353 = vsel %vm478, %v1334, 0
    %v1355 = vsel %vm478, %v1336, 0
    %v1357 = vsel %vm478, %v1338, 0
    %1359 = vmatprep.subr.mxu0 0.0
    %1360 = vmatpush1.xpose.msra.mxu0 %v1349
    %1361 = vmatprep.subr.mxu0 0.0
    %1362 = vmatpush1.xpose.msra.mxu0 %v1351
    %1363 = vmatprep.subr.mxu0 0.0
    %1364 = vmatpush1.xpose.msra.mxu0 %v1353
    %1365 = vmatprep.subr.mxu0 0.0
    %1366 = vmatpush1.xpose.msra.mxu0 %v1355
    %1367 = vmatprep.subr.mxu0 0.0
    %1368 = vmatpush1.xpose.msra.mxu0 %v1357
    %1369 = vmatprep.subr.mxu0 0.0
    %1370 = vmatpush1.xpose.msra.mxu0 0.0
    %1371 = vmatprep.subr.mxu0 0.0
    %1372 = vmatpush1.xpose.msra.mxu0 0.0
    %1373 = vmatprep.subr.mxu0 0.0
    %1374 = vmatpush1.xpose.msra.mxu0 0.0
    %1375 = vmatprep.subr.mxu0 0.0
    %1376 = vmatpush1.xpose.msra.mxu0 0.0
    %1377 = vmatprep.subr.mxu0 0.0
    %1378 = vmatpush1.xpose.msra.mxu0 0.0
    %1379 = vmatprep.subr.mxu0 0.0
    %1380 = vmatpush1.xpose.msra.mxu0 0.0
    %1381 = vmatprep.subr.mxu0 0.0
    %1382 = vmatpush1.xpose.msra.mxu0 0.0
    %1383 = vmatprep.subr.mxu0 0.0
    %1384 = vmatpush1.xpose.msra.mxu0 0.0
    %1385 = vmatprep.subr.mxu0 0.0
    %1386 = vmatpush1.xpose.msra.mxu0 0.0
    %1387 = vmatprep.subr.mxu0 0.0
    %1388 = vmatpush1.xpose.msra.mxu0 0.0
    %1389 = vmatprep.subr.mxu0 0.0
    %1390 = vmatpush1.xpose.msra.mxu0 0.0
    %1391 = vmatprep.subr.mxu0 0.0
    %1392 = vmatpush1.xpose.msra.mxu0 0.0
    %1393 = vmatprep.subr.mxu0 0.0
    %1394 = vmatpush1.xpose.msra.mxu0 0.0
    %1395 = vmatprep.subr.mxu0 0.0
    %1396 = vmatpush1.xpose.msra.mxu0 0.0
    %1397 = vmatprep.subr.mxu0 0.0
    %1398 = vmatpush1.xpose.msra.mxu0 0.0
    %1399 = vmatprep.subr.mxu0 0.0
    %1400 = vmatpush1.xpose.msra.mxu0 0.0
    %1401 = vmatprep.subr.mxu0 0.0
    %1402 = vmatpush1.xpose.msra.mxu0 0.0
    %1403 = vmatprep.subr.mxu0 0.0
    %1404 = vmatpush1.xpose.msra.mxu0 0.0
    %1405 = vmatprep.subr.mxu0 0.0
    %1406 = vmatpush1.xpose.msra.mxu0 0.0
    %1407 = vmatprep.subr.mxu0 0.0
    %1408 = vmatpush1.xpose.msra.mxu0 0.0
    %1409 = vmatprep.subr.mxu0 0.0
    %1410 = vmatpush1.xpose.msra.mxu0 0.0
    %1411 = vmatprep.subr.mxu0 0.0
    %1412 = vmatpush1.xpose.msra.mxu0 0.0
    %1413 = vmatprep.subr.mxu0 0.0
    %1414 = vmatpush1.xpose.msra.mxu0 0.0
    %1415 = vmatprep.subr.mxu0 0.0
    %1416 = vmatpush1.xpose.msra.mxu0 0.0
    %1417 = vmatprep.subr.mxu0 0.0
    %1418 = vmatpush1.xpose.msra.mxu0 0.0
    %1419 = vmatprep.subr.mxu0 0.0
    %1420 = vmatpush1.xpose.msra.mxu0 0.0
    %1421 = vmatprep.subr.mxu0 0.0
    %1422 = vmatpush1.xpose.msra.mxu0 0.0
    %1423 = vmatprep.mubr.f32.mxu0 0.0
    %1424 = vmatmul.mubr.f32.gmra.mrb[0].mxu0 %v1339
    %v1425 = vpop.f32.mrb[0].mxu0
    %v1426 = vadd.f32 %v309, %v1425
    %v1427 = vpop.f32.mrb[0].mxu0
    %1428 = vmatprep.mubr.f32.mxu0 0.0
    %1429 = vmatmul.mubr.f32.gmra.mrb[0].mxu0 %v1341
    %v1430 = vpop.f32.mrb[0].mxu0
    %v1431 = vadd.f32 %v310, %v1430
    %v1432 = vpop.f32.mrb[0].mxu0
    %1433 = vmatprep.mubr.f32.mxu0 0.0
    %1434 = vmatmul.mubr.f32.gmra.mrb[0].mxu0 %v1343
    %v1435 = vpop.f32.mrb[0].mxu0
    %v1436 = vadd.f32 %v311, %v1435
    %v1437 = vpop.f32.mrb[0].mxu0
    %1438 = vmatprep.mubr.f32.mxu0 0.0
    %1439 = vmatmul.mubr.f32.gmra.mrb[0].mxu0 %v1345
    %v1440 = vpop.f32.mrb[0].mxu0
    %v1441 = vadd.f32 %v312, %v1440
    %v1442 = vpop.f32.mrb[0].mxu0
    %1443 = vmatprep.mubr.f32.mxu0 0.0
    %1444 = vmatmul.mubr.f32.gmra.mrb[0].mxu0 %v1347
    %v1445 = vpop.f32.mrb[0].mxu0
    %v1446 = vadd.f32 %v313, %v1445
    %v1447 = vpop.f32.mrb[0].mxu0
    %1448 = vdwg.mxu0
    %v1449 = vsel %vm589, %v1426, -inf
    %1450 = vmax.xlane.f32.xlu0 %v1449
    %v1451 = vpop.xlane.xlu0 %1450
    %v1452 = vsel %vm589, %v1431, -inf
    %1453 = vmax.xlane.f32.xlu0 %v1452
    %v1454 = vpop.xlane.xlu0 %1453
    %v1455 = vsel %vm589, %v1436, -inf
    %1456 = vmax.xlane.f32.xlu0 %v1455
    %v1457 = vpop.xlane.xlu0 %1456
    %v1458 = vsel %vm589, %v1441, -inf
    %1459 = vmax.xlane.f32.xlu0 %v1458
    %v1460 = vpop.xlane.xlu0 %1459
    %v1461 = vsel %vm589, %v1446, -inf
    %1462 = vmax.xlane.f32.xlu0 %v1461
    %v1463 = vpop.xlane.xlu0 %1462
    %v1464 = vsub.f32 %v1426, %v1451
    %v1465 = vsub.f32 %v1431, %v1454
    %v1466 = vsub.f32 %v1436, %v1457
    %v1467 = vsub.f32 %v1441, %v1460
    %v1468 = vsub.f32 %v1446, %v1463
    %v1469 = vmul.f32 %v1464, 1.442695
    %v1470 = vpow.pop %v1469
    %v1471 = vmul.f32 %v1465, 1.442695
    %v1472 = vpow.pop %v1471
    %v1473 = vmul.f32 %v1466, 1.442695
    %v1474 = vpow.pop %v1473
    %v1475 = vmul.f32 %v1467, 1.442695
    %v1476 = vpow.pop %v1475
    %v1477 = vmul.f32 %v1468, 1.442695
    %v1478 = vpow.pop %v1477
    %v1479 = vsel %vm589, %v1470, 0.0
    %1480 = vadd.xlane.f32.xlu0 %v1479
    %v1481 = vpop.xlane.xlu0 %1480
    %v1482 = vsel %vm589, %v1472, 0.0
    %1483 = vadd.xlane.f32.xlu0 %v1482
    %v1484 = vpop.xlane.xlu0 %1483
    %v1485 = vsel %vm589, %v1474, 0.0
    %1486 = vadd.xlane.f32.xlu0 %v1485
    %v1487 = vpop.xlane.xlu0 %1486
    %v1488 = vsel %vm589, %v1476, 0.0
    %1489 = vadd.xlane.f32.xlu0 %v1488
    %v1490 = vpop.xlane.xlu0 %1489
    %v1491 = vsel %vm589, %v1478, 0.0
    %1492 = vadd.xlane.f32.xlu0 %v1491
    %v1493 = vpop.xlane.xlu0 %1492
    %v1494 = vrcp.pop %v1481
    %v1495 = vrcp.pop %v1484
    %v1496 = vrcp.pop %v1487
    %v1497 = vrcp.pop %v1490
    %v1498 = vrcp.pop %v1493
    %v1499 = vmul.f32 %v1470, %v1494
    %v1500 = vmul.f32 %v1472, %v1495
    %v1501 = vmul.f32 %v1474, %v1496
    %v1502 = vmul.f32 %v1476, %v1497
    %v1503 = vmul.f32 %v1478, %v1498
    %1504 = vrot.lane.b32.xlu0 %v1287, 64
    %v1505 = vpop.permute.xlu0 %1504
    %1506 = vrot.lane.b32.xlu0 %v1323, 64
    %v1507 = vpop.permute.xlu0 %1506
    %1508 = vrot.lane.b32.xlu0 %v1324, 64
    %v1509 = vpop.permute.xlu0 %1508
    %1510 = vrot.lane.b32.xlu0 %v1325, 64
    %v1511 = vpop.permute.xlu0 %1510
    %1512 = vrot.lane.b32.xlu0 %v1321, 64
    %v1513 = vpop.permute.xlu0 %1512
    %v1520 = vsel %vm589, %v1499, 0
    %v1523 = vsel %vm589, %v1500, 0
    %v1526 = vsel %vm589, %v1501, 0
    %v1529 = vsel %vm589, %v1502, 0
    %v1532 = vsel %vm589, %v1503, 0
    %1534 = vmatprep.subr.mxu0 0.0
    %1535 = vmatpush1.msra.mxu0 %v1505
    %1536 = vmatprep.subr.mxu0 0.0
    %1537 = vmatpush1.msra.mxu0 %v1507
    %1538 = vmatprep.subr.mxu0 0.0
    %1539 = vmatpush1.msra.mxu0 %v1509
    %1540 = vmatprep.subr.mxu0 0.0
    %1541 = vmatpush1.msra.mxu0 %v1511
    %1542 = vmatprep.subr.mxu0 0.0
    %1543 = vmatpush1.msra.mxu0 %v1513
    %1544 = vmatprep.subr.mxu0 0.0
    %1545 = vmatpush1.msra.mxu0 0.0
    %1546 = vmatprep.subr.mxu0 0.0
    %1547 = vmatpush1.msra.mxu0 0.0
    %1548 = vmatprep.subr.mxu0 0.0
    %1549 = vmatpush1.msra.mxu0 0.0
    %1550 = vmatprep.subr.mxu0 0.0
    %1551 = vmatpush1.msra.mxu0 0.0
    %1552 = vmatprep.subr.mxu0 0.0
    %1553 = vmatpush1.msra.mxu0 0.0
    %1554 = vmatprep.subr.mxu0 0.0
    %1555 = vmatpush1.msra.mxu0 0.0
    %1556 = vmatprep.subr.mxu0 0.0
    %1557 = vmatpush1.msra.mxu0 0.0
    %1558 = vmatprep.subr.mxu0 0.0
    %1559 = vmatpush1.msra.mxu0 0.0
    %1560 = vmatprep.subr.mxu0 0.0
    %1561 = vmatpush1.msra.mxu0 0.0
    %1562 = vmatprep.subr.mxu0 0.0
    %1563 = vmatpush1.msra.mxu0 0.0
    %1564 = vmatprep.subr.mxu0 0.0
    %1565 = vmatpush1.msra.mxu0 0.0
    %1566 = vmatprep.subr.mxu0 0.0
    %1567 = vmatpush1.msra.mxu0 0.0
    %1568 = vmatprep.subr.mxu0 0.0
    %1569 = vmatpush1.msra.mxu0 0.0
    %1570 = vmatprep.subr.mxu0 0.0
    %1571 = vmatpush1.msra.mxu0 0.0
    %1572 = vmatprep.subr.mxu0 0.0
    %1573 = vmatpush1.msra.mxu0 0.0
    %1574 = vmatprep.subr.mxu0 0.0
    %1575 = vmatpush1.msra.mxu0 0.0
    %1576 = vmatprep.subr.mxu0 0.0
    %1577 = vmatpush1.msra.mxu0 0.0
    %1578 = vmatprep.subr.mxu0 0.0
    %1579 = vmatpush1.msra.mxu0 0.0
    %1580 = vmatprep.subr.mxu0 0.0
    %1581 = vmatpush1.msra.mxu0 0.0
    %1582 = vmatprep.subr.mxu0 0.0
    %1583 = vmatpush1.msra.mxu0 0.0
    %1584 = vmatprep.subr.mxu0 0.0
    %1585 = vmatpush1.msra.mxu0 0.0
    %1586 = vmatprep.subr.mxu0 0.0
    %1587 = vmatpush1.msra.mxu0 0.0
    %1588 = vmatprep.subr.mxu0 0.0
    %1589 = vmatpush1.msra.mxu0 0.0
    %1590 = vmatprep.subr.mxu0 0.0
    %1591 = vmatpush1.msra.mxu0 0.0
    %1592 = vmatprep.subr.mxu0 0.0
    %1593 = vmatpush1.msra.mxu0 0.0
    %1594 = vmatprep.subr.mxu0 0.0
    %1595 = vmatpush1.msra.mxu0 0.0
    %1596 = vmatprep.subr.mxu0 0.0
    %1597 = vmatpush1.msra.mxu0 0.0
    %1598 = vmatprep.mubr.f32.mxu0 0.0
    %1599 = vmatmul.mubr.f32.gmra.mrb[0].mxu0 %v1520
    %v1600 = vpop.f32.mrb[0].mxu0
    %v1601 = vadd.f32 0.0, %v1600
    %v1602 = vpop.f32.mrb[0].mxu0
    %1603 = vmatprep.mubr.f32.mxu0 0.0
    %1604 = vmatmul.mubr.f32.gmra.mrb[0].mxu0 %v1523
    %v1605 = vpop.f32.mrb[0].mxu0
    %v1606 = vadd.f32 0.0, %v1605
    %v1607 = vpop.f32.mrb[0].mxu0
    %1608 = vmatprep.mubr.f32.mxu0 0.0
    %1609 = vmatmul.mubr.f32.gmra.mrb[0].mxu0 %v1526
    %v1610 = vpop.f32.mrb[0].mxu0
    %v1611 = vadd.f32 0.0, %v1610
    %v1612 = vpop.f32.mrb[0].mxu0
    %1613 = vmatprep.mubr.f32.mxu0 0.0
    %1614 = vmatmul.mubr.f32.gmra.mrb[0].mxu0 %v1529
    %v1615 = vpop.f32.mrb[0].mxu0
    %v1616 = vadd.f32 0.0, %v1615
    %v1617 = vpop.f32.mrb[0].mxu0
    %1618 = vmatprep.mubr.f32.mxu0 0.0
    %1619 = vmatmul.mubr.f32.gmra.mrb[0].mxu0 %v1532
    %v1620 = vpop.f32.mrb[0].mxu0
    %v1621 = vadd.f32 0.0, %v1620
    %v1622 = vpop.f32.mrb[0].mxu0
    %1623 = vdwg.mxu0
    %v1624 = vld [vmem:[%s2 + $0x1a8] sm:$0xff]
    %v1626 = vsel %vm478, %v1601, 0
    %v1629 = vsel %vm478, %v1606, 0
    %v1632 = vsel %vm478, %v1611, 0
    %v1635 = vsel %vm478, %v1616, 0
    %v1638 = vsel %vm478, %v1621, 0
    %1640 = vmatprep.subr.mxu0 0.0
    %1641 = vmatpush1.msra.mxu0 %v1624
    %1642 = vmatprep.subr.mxu0 0.0
    %1643 = vmatpush1.msra.mxu0 0.0
    %1644 = vmatprep.subr.mxu0 0.0
    %1645 = vmatpush1.msra.mxu0 0.0
    %1646 = vmatprep.subr.mxu0 0.0
    %1647 = vmatpush1.msra.mxu0 0.0
    %1648 = vmatprep.subr.mxu0 0.0
    %1649 = vmatpush1.msra.mxu0 0.0
    %1650 = vmatprep.subr.mxu0 0.0
    %1651 = vmatpush1.msra.mxu0 0.0
    %1652 = vmatprep.subr.mxu0 0.0
    %1653 = vmatpush1.msra.mxu0 0.0
    %1654 = vmatprep.subr.mxu0 0.0
    %1655 = vmatpush1.msra.mxu0 0.0
    %1656 = vmatprep.subr.mxu0 0.0
    %1657 = vmatpush1.msra.mxu0 0.0
    %1658 = vmatprep.subr.mxu0 0.0
    %1659 = vmatpush1.msra.mxu0 0.0
    %1660 = vmatprep.subr.mxu0 0.0
    %1661 = vmatpush1.msra.mxu0 0.0
    %1662 = vmatprep.subr.mxu0 0.0
    %1663 = vmatpush1.msra.mxu0 0.0
    %1664 = vmatprep.subr.mxu0 0.0
    %1665 = vmatpush1.msra.mxu0 0.0
    %1666 = vmatprep.subr.mxu0 0.0
    %1667 = vmatpush1.msra.mxu0 0.0
    %1668 = vmatprep.subr.mxu0 0.0
    %1669 = vmatpush1.msra.mxu0 0.0
    %1670 = vmatprep.subr.mxu0 0.0
    %1671 = vmatpush1.msra.mxu0 0.0
    %1672 = vmatprep.subr.mxu0 0.0
    %1673 = vmatpush1.msra.mxu0 0.0
    %1674 = vmatprep.subr.mxu0 0.0
    %1675 = vmatpush1.msra.mxu0 0.0
    %1676 = vmatprep.subr.mxu0 0.0
    %1677 = vmatpush1.msra.mxu0 0.0
    %1678 = vmatprep.subr.mxu0 0.0
    %1679 = vmatpush1.msra.mxu0 0.0
    %1680 = vmatprep.subr.mxu0 0.0
    %1681 = vmatpush1.msra.mxu0 0.0
    %1682 = vmatprep.subr.mxu0 0.0
    %1683 = vmatpush1.msra.mxu0 0.0
    %1684 = vmatprep.subr.mxu0 0.0
    %1685 = vmatpush1.msra.mxu0 0.0
    %1686 = vmatprep.subr.mxu0 0.0
    %1687 = vmatpush1.msra.mxu0 0.0
    %1688 = vmatprep.subr.mxu0 0.0
    %1689 = vmatpush1.msra.mxu0 0.0
    %1690 = vmatprep.subr.mxu0 0.0
    %1691 = vmatpush1.msra.mxu0 0.0
    %1692 = vmatprep.subr.mxu0 0.0
    %1693 = vmatpush1.msra.mxu0 0.0
    %1694 = vmatprep.subr.mxu0 0.0
    %1695 = vmatpush1.msra.mxu0 0.0
    %1696 = vmatprep.subr.mxu0 0.0
    %1697 = vmatpush1.msra.mxu0 0.0
    %1698 = vmatprep.subr.mxu0 0.0
    %1699 = vmatpush1.msra.mxu0 0.0
    %1700 = vmatprep.subr.mxu0 0.0
    %1701 = vmatpush1.msra.mxu0 0.0
    %1702 = vmatprep.subr.mxu0 0.0
    %1703 = vmatpush1.msra.mxu0 0.0
    %1704 = vmatprep.mubr.f32.mxu0 0.0
    %1705 = vmatmul.mubr.f32.gmra.mrb[0].mxu0 %v1626
    %v1706 = vpop.f32.mrb[0].mxu0
    %v1707 = vadd.f32 0.0, %v1706
    %v1708 = vpop.f32.mrb[0].mxu0
    %1709 = vmatprep.mubr.f32.mxu0 0.0
    %1710 = vmatmul.mubr.f32.gmra.mrb[0].mxu0 %v1629
    %v1711 = vpop.f32.mrb[0].mxu0
    %v1712 = vadd.f32 0.0, %v1711
    %v1713 = vpop.f32.mrb[0].mxu0
    %1714 = vmatprep.mubr.f32.mxu0 0.0
    %1715 = vmatmul.mubr.f32.gmra.mrb[0].mxu0 %v1632
    %v1716 = vpop.f32.mrb[0].mxu0
    %v1717 = vadd.f32 0.0, %v1716
    %v1718 = vpop.f32.mrb[0].mxu0
    %1719 = vmatprep.mubr.f32.mxu0 0.0
    %1720 = vmatmul.mubr.f32.gmra.mrb[0].mxu0 %v1635
    %v1721 = vpop.f32.mrb[0].mxu0
    %v1722 = vadd.f32 0.0, %v1721
    %v1723 = vpop.f32.mrb[0].mxu0
    %1724 = vmatprep.mubr.f32.mxu0 0.0
    %1725 = vmatmul.mubr.f32.gmra.mrb[0].mxu0 %v1638
    %v1726 = vpop.f32.mrb[0].mxu0
    %v1727 = vadd.f32 0.0, %v1726
    %v1728 = vpop.f32.mrb[0].mxu0
    %1729 = vdwg.mxu0
    %v1732 = vrot.slane %v1712, 2
    %v1733 = vrot.slane %v1717, 2
    %v1734 = vsel %vm453, %v1732, %v1733
    %1735 = vrot.lane.b32.xlu0 %v1734, 96
    %v1736 = vpop.permute.xlu0 %1735
    %1737 = vrot.lane.b32.xlu0 %v1733, 96
    %v1738 = vpop.permute.xlu0 %1737
    %v1741 = vadd.f32 %v1707, %v1736
    %v1742 = vadd.f32 %v1712, %v1738
    %v1744 = vrot.slane %v1717, 4
    %v1745 = vrot.slane %v1722, 4
    %v1746 = vsel %vm443, %v1744, %v1745
    %1747 = vrot.lane.b32.xlu0 %v1746, 64
    %v1748 = vpop.permute.xlu0 %1747
    %1749 = vrot.lane.b32.xlu0 %v1745, 64
    %v1750 = vpop.permute.xlu0 %1749
    %v1753 = vadd.f32 %v1741, %v1748
    %v1754 = vadd.f32 %v1742, %v1750
    %v1756 = vrot.slane %v1722, 6
    %v1757 = vrot.slane %v1727, 6
    %v1758 = vsel %vm190, %v1756, %v1757
    %1759 = vrot.lane.b32.xlu0 %v1758, 32
    %v1760 = vpop.permute.xlu0 %1759
    %1761 = vrot.lane.b32.xlu0 %v1757, 32
    %v1762 = vpop.permute.xlu0 %1761
    %v1765 = vadd.f32 %v1753, %v1760
    %v1766 = vadd.f32 %v1754, %v1762
    %v1767 = vld [vmem:[%s1 + $0x27] ss:$0 sm:$0xff]
    %v1768 = vadd.f32 %v1765, %v1767
    %v1769 = vadd.f32 %v1766, %v1767
    %v1770 = vadd.f32 %v1768, %v1176
    %v1771 = vadd.f32 %v1769, %v1177
    %v1772 = vld [vmem:[%s1 + $0x30] ss:$0 sm:$0xff]
    %v1773 = vld [vmem:[%s1 + $0x31] ss:$0 sm:$0xff]
    %v1774 = vsel %vm168, %v1770, 0.0
    %1775 = vadd.xlane.f32.xlu0 %v1774
    %v1776 = vpop.xlane.xlu0 %1775
    %v1777 = vsel %vm319, %v1771, 0.0
    %1778 = vadd.xlane.f32.xlu0 %v1777
    %v1779 = vpop.xlane.xlu0 %1778
    %v1780 = vmul.f32 %v1776, %v172
    %v1781 = vmul.f32 %v1779, %v172
    %v1782 = vsub.f32 %v1770, %v1780
    %v1783 = vsub.f32 %v1771, %v1781
    %v1784 = vmul.f32 %v1782, %v1782
    %v1785 = vmul.f32 %v1783, %v1783
    %v1786 = vsel %vm168, %v1784, 0.0
    %1787 = vadd.xlane.f32.xlu0 %v1786
    %v1788 = vpop.xlane.xlu0 %1787
    %v1789 = vsel %vm319, %v1785, 0.0
    %1790 = vadd.xlane.f32.xlu0 %v1789
    %v1791 = vpop.xlane.xlu0 %1790
    %v1792 = vmul.f32 %v1788, %v172
    %v1793 = vmul.f32 %v1791, %v172
    %v1794 = vadd.f32 %v1792, 1e-05
    %v1795 = vadd.f32 %v1793, 1e-05
    %v1796 = vrsqrt.pop %v1794
    %v1797 = vrsqrt.pop %v1795
    %v1798 = vmul.f32 %v1782, %v1796
    %v1799 = vmul.f32 %v1783, %v1797
    %v1800 = vmul.f32 %v1798, %v1772
    %v1801 = vmul.f32 %v1799, %v1772
    %v1802 = vadd.f32 %v1800, %v1773
    %v1803 = vadd.f32 %v1801, %v1773
    %v1804 = vld [vmem:[%s2 + $0x1b0] sm:$0xff]
    %v1805 = vld [vmem:[%s2 + $0x1b8] sm:$0xff]
    %v1806 = vld [vmem:[%s2 + $0x1c0] sm:$0xff]
    %v1807 = vld [vmem:[%s2 + $0x1c8] sm:$0xff]
    %v1808 = vld [vmem:[%s1 + $0x32] ss:$0 sm:$0xff]
    %v1810 = vsel %vm168, %v1802, 0
    %v1813 = vsel %vm168, %v1803, 0
    %1815 = vmatprep.subr.mxu0 0.0
    %1816 = vmatpush1.msra.mxu0 %v1804
    %1817 = vmatprep.subr.mxu0 0.0
    %1818 = vmatpush1.msra.mxu0 %v1805
    %1819 = vmatprep.subr.mxu0 0.0
    %1820 = vmatpush1.msra.mxu0 %v1806
    %1821 = vmatprep.subr.mxu0 0.0
    %1822 = vmatpush1.msra.mxu0 %v1807
    %1823 = vmatprep.subr.mxu0 0.0
    %1824 = vmatpush1.msra.mxu0 0.0
    %1825 = vmatprep.subr.mxu0 0.0
    %1826 = vmatpush1.msra.mxu0 0.0
    %1827 = vmatprep.subr.mxu0 0.0
    %1828 = vmatpush1.msra.mxu0 0.0
    %1829 = vmatprep.subr.mxu0 0.0
    %1830 = vmatpush1.msra.mxu0 0.0
    %1831 = vmatprep.subr.mxu0 0.0
    %1832 = vmatpush1.msra.mxu0 0.0
    %1833 = vmatprep.subr.mxu0 0.0
    %1834 = vmatpush1.msra.mxu0 0.0
    %1835 = vmatprep.subr.mxu0 0.0
    %1836 = vmatpush1.msra.mxu0 0.0
    %1837 = vmatprep.subr.mxu0 0.0
    %1838 = vmatpush1.msra.mxu0 0.0
    %1839 = vmatprep.subr.mxu0 0.0
    %1840 = vmatpush1.msra.mxu0 0.0
    %1841 = vmatprep.subr.mxu0 0.0
    %1842 = vmatpush1.msra.mxu0 0.0
    %1843 = vmatprep.subr.mxu0 0.0
    %1844 = vmatpush1.msra.mxu0 0.0
    %1845 = vmatprep.subr.mxu0 0.0
    %1846 = vmatpush1.msra.mxu0 0.0
    %1847 = vmatprep.subr.mxu0 0.0
    %1848 = vmatpush1.msra.mxu0 0.0
    %1849 = vmatprep.subr.mxu0 0.0
    %1850 = vmatpush1.msra.mxu0 0.0
    %1851 = vmatprep.subr.mxu0 0.0
    %1852 = vmatpush1.msra.mxu0 0.0
    %1853 = vmatprep.subr.mxu0 0.0
    %1854 = vmatpush1.msra.mxu0 0.0
    %1855 = vmatprep.subr.mxu0 0.0
    %1856 = vmatpush1.msra.mxu0 0.0
    %1857 = vmatprep.subr.mxu0 0.0
    %1858 = vmatpush1.msra.mxu0 0.0
    %1859 = vmatprep.subr.mxu0 0.0
    %1860 = vmatpush1.msra.mxu0 0.0
    %1861 = vmatprep.subr.mxu0 0.0
    %1862 = vmatpush1.msra.mxu0 0.0
    %1863 = vmatprep.subr.mxu0 0.0
    %1864 = vmatpush1.msra.mxu0 0.0
    %1865 = vmatprep.subr.mxu0 0.0
    %1866 = vmatpush1.msra.mxu0 0.0
    %1867 = vmatprep.subr.mxu0 0.0
    %1868 = vmatpush1.msra.mxu0 0.0
    %1869 = vmatprep.subr.mxu0 0.0
    %1870 = vmatpush1.msra.mxu0 0.0
    %1871 = vmatprep.subr.mxu0 0.0
    %1872 = vmatpush1.msra.mxu0 0.0
    %1873 = vmatprep.subr.mxu0 0.0
    %1874 = vmatpush1.msra.mxu0 0.0
    %1875 = vmatprep.subr.mxu0 0.0
    %1876 = vmatpush1.msra.mxu0 0.0
    %1877 = vmatprep.subr.mxu0 0.0
    %1878 = vmatpush1.msra.mxu0 0.0
    %1879 = vmatprep.mubr.f32.mxu0 0.0
    %1880 = vmatmul.mubr.f32.gmra.mrb[0].mxu0 %v1810
    %v1881 = vpop.f32.mrb[0].mxu0
    %v1882 = vadd.f32 %v1808, %v1881
    %v1883 = vpop.f32.mrb[0].mxu0
    %1884 = vmatprep.mubr.f32.mxu0 0.0
    %1885 = vmatmul.mubr.f32.gmra.mrb[0].mxu0 %v1813
    %v1886 = vpop.f32.mrb[0].mxu0
    %v1887 = vadd.f32 %v1808, %v1886
    %v1888 = vpop.f32.mrb[0].mxu0
    %1889 = vdwg.mxu0
    %v1890 = vmul.f32 %v1882, 0.70710677
    %v1891 = vmul.f32 %v1887, 0.70710677
    %v1892 = vand.u32 2147483647, %v1890
    %v1893 = vand.u32 2147483647, %v1891
    %v1894 = vmul.f32 %v1892, 0.3275911
    %v1895 = vmul.f32 %v1893, 0.3275911
    %v1896 = vadd.f32 %v1894, 1.0
    %v1897 = vadd.f32 %v1895, 1.0
    %v1898 = vrcp.pop %v1896
    %v1899 = vmul.f32 1.0, %v1898
    %v1900 = vrcp.pop %v1897
    %v1901 = vmul.f32 1.0, %v1900
    %v1902 = vmul.f32 %v1899, 1.0614054
    %v1903 = vmul.f32 %v1901, 1.0614054
    %v1904 = vsub.f32 %v1902, 1.4531521
    %v1905 = vsub.f32 %v1903, 1.4531521
    %v1906 = vmul.f32 %v1904, %v1899
    %v1907 = vmul.f32 %v1905, %v1901
    %v1908 = vadd.f32 %v1906, 1.4214138
    %v1909 = vadd.f32 %v1907, 1.4214138
    %v1910 = vmul.f32 %v1908, %v1899
    %v1911 = vmul.f32 %v1909, %v1901
    %v1912 = vsub.f32 %v1910, 0.28449672
    %v1913 = vsub.f32 %v1911, 0.28449672
    %v1914 = vmul.f32 %v1912, %v1899
    %v1915 = vmul.f32 %v1913, %v1901
    %v1916 = vadd.f32 %v1914, 0.2548296
    %v1917 = vadd.f32 %v1915, 0.2548296
    %v1918 = vmul.f32 %v1916, %v1899
    %v1919 = vmul.f32 %v1917, %v1901
    %v1920 = vsub.f32 0.0, %v1890
    %v1921 = vsub.f32 0.0, %v1891
    %v1922 = vmul.f32 %v1920, %v1890
    %v1923 = vmul.f32 %v1921, %v1891
    %v1924 = vmul.f32 %v1922, 1.442695
    %v1925 = vpow.pop %v1924
    %v1926 = vmul.f32 %v1923, 1.442695
    %v1927 = vpow.pop %v1926
    %v1928 = vmul.f32 %v1918, %v1925
    %v1929 = vmul.f32 %v1919, %v1927
    %v1930 = vsub.f32 1.0, %v1928
    %v1931 = vsub.f32 1.0, %v1929
    %vm1932 = vcmp.ge.f32.partialorder %v1890, 0.0
    %vm1933 = vcmp.ge.f32.partialorder %v1891, 0.0
    %v1934 = vsub.f32 0.0, %v1930
    %v1935 = vsub.f32 0.0, %v1931
    %v1936 = vsel %vm1932, %v1930, %v1934
    %v1937 = vsel %vm1933, %v1931, %v1935
    %v1938 = vmul.f32 %v1882, 0.5
    %v1939 = vmul.f32 %v1887, 0.5
    %v1940 = vadd.f32 %v1936, 1.0
    %v1941 = vadd.f32 %v1937, 1.0
    %v1942 = vmul.f32 %v1938, %v1940
    %v1943 = vmul.f32 %v1939, %v1941
    %v1944 = vld [vmem:[%s2 + $0x1d0] sm:$0xff]
    %v1945 = vld [vmem:[%s2 + $0x1d8] sm:$0xff]
    %v1946 = vld [vmem:[%s2 + $0x1e0] sm:$0xff]
    %v1947 = vld [vmem:[%s2 + $0x1e8] sm:$0xff]
    %v1948 = vld [vmem:[%s2 + $0x1f0] sm:$0xff]
    %v1949 = vld [vmem:[%s2 + $0x1f8] sm:$0xff]
    %v1950 = vld [vmem:[%s2 + $0x200] sm:$0xff]
    %v1951 = vld [vmem:[%s2 + $0x208] sm:$0xff]
    %v1952 = vld [vmem:[%s1 + $0x33] ss:$0 sm:$0xff]
    %v1954 = vsel %vm1094, %v1942, 0
    %v1957 = vsel %vm1094, %v1943, 0
    %1959 = vmatprep.subr.mxu0 0.0
    %1960 = vmatpush1.msra.mxu0 %v1944
    %1961 = vmatprep.subr.mxu0 0.0
    %1962 = vmatpush1.msra.mxu0 %v1945
    %1963 = vmatprep.subr.mxu0 0.0
    %1964 = vmatpush1.msra.mxu0 %v1946
    %1965 = vmatprep.subr.mxu0 0.0
    %1966 = vmatpush1.msra.mxu0 %v1947
    %1967 = vmatprep.subr.mxu0 0.0
    %1968 = vmatpush1.msra.mxu0 %v1948
    %1969 = vmatprep.subr.mxu0 0.0
    %1970 = vmatpush1.msra.mxu0 %v1949
    %1971 = vmatprep.subr.mxu0 0.0
    %1972 = vmatpush1.msra.mxu0 %v1950
    %1973 = vmatprep.subr.mxu0 0.0
    %1974 = vmatpush1.msra.mxu0 %v1951
    %1975 = vmatprep.subr.mxu0 0.0
    %1976 = vmatpush1.msra.mxu0 0.0
    %1977 = vmatprep.subr.mxu0 0.0
    %1978 = vmatpush1.msra.mxu0 0.0
    %1979 = vmatprep.subr.mxu0 0.0
    %1980 = vmatpush1.msra.mxu0 0.0
    %1981 = vmatprep.subr.mxu0 0.0
    %1982 = vmatpush1.msra.mxu0 0.0
    %1983 = vmatprep.subr.mxu0 0.0
    %1984 = vmatpush1.msra.mxu0 0.0
    %1985 = vmatprep.subr.mxu0 0.0
    %1986 = vmatpush1.msra.mxu0 0.0
    %1987 = vmatprep.subr.mxu0 0.0
    %1988 = vmatpush1.msra.mxu0 0.0
    %1989 = vmatprep.subr.mxu0 0.0
    %1990 = vmatpush1.msra.mxu0 0.0
    %1991 = vmatprep.subr.mxu0 0.0
    %1992 = vmatpush1.msra.mxu0 0.0
    %1993 = vmatprep.subr.mxu0 0.0
    %1994 = vmatpush1.msra.mxu0 0.0
    %1995 = vmatprep.subr.mxu0 0.0
    %1996 = vmatpush1.msra.mxu0 0.0
    %1997 = vmatprep.subr.mxu0 0.0
    %1998 = vmatpush1.msra.mxu0 0.0
    %1999 = vmatprep.subr.mxu0 0.0
    %2000 = vmatpush1.msra.mxu0 0.0
    %2001 = vmatprep.subr.mxu0 0.0
    %2002 = vmatpush1.msra.mxu0 0.0
    %2003 = vmatprep.subr.mxu0 0.0
    %2004 = vmatpush1.msra.mxu0 0.0
    %2005 = vmatprep.subr.mxu0 0.0
    %2006 = vmatpush1.msra.mxu0 0.0
    %2007 = vmatprep.subr.mxu0 0.0
    %2008 = vmatpush1.msra.mxu0 0.0
    %2009 = vmatprep.subr.mxu0 0.0
    %2010 = vmatpush1.msra.mxu0 0.0
    %2011 = vmatprep.subr.mxu0 0.0
    %2012 = vmatpush1.msra.mxu0 0.0
    %2013 = vmatprep.subr.mxu0 0.0
    %2014 = vmatpush1.msra.mxu0 0.0
    %2015 = vmatprep.subr.mxu0 0.0
    %2016 = vmatpush1.msra.mxu0 0.0
    %2017 = vmatprep.subr.mxu0 0.0
    %2018 = vmatpush1.msra.mxu0 0.0
    %2019 = vmatprep.subr.mxu0 0.0
    %2020 = vmatpush1.msra.mxu0 0.0
    %2021 = vmatprep.subr.mxu0 0.0
    %2022 = vmatpush1.msra.mxu0 0.0
    %2023 = vmatprep.mubr.f32.mxu0 0.0
    %2024 = vmatmul.mubr.f32.gmra.mrb[0].mxu0 %v1954
    %v2025 = vpop.f32.mrb[0].mxu0
    %v2026 = vadd.f32 %v1952, %v2025
    %v2027 = vpop.f32.mrb[0].mxu0
    %2028 = vmatprep.mubr.f32.mxu0 0.0
    %2029 = vmatmul.mubr.f32.gmra.mrb[0].mxu0 %v1957
    %v2030 = vpop.f32.mrb[0].mxu0
    %v2031 = vpop.f32.mrb[0].mxu0
    %2032 = vdwg.mxu0
    %v2033 = vadd.f32 %v2026, %v1770
    %v2034 = vld [vmem:[%s1 + $0x34] ss:$0 sm:$0xff]
    %v2035 = vld [vmem:[%s1 + $0x35] ss:$0 sm:$0xff]
    %v2036 = vsel %vm319, %v2033, 0.0
    %2037 = vadd.xlane.f32.xlu0 %v2036
    %v2038 = vpop.xlane.xlu0 %2037
    %v2039 = vmul.f32 %v2038, %v172
    %v2040 = vsub.f32 %v2033, %v2039
    %v2041 = vmul.f32 %v2040, %v2040
    %v2042 = vsel %vm319, %v2041, 0.0
    %2043 = vadd.xlane.f32.xlu0 %v2042
    %v2044 = vpop.xlane.xlu0 %2043
    %v2045 = vmul.f32 %v2044, %v172
    %v2046 = vadd.f32 %v2045, 1e-05
    %v2047 = vrsqrt.pop %v2046
    %v2048 = vmul.f32 %v2040, %v2047
    %v2049 = vmul.f32 %v2048, %v2034
    %v2050 = vadd.f32 %v2049, %v2035
    %v2051 = vld [vmem:[%s2 + $0x210] sm:$0xff]
    %v2052 = vld [vmem:[%s2 + $0x218] sm:$0xff]
    %v2053 = vld [vmem:[%s2 + $0x220] sm:$0xff]
    %v2054 = vld [vmem:[%s2 + $0x228] sm:$0xff]
    %v2055 = vld [vmem:[%s1 + $0x36] ss:$0 sm:$0xff]
    %v2057 = vsel %vm168, %v2050, 0
    %2059 = vmatprep.subr.mxu0 0.0
    %2060 = vmatpush1.msra.mxu0 %v2051
    %2061 = vmatprep.subr.mxu0 0.0
    %2062 = vmatpush1.msra.mxu0 %v2052
    %2063 = vmatprep.subr.mxu0 0.0
    %2064 = vmatpush1.msra.mxu0 %v2053
    %2065 = vmatprep.subr.mxu0 0.0
    %2066 = vmatpush1.msra.mxu0 %v2054
    %2067 = vmatprep.subr.mxu0 0.0
    %2068 = vmatpush1.msra.mxu0 0.0
    %2069 = vmatprep.subr.mxu0 0.0
    %2070 = vmatpush1.msra.mxu0 0.0
    %2071 = vmatprep.subr.mxu0 0.0
    %2072 = vmatpush1.msra.mxu0 0.0
    %2073 = vmatprep.subr.mxu0 0.0
    %2074 = vmatpush1.msra.mxu0 0.0
    %2075 = vmatprep.subr.mxu0 0.0
    %2076 = vmatpush1.msra.mxu0 0.0
    %2077 = vmatprep.subr.mxu0 0.0
    %2078 = vmatpush1.msra.mxu0 0.0
    %2079 = vmatprep.subr.mxu0 0.0
    %2080 = vmatpush1.msra.mxu0 0.0
    %2081 = vmatprep.subr.mxu0 0.0
    %2082 = vmatpush1.msra.mxu0 0.0
    %2083 = vmatprep.subr.mxu0 0.0
    %2084 = vmatpush1.msra.mxu0 0.0
    %2085 = vmatprep.subr.mxu0 0.0
    %2086 = vmatpush1.msra.mxu0 0.0
    %2087 = vmatprep.subr.mxu0 0.0
    %2088 = vmatpush1.msra.mxu0 0.0
    %2089 = vmatprep.subr.mxu0 0.0
    %2090 = vmatpush1.msra.mxu0 0.0
    %2091 = vmatprep.subr.mxu0 0.0
    %2092 = vmatpush1.msra.mxu0 0.0
    %2093 = vmatprep.subr.mxu0 0.0
    %2094 = vmatpush1.msra.mxu0 0.0
    %2095 = vmatprep.subr.mxu0 0.0
    %2096 = vmatpush1.msra.mxu0 0.0
    %2097 = vmatprep.subr.mxu0 0.0
    %2098 = vmatpush1.msra.mxu0 0.0
    %2099 = vmatprep.subr.mxu0 0.0
    %2100 = vmatpush1.msra.mxu0 0.0
    %2101 = vmatprep.subr.mxu0 0.0
    %2102 = vmatpush1.msra.mxu0 0.0
    %2103 = vmatprep.subr.mxu0 0.0
    %2104 = vmatpush1.msra.mxu0 0.0
    %2105 = vmatprep.subr.mxu0 0.0
    %2106 = vmatpush1.msra.mxu0 0.0
    %2107 = vmatprep.subr.mxu0 0.0
    %2108 = vmatpush1.msra.mxu0 0.0
    %2109 = vmatprep.subr.mxu0 0.0
    %2110 = vmatpush1.msra.mxu0 0.0
    %2111 = vmatprep.subr.mxu0 0.0
    %2112 = vmatpush1.msra.mxu0 0.0
    %2113 = vmatprep.subr.mxu0 0.0
    %2114 = vmatpush1.msra.mxu0 0.0
    %2115 = vmatprep.subr.mxu0 0.0
    %2116 = vmatpush1.msra.mxu0 0.0
    %2117 = vmatprep.subr.mxu0 0.0
    %2118 = vmatpush1.msra.mxu0 0.0
    %2119 = vmatprep.subr.mxu0 0.0
    %2120 = vmatpush1.msra.mxu0 0.0
    %2121 = vmatprep.subr.mxu0 0.0
    %2122 = vmatpush1.msra.mxu0 0.0
    %2123 = vmatprep.mubr.f32.mxu0 0.0
    %2124 = vmatmul.mubr.f32.gmra.mrb[0].mxu0 %v2057
    %v2125 = vpop.f32.mrb[0].mxu0
    %v2126 = vadd.f32 %v2055, %v2125
    %v2127 = vpop.f32.mrb[0].mxu0
    %2128 = vdwg.mxu0
    %v2129 = vmul.f32 %v2126, 0.70710677
    %v2130 = vand.u32 2147483647, %v2129
    %v2131 = vmul.f32 %v2130, 0.3275911
    %v2132 = vadd.f32 %v2131, 1.0
    %v2133 = vrcp.pop %v2132
    %v2134 = vmul.f32 1.0, %v2133
    %v2135 = vmul.f32 %v2134, 1.0614054
    %v2136 = vsub.f32 %v2135, 1.4531521
    %v2137 = vmul.f32 %v2136, %v2134
    %v2138 = vadd.f32 %v2137, 1.4214138
    %v2139 = vmul.f32 %v2138, %v2134
    %v2140 = vsub.f32 %v2139, 0.28449672
    %v2141 = vmul.f32 %v2140, %v2134
    %v2142 = vadd.f32 %v2141, 0.2548296
    %v2143 = vmul.f32 %v2142, %v2134
    %v2144 = vsub.f32 0.0, %v2129
    %v2145 = vmul.f32 %v2144, %v2129
    %v2146 = vmul.f32 %v2145, 1.442695
    %v2147 = vpow.pop %v2146
    %v2148 = vmul.f32 %v2143, %v2147
    %v2149 = vsub.f32 1.0, %v2148
    %vm2150 = vcmp.ge.f32.partialorder %v2129, 0.0
    %v2151 = vsub.f32 0.0, %v2149
    %v2152 = vsel %vm2150, %v2149, %v2151
    %v2153 = vmul.f32 %v2126, 0.5
    %v2154 = vadd.f32 %v2152, 1.0
    %v2155 = vmul.f32 %v2153, %v2154
    %v2156 = vld [vmem:[%s2 + $0x230] sm:$0xff]
    %v2157 = vld [vmem:[%s2 + $0x238] sm:$0xff]
    %v2158 = vld [vmem:[%s2 + $0x240] sm:$0xf]
    %v2159 = vld [vmem:[%s1 + $0x37] ss:$0 sm:$0xff]
    %vm2160 = vcmask 162816
    %v2162 = vsel %vm2160, %v2155, 0
    %v2165 = vsel %vm443, %v2158, 0
    %2167 = vmatprep.subr.mxu0 0.0
    %2168 = vmatpush1.msra.mxu0 %v2156
    %2169 = vmatprep.subr.mxu0 0.0
    %2170 = vmatpush1.msra.mxu0 %v2157
    %2171 = vmatprep.subr.mxu0 0.0
    %2172 = vmatpush1.msra.mxu0 %v2165
    %2173 = vmatprep.subr.mxu0 0.0
    %2174 = vmatpush1.msra.mxu0 0.0
    %2175 = vmatprep.subr.mxu0 0.0
    %2176 = vmatpush1.msra.mxu0 0.0
    %2177 = vmatprep.subr.mxu0 0.0
    %2178 = vmatpush1.msra.mxu0 0.0
    %2179 = vmatprep.subr.mxu0 0.0
    %2180 = vmatpush1.msra.mxu0 0.0
    %2181 = vmatprep.subr.mxu0 0.0
    %2182 = vmatpush1.msra.mxu0 0.0
    %2183 = vmatprep.subr.mxu0 0.0
    %2184 = vmatpush1.msra.mxu0 0.0
    %2185 = vmatprep.subr.mxu0 0.0
    %2186 = vmatpush1.msra.mxu0 0.0
    %2187 = vmatprep.subr.mxu0 0.0
    %2188 = vmatpush1.msra.mxu0 0.0
    %2189 = vmatprep.subr.mxu0 0.0
    %2190 = vmatpush1.msra.mxu0 0.0
    %2191 = vmatprep.subr.mxu0 0.0
    %2192 = vmatpush1.msra.mxu0 0.0
    %2193 = vmatprep.subr.mxu0 0.0
    %2194 = vmatpush1.msra.mxu0 0.0
    %2195 = vmatprep.subr.mxu0 0.0
    %2196 = vmatpush1.msra.mxu0 0.0
    %2197 = vmatprep.subr.mxu0 0.0
    %2198 = vmatpush1.msra.mxu0 0.0
    %2199 = vmatprep.subr.mxu0 0.0
    %2200 = vmatpush1.msra.mxu0 0.0
    %2201 = vmatprep.subr.mxu0 0.0
    %2202 = vmatpush1.msra.mxu0 0.0
    %2203 = vmatprep.subr.mxu0 0.0
    %2204 = vmatpush1.msra.mxu0 0.0
    %2205 = vmatprep.subr.mxu0 0.0
    %2206 = vmatpush1.msra.mxu0 0.0
    %2207 = vmatprep.subr.mxu0 0.0
    %2208 = vmatpush1.msra.mxu0 0.0
    %2209 = vmatprep.subr.mxu0 0.0
    %2210 = vmatpush1.msra.mxu0 0.0
    %2211 = vmatprep.subr.mxu0 0.0
    %2212 = vmatpush1.msra.mxu0 0.0
    %2213 = vmatprep.subr.mxu0 0.0
    %2214 = vmatpush1.msra.mxu0 0.0
    %2215 = vmatprep.subr.mxu0 0.0
    %2216 = vmatpush1.msra.mxu0 0.0
    %2217 = vmatprep.subr.mxu0 0.0
    %2218 = vmatpush1.msra.mxu0 0.0
    %2219 = vmatprep.subr.mxu0 0.0
    %2220 = vmatpush1.msra.mxu0 0.0
    %2221 = vmatprep.subr.mxu0 0.0
    %2222 = vmatpush1.msra.mxu0 0.0
    %2223 = vmatprep.subr.mxu0 0.0
    %2224 = vmatpush1.msra.mxu0 0.0
    %2225 = vmatprep.subr.mxu0 0.0
    %2226 = vmatpush1.msra.mxu0 0.0
    %2227 = vmatprep.subr.mxu0 0.0
    %2228 = vmatpush1.msra.mxu0 0.0
    %2229 = vmatprep.subr.mxu0 0.0
    %2230 = vmatpush1.msra.mxu0 0.0
    %2231 = vmatprep.mubr.f32.mxu0 0.0
    %2232 = vmatmul.mubr.f32.gmra.mrb[0].mxu0 %v2162
    %v2233 = vpop.f32.mrb[0].mxu0
    %v2234 = vadd.f32 %v2159, %v2233
    %v2235 = vpop.f32.mrb[0].mxu0
    %2236 = vdwg.mxu0
    %2237 = vst [vmem:[#allocation2] sm:$0x3] %v2234
    // Predicated region
    $region14: #{vit_forward.1} parent=1 // pred_check
      _
    $region15: #{vit_forward.1} parent=1 // pred_check_branch
      %2239 = sbr.rel (0) target = $region17
    $region16: #{vit_forward.1} parent=1 // pred_region
      %s2241 = ssub.s32 32, 32
      %2242 = vsyncadd [#allocation3], %s2241
      %s2244 = sshll.u32 [#allocation2], 4
      %s2245 = int_to_ptr.vmem [resolvable:$true] %s2244
      %2247 = dma.vmem_to_hbm [thread:$0]  %s2245, 32, %s3, [#allocation3]
    $region17: #{vit_forward.1} parent=1 // pred_fallthru
      _
    // Predicated region
    $region18: #{vit_forward.1} parent=1 // pred_check
      _
    $region19: #{vit_forward.1} parent=1 // pred_check_branch
      %2249 = sbr.rel (0) target = $region21
    $region20: #{vit_forward.1} parent=1 // pred_region
      %2250 = dma.done [#allocation3], 32
    $region21: #{vit_forward.1} parent=1 // pred_fallthru
      _
    %2251 = vsyncpa [#allocation3], 1

</llo_original>
